<compile_context>
chip_gen: v7x
topology: tpu7x:2x2x1
jax: 0.10.0
libtpu: 0.0.40
codegen_flags: <defaults>
</compile_context>

<pallas_src>
import functools
import math

import jax
import jax.numpy as jnp
from jax import lax
from jax.experimental import pallas as pl
from jax.experimental.pallas import tpu as pltpu

_LANE = 128
_MASK_BIG = 1e30        # f32-safe additive-mask magnitude (score path stays in f32)
_ROW_TILE = 512         # target-node row tile (bounds softmax temporaries to [TILE, N])


def _round_up(v, m):
    return ((v + m - 1) // m) * m


def _vmem_limit_bytes():
    """Generation-aware VMEM limit: ~0.8x physical capacity, conservative fallback."""
    try:
        cap = getattr(pltpu.get_tpu_info(), "vmem_capacity_bytes", None)
        if cap:
            return int(cap * 0.8)
    except Exception:
        pass
    return 48 * 1024 * 1024


def _softmax_bf16_ok():
    """bf16 exp/alpha only on generations with a bf16 EUP/VPU datapath (v6e, v7x)."""
    try:
        kind = jax.devices()[0].device_kind.lower()
    except Exception:
        return False
    return ("v6" in kind) or ("v7" in kind)


# ----------------------------------- kernel -----------------------------------

def _graph_transformer_kernel(adj_ref, x_ref, *refs, layer_cfgs, row_tile, use_bf16_exp):
    """All TransformerConv layers fused; refs = (w0, b0, w1, b1, ..., out_ref)."""
    out_ref = refs[-1]
    wb_refs = refs[:-1]
    n = adj_ref.shape[0]

    x = x_ref[...].astype(jnp.float32)
    row_starts = list(range(0, n, row_tile))       # static unrolled row blocks

    for li, (heads, _dq, dpad, concat, apply_elu) in enumerate(layer_cfgs):
        w_ref = wb_refs[2 * li]
        b_ref = wb_refs[2 * li + 1]
        hqp = heads * dpad

        # Fused, 128-lane-aligned projection: one wide bf16 MXU matmul -> Q | K | V | skip.
        # (1/sqrt(Dh) already folded into the Q columns; padded columns/rows are zero.)
        proj = jnp.dot(x.astype(jnp.bfloat16), w_ref[...],
                       preferred_element_type=jnp.float32) + b_ref[...]
        q = proj[:, :hqp].astype(jnp.bfloat16)           # [N, heads*dpad]
        k = proj[:, hqp:2 * hqp].astype(jnp.bfloat16)    # [N, heads*dpad]
        v = proj[:, 2 * hqp:3 * hqp].astype(jnp.bfloat16)
        skip = proj[:, 3 * hqp:]                         # f32, heads*dpad or dpad wide

        blk_outs = []
        for r0 in row_starts:
            t = min(row_tile, n - r0)

            # Masks per target-row block (hoisted out of the head loop). One widening
            # cast int8->int32 (proven lowering), no full [N,N] float mask kept resident.
            adj_blk = adj_ref[pl.ds(r0, t), :].astype(jnp.int32)                   # [t, N]
            neg_blk = jnp.where(adj_blk == 0, jnp.float32(-_MASK_BIG),
                                jnp.float32(0.0))                                  # [t, N]
            has_blk = (jnp.max(adj_blk, axis=-1, keepdims=True) > 0
                       ).astype(jnp.float32)                                       # [t, 1]

            head_outs = []
            for h in range(heads):                      # heads is small & static -> unrolled
                qh = q[r0:r0 + t, h * dpad:(h + 1) * dpad]     # [t, dpad]  (lane-aligned)
                kh = k[:, h * dpad:(h + 1) * dpad]             # [N, dpad]
                vh = v[:, h * dpad:(h + 1) * dpad]             # [N, dpad]

                # s[i, j] = <q_i, k_j> : contraction on the feature dim (no explicit K^T).
                s = lax.dot_general(qh, kh, (((1,), (1,)), ((), ())),
                                    preferred_element_type=jnp.float32)            # [t, N]
                s = s + neg_blk
                m = jnp.max(s, axis=-1, keepdims=True)
                z = s - m
                if use_bf16_exp:
                    e = jnp.exp(z.astype(jnp.bfloat16))                            # bf16 [t,N]
                    denom = jnp.sum(e.astype(jnp.float32), axis=-1, keepdims=True)
                else:
                    e = jnp.exp(z)                                                 # f32 [t,N]
                    denom = jnp.sum(e, axis=-1, keepdims=True)
                # Rows with no in-neighbours aggregate to 0 (matches PyG), no NaN.
                inv = pl.reciprocal(jnp.maximum(denom, 1e-20), approx=True) * has_blk
                if use_bf16_exp:
                    alpha = e * inv.astype(jnp.bfloat16)
                else:
                    alpha = (e * inv).astype(jnp.bfloat16)
                head_outs.append(jnp.dot(alpha, vh,
                                         preferred_element_type=jnp.float32))      # [t, dpad]

            if concat:
                agg = jnp.concatenate(head_outs, axis=-1)        # [t, heads*dpad]
            else:
                agg = head_outs[0]
                for ho in head_outs[1:]:
                    agg = agg + ho
                agg = agg * (1.0 / heads)                        # [t, dpad]

            res = agg + skip[r0:r0 + t, :]                       # root_weight skip
            if apply_elu:
                # ELU(alpha=1); padded columns stay exactly zero (ELU(0)=0).
                res = jnp.where(res > 0.0, res, jnp.exp(res) - 1.0)
            blk_outs.append(res)

        x = blk_outs[0] if len(blk_outs) == 1 else jnp.concatenate(blk_outs, axis=0)

    out_ref[...] = x.astype(out_ref.dtype)


# ----------------------------------- wrapper -----------------------------------

def graph_transformer_forward(x, adj_i8, fused_params, layer_cfgs, out_channels,
                              row_tile=_ROW_TILE):
    """Run the whole GraphTransformer as one fused, gridless Pallas call.

    nn.Dropout (input + between layers) is identity in eval / p=0.
    """
    n = x.shape[0]
    out_pad = layer_cfgs[-1][2]          # lane-dense padded width of the last layer
    flat = []
    for w, b in fused_params:
        flat.extend((w, b))
    kernel = functools.partial(
        _graph_transformer_kernel,
        layer_cfgs=tuple(layer_cfgs),
        row_tile=int(min(row_tile, n)),
        use_bf16_exp=_softmax_bf16_ok(),
    )
    out = pl.pallas_call(
        kernel,
        out_shape=jax.ShapeDtypeStruct((n, out_pad), jnp.float32),
        compiler_params=pltpu.CompilerParams(vmem_limit_bytes=_vmem_limit_bytes()),
    )(adj_i8, x, *flat)
    return out[:, :out_channels]         # strip the lane padding outside the kernel


# --------------------- parameter construction (deterministic) ---------------------

def _init_linear(key, fin, fout):
    k1, k2 = jax.random.split(key)
    bound = 1.0 / math.sqrt(fin)
    w = jax.random.uniform(k1, (fin, fout), jnp.float32, -bound, bound)
    b = jax.random.uniform(k2, (1, fout), jnp.float32, -bound, bound)
    return w, b


def _init_conv_params(key, fin, heads, dhead, concat):
    kq, kk, kv, ks = jax.random.split(key, 4)
    wq, bq = _init_linear(kq, fin, heads * dhead)
    wk, bk = _init_linear(kk, fin, heads * dhead)
    wv, bv = _init_linear(kv, fin, heads * dhead)
    skip_out = heads * dhead if concat else dhead
    ws, bs = _init_linear(ks, fin, skip_out)
    return dict(wq=wq, bq=bq, wk=wk, bk=bk, wv=wv, bv=bv, ws=ws, bs=bs)


def _fuse_conv_params_aligned(p, heads, dq, dpad, concat, in_layout):
    """Host-side fusion into one 128-lane-aligned bf16 matrix [Q*scale | K | V | skip].

    Columns: every per-head block is padded from dq to dpad (multiple of 128) so all
    in-kernel column slices land on 128-lane boundaries (padding columns are zero, so
    scores / values / skip are unchanged). Rows: if the previous layer produced the padded
    per-head layout, weight rows are scattered to the matching padded offsets so the
    kernel never has to compact activations between layers.
    """
    fin_raw = p["wq"].shape[0]
    scale = 1.0 / math.sqrt(dq)

    def place_cols(w_raw, b_raw, n_blocks):
        wc = jnp.zeros((fin_raw, n_blocks * dpad), jnp.float32)
        bc = jnp.zeros((1, n_blocks * dpad), jnp.float32)
        for h in range(n_blocks):
            wc = wc.at[:, h * dpad:h * dpad + dq].set(w_raw[:, h * dq:(h + 1) * dq])
            bc = bc.at[:, h * dpad:h * dpad + dq].set(b_raw[:, h * dq:(h + 1) * dq])
        return wc, bc

    wq, bq = place_cols(p["wq"] * scale, p["bq"] * scale, heads)   # fold 1/sqrt(Dh) into Q
    wk, bk = place_cols(p["wk"], p["bk"], heads)
    wv, bv = place_cols(p["wv"], p["bv"], heads)
    ws, bs = place_cols(p["ws"], p["bs"], heads if concat else 1)

    w = jnp.concatenate([wq, wk, wv, ws], axis=1)
    b = jnp.concatenate([bq, bk, bv, bs], axis=1)

    if in_layout is not None:            # previous layer emitted padded per-head layout
        h_in, dq_in, dpad_in = in_layout
        w_pad = jnp.zeros((h_in * dpad_in, w.shape[1]), jnp.float32)
        for h in range(h_in):
            w_pad = w_pad.at[h * dpad_in:h * dpad_in + dq_in, :].set(
                w[h * dq_in:(h + 1) * dq_in, :])
        w = w_pad

    return w.astype(jnp.bfloat16), b.astype(jnp.float32)


def build_graph_transformer(key, in_channels, hidden_channels, out_channels,
                            num_layers, num_heads):
    """Mirror GraphTransformer.__init__ layer shapes; return fused params + static cfgs."""
    fused, cfgs = [], []
    keys = jax.random.split(key, num_layers)
    in_layout = None                     # None => raw (unpadded) input feature layout
    for i in range(num_layers):
        last = i == num_layers - 1
        fin = in_channels if i == 0 else hidden_channels * num_heads
        dq = out_channels if last else hidden_channels
        concat = not last
        dpad = _round_up(dq, _LANE)      # per-head padded (lane-aligned) width
        raw = _init_conv_params(keys[i], fin, num_heads, dq, concat)
        fused.append(_fuse_conv_params_aligned(raw, num_heads, dq, dpad, concat, in_layout))
        cfgs.append((num_heads, dq, dpad, concat, not last))
        in_layout = (num_heads, dq, dpad)
    return fused, cfgs


if __name__ == "__main__":
    key = jax.random.PRNGKey(0)
    kx, kadj, kparams = jax.random.split(key, 3)

    # Small shapes: N=16 nodes, in=8 features, hidden=8, heads=2, out=4, 3 layers.
    N, IN_C, HID_C, OUT_C, N_LAYERS, N_HEADS = 16, 8, 8, 4, 3, 2

    x = jax.random.normal(kx, (N, IN_C), dtype=jnp.float32)
    # int8 adjacency mask with self-loops so every node has >= 1 in-neighbour.
    adj = (jax.random.uniform(kadj, (N, N)) < 0.3).astype(jnp.int8)
    adj = jnp.maximum(adj, jnp.eye(N, dtype=jnp.int8))

    fused_params, layer_cfgs = build_graph_transformer(
        kparams, IN_C, HID_C, OUT_C, N_LAYERS, N_HEADS)

    out = graph_transformer_forward(x, adj, fused_params, layer_cfgs, OUT_C)
    out = jax.block_until_ready(out)
    assert out.shape == (N, OUT_C), out.shape
    assert bool(jnp.all(jnp.isfinite(out)))
    print("KERNEL_OK")
</pallas_src>

<mosaic_0001>
module attributes {stable_mosaic.version = 11 : i64} {
  func.func @_graph_transformer_kernel(%arg0: memref<16x16xi8, #tpu.memory_space<vmem>>, %arg1: memref<16x8xf32, #tpu.memory_space<vmem>>, %arg2: memref<8x1024xbf16, #tpu.memory_space<vmem>>, %arg3: memref<1x1024xf32, #tpu.memory_space<vmem>>, %arg4: memref<256x1024xbf16, #tpu.memory_space<vmem>>, %arg5: memref<1x1024xf32, #tpu.memory_space<vmem>>, %arg6: memref<256x896xbf16, #tpu.memory_space<vmem>>, %arg7: memref<1x896xf32, #tpu.memory_space<vmem>>, %arg8: memref<16x128xf32, #tpu.memory_space<vmem>>) attributes {dimension_semantics = [], scalar_prefetch = 0 : i64, scratch_operands = 0 : i64, tpu.core_type = #tpu.core_type<tc>} {
    %c0 = arith.constant 0 : index
    %c0_0 = arith.constant 0 : index
    %0 = vector.load %arg1[%c0, %c0_0] : memref<16x8xf32, #tpu.memory_space<vmem>>, vector<16x8xf32>
    %1 = arith.truncf %0 : vector<16x8xf32> to vector<16x8xbf16>
    %c0_1 = arith.constant 0 : index
    %c0_2 = arith.constant 0 : index
    %2 = vector.load %arg2[%c0_1, %c0_2] : memref<8x1024xbf16, #tpu.memory_space<vmem>>, vector<8x1024xbf16>
    %cst = arith.constant dense<0.000000e+00> : vector<16x1024xf32>
    %3 = tpu.matmul %1, %2, %cst {dimension_numbers = #tpu.dot_dimension_numbers<[1], [0], [0], [1], [0, 0, 1, 1], [], []>} : vector<16x8xbf16>, vector<8x1024xbf16>, vector<16x1024xf32> -> vector<16x1024xf32>
    %c0_3 = arith.constant 0 : index
    %c0_4 = arith.constant 0 : index
    %4 = vector.load %arg3[%c0_3, %c0_4] : memref<1x1024xf32, #tpu.memory_space<vmem>>, vector<1x1024xf32>
    %5 = vector.broadcast %4 : vector<1x1024xf32> to vector<16x1024xf32>
    %6 = arith.addf %3, %5 : vector<16x1024xf32>
    %7 = vector.extract_strided_slice %6 {offsets = [0, 0], sizes = [16, 256], strides = [1, 1]} : vector<16x1024xf32> to vector<16x256xf32>
    %8 = arith.truncf %7 : vector<16x256xf32> to vector<16x256xbf16>
    %9 = vector.extract_strided_slice %6 {offsets = [0, 256], sizes = [16, 256], strides = [1, 1]} : vector<16x1024xf32> to vector<16x256xf32>
    %10 = arith.truncf %9 : vector<16x256xf32> to vector<16x256xbf16>
    %11 = vector.extract_strided_slice %6 {offsets = [0, 512], sizes = [16, 256], strides = [1, 1]} : vector<16x1024xf32> to vector<16x256xf32>
    %12 = arith.truncf %11 : vector<16x256xf32> to vector<16x256xbf16>
    %13 = vector.extract_strided_slice %6 {offsets = [0, 768], sizes = [16, 256], strides = [1, 1]} : vector<16x1024xf32> to vector<16x256xf32>
    %c0_5 = arith.constant 0 : index
    %c0_6 = arith.constant 0 : index
    %14 = vector.load %arg0[%c0_5, %c0_6] : memref<16x16xi8, #tpu.memory_space<vmem>>, vector<16x16xi8>
    %15 = arith.extsi %14 : vector<16x16xi8> to vector<16x16xi32>
    %c0_i32 = arith.constant 0 : i32
    %16 = vector.broadcast %c0_i32 : i32 to vector<16x16xi32>
    %17 = arith.cmpi eq, %15, %16 : vector<16x16xi32>
    %cst_7 = arith.constant -1.000000e+30 : f32
    %cst_8 = arith.constant 0.000000e+00 : f32
    %18 = vector.broadcast %cst_7 : f32 to vector<16x16xf32>
    %19 = vector.broadcast %cst_8 : f32 to vector<16x16xf32>
    %20 = arith.select %17, %18, %19 : vector<16x16xi1>, vector<16x16xf32>
    %cst_9 = arith.constant dense<-2147483648> : vector<16xi32>
    %21 = vector.multi_reduction <maxsi>, %15, %cst_9 [1] : vector<16x16xi32> to vector<16xi32>
    %22 = vector.shape_cast %21 : vector<16xi32> to vector<16x1xi32>
    %c0_i32_10 = arith.constant 0 : i32
    %23 = vector.broadcast %c0_i32_10 : i32 to vector<16x1xi32>
    %24 = arith.cmpi sgt, %22, %23 : vector<16x1xi32>
    %25 = arith.extui %24 : vector<16x1xi1> to vector<16x1xi32>
    %26 = arith.sitofp %25 : vector<16x1xi32> to vector<16x1xf32>
    %27 = vector.extract_strided_slice %8 {offsets = [0, 0], sizes = [16, 128], strides = [1, 1]} : vector<16x256xbf16> to vector<16x128xbf16>
    %28 = vector.extract_strided_slice %10 {offsets = [0, 0], sizes = [16, 128], strides = [1, 1]} : vector<16x256xbf16> to vector<16x128xbf16>
    %29 = vector.extract_strided_slice %12 {offsets = [0, 0], sizes = [16, 128], strides = [1, 1]} : vector<16x256xbf16> to vector<16x128xbf16>
    %cst_11 = arith.constant dense<0.000000e+00> : vector<16x16xf32>
    %30 = tpu.matmul %27, %28, %cst_11 {dimension_numbers = #tpu.dot_dimension_numbers<[1], [1], [0], [0], [0, 0, 1, 0], [], []>} : vector<16x128xbf16>, vector<16x128xbf16>, vector<16x16xf32> -> vector<16x16xf32>
    %31 = arith.addf %30, %20 : vector<16x16xf32>
    %cst_12 = arith.constant dense<0xFF800000> : vector<16xf32>
    %32 = vector.multi_reduction <maximumf>, %31, %cst_12 [1] : vector<16x16xf32> to vector<16xf32>
    %33 = vector.shape_cast %32 : vector<16xf32> to vector<16x1xf32>
    %34 = vector.broadcast %33 : vector<16x1xf32> to vector<16x16xf32>
    %35 = arith.subf %31, %34 : vector<16x16xf32>
    %36 = math.exp %35 : vector<16x16xf32>
    %cst_13 = arith.constant dense<0.000000e+00> : vector<16xf32>
    %37 = vector.multi_reduction <add>, %36, %cst_13 [1] : vector<16x16xf32> to vector<16xf32>
    %38 = vector.shape_cast %37 : vector<16xf32> to vector<16x1xf32>
    %cst_14 = arith.constant 9.99999968E-21 : f32
    %39 = vector.broadcast %cst_14 : f32 to vector<16x1xf32>
    %40 = arith.maximumf %38, %39 : vector<16x1xf32>
    %41 = tpu.reciprocal %40 {approx = true} : vector<16x1xf32> -> vector<16x1xf32>
    %42 = arith.mulf %41, %26 : vector<16x1xf32>
    %43 = vector.broadcast %42 : vector<16x1xf32> to vector<16x16xf32>
    %44 = arith.mulf %36, %43 : vector<16x16xf32>
    %45 = arith.truncf %44 : vector<16x16xf32> to vector<16x16xbf16>
    %cst_15 = arith.constant dense<0.000000e+00> : vector<16x128xf32>
    %46 = tpu.matmul %45, %29, %cst_15 {dimension_numbers = #tpu.dot_dimension_numbers<[1], [0], [0], [1], [0, 0, 1, 1], [], []>} : vector<16x16xbf16>, vector<16x128xbf16>, vector<16x128xf32> -> vector<16x128xf32>
    %47 = vector.extract_strided_slice %8 {offsets = [0, 128], sizes = [16, 128], strides = [1, 1]} : vector<16x256xbf16> to vector<16x128xbf16>
    %48 = vector.extract_strided_slice %10 {offsets = [0, 128], sizes = [16, 128], strides = [1, 1]} : vector<16x256xbf16> to vector<16x128xbf16>
    %49 = vector.extract_strided_slice %12 {offsets = [0, 128], sizes = [16, 128], strides = [1, 1]} : vector<16x256xbf16> to vector<16x128xbf16>
    %cst_16 = arith.constant dense<0.000000e+00> : vector<16x16xf32>
    %50 = tpu.matmul %47, %48, %cst_16 {dimension_numbers = #tpu.dot_dimension_numbers<[1], [1], [0], [0], [0, 0, 1, 0], [], []>} : vector<16x128xbf16>, vector<16x128xbf16>, vector<16x16xf32> -> vector<16x16xf32>
    %51 = arith.addf %50, %20 : vector<16x16xf32>
    %cst_17 = arith.constant dense<0xFF800000> : vector<16xf32>
    %52 = vector.multi_reduction <maximumf>, %51, %cst_17 [1] : vector<16x16xf32> to vector<16xf32>
    %53 = vector.shape_cast %52 : vector<16xf32> to vector<16x1xf32>
    %54 = vector.broadcast %53 : vector<16x1xf32> to vector<16x16xf32>
    %55 = arith.subf %51, %54 : vector<16x16xf32>
    %56 = math.exp %55 : vector<16x16xf32>
    %cst_18 = arith.constant dense<0.000000e+00> : vector<16xf32>
    %57 = vector.multi_reduction <add>, %56, %cst_18 [1] : vector<16x16xf32> to vector<16xf32>
    %58 = vector.shape_cast %57 : vector<16xf32> to vector<16x1xf32>
    %cst_19 = arith.constant 9.99999968E-21 : f32
    %59 = vector.broadcast %cst_19 : f32 to vector<16x1xf32>
    %60 = arith.maximumf %58, %59 : vector<16x1xf32>
    %61 = tpu.reciprocal %60 {approx = true} : vector<16x1xf32> -> vector<16x1xf32>
    %62 = arith.mulf %61, %26 : vector<16x1xf32>
    %63 = vector.broadcast %62 : vector<16x1xf32> to vector<16x16xf32>
    %64 = arith.mulf %56, %63 : vector<16x16xf32>
    %65 = arith.truncf %64 : vector<16x16xf32> to vector<16x16xbf16>
    %cst_20 = arith.constant dense<0.000000e+00> : vector<16x128xf32>
    %66 = tpu.matmul %65, %49, %cst_20 {dimension_numbers = #tpu.dot_dimension_numbers<[1], [0], [0], [1], [0, 0, 1, 1], [], []>} : vector<16x16xbf16>, vector<16x128xbf16>, vector<16x128xf32> -> vector<16x128xf32>
    %67 = tpu.concatenate %46, %66 in 1 : vector<16x128xf32>, vector<16x128xf32> -> vector<16x256xf32>
    %68 = arith.addf %67, %13 : vector<16x256xf32>
    %cst_21 = arith.constant 0.000000e+00 : f32
    %69 = vector.broadcast %cst_21 : f32 to vector<16x256xf32>
    %70 = arith.cmpf ogt, %68, %69 : vector<16x256xf32>
    %71 = math.exp %68 : vector<16x256xf32>
    %cst_22 = arith.constant 1.000000e+00 : f32
    %72 = vector.broadcast %cst_22 : f32 to vector<16x256xf32>
    %73 = arith.subf %71, %72 : vector<16x256xf32>
    %74 = arith.select %70, %68, %73 : vector<16x256xi1>, vector<16x256xf32>
    %75 = arith.truncf %74 : vector<16x256xf32> to vector<16x256xbf16>
    %c0_23 = arith.constant 0 : index
    %c0_24 = arith.constant 0 : index
    %76 = vector.load %arg4[%c0_23, %c0_24] : memref<256x1024xbf16, #tpu.memory_space<vmem>>, vector<256x1024xbf16>
    %cst_25 = arith.constant dense<0.000000e+00> : vector<16x1024xf32>
    %77 = tpu.matmul %75, %76, %cst_25 {dimension_numbers = #tpu.dot_dimension_numbers<[1], [0], [0], [1], [0, 0, 1, 1], [], []>} : vector<16x256xbf16>, vector<256x1024xbf16>, vector<16x1024xf32> -> vector<16x1024xf32>
    %c0_26 = arith.constant 0 : index
    %c0_27 = arith.constant 0 : index
    %78 = vector.load %arg5[%c0_26, %c0_27] : memref<1x1024xf32, #tpu.memory_space<vmem>>, vector<1x1024xf32>
    %79 = vector.broadcast %78 : vector<1x1024xf32> to vector<16x1024xf32>
    %80 = arith.addf %77, %79 : vector<16x1024xf32>
    %81 = vector.extract_strided_slice %80 {offsets = [0, 0], sizes = [16, 256], strides = [1, 1]} : vector<16x1024xf32> to vector<16x256xf32>
    %82 = arith.truncf %81 : vector<16x256xf32> to vector<16x256xbf16>
    %83 = vector.extract_strided_slice %80 {offsets = [0, 256], sizes = [16, 256], strides = [1, 1]} : vector<16x1024xf32> to vector<16x256xf32>
    %84 = arith.truncf %83 : vector<16x256xf32> to vector<16x256xbf16>
    %85 = vector.extract_strided_slice %80 {offsets = [0, 512], sizes = [16, 256], strides = [1, 1]} : vector<16x1024xf32> to vector<16x256xf32>
    %86 = arith.truncf %85 : vector<16x256xf32> to vector<16x256xbf16>
    %87 = vector.extract_strided_slice %80 {offsets = [0, 768], sizes = [16, 256], strides = [1, 1]} : vector<16x1024xf32> to vector<16x256xf32>
    %c0_28 = arith.constant 0 : index
    %c0_29 = arith.constant 0 : index
    %88 = vector.load %arg0[%c0_28, %c0_29] : memref<16x16xi8, #tpu.memory_space<vmem>>, vector<16x16xi8>
    %89 = arith.extsi %88 : vector<16x16xi8> to vector<16x16xi32>
    %c0_i32_30 = arith.constant 0 : i32
    %90 = vector.broadcast %c0_i32_30 : i32 to vector<16x16xi32>
    %91 = arith.cmpi eq, %89, %90 : vector<16x16xi32>
    %cst_31 = arith.constant -1.000000e+30 : f32
    %cst_32 = arith.constant 0.000000e+00 : f32
    %92 = vector.broadcast %cst_31 : f32 to vector<16x16xf32>
    %93 = vector.broadcast %cst_32 : f32 to vector<16x16xf32>
    %94 = arith.select %91, %92, %93 : vector<16x16xi1>, vector<16x16xf32>
    %cst_33 = arith.constant dense<-2147483648> : vector<16xi32>
    %95 = vector.multi_reduction <maxsi>, %89, %cst_33 [1] : vector<16x16xi32> to vector<16xi32>
    %96 = vector.shape_cast %95 : vector<16xi32> to vector<16x1xi32>
    %c0_i32_34 = arith.constant 0 : i32
    %97 = vector.broadcast %c0_i32_34 : i32 to vector<16x1xi32>
    %98 = arith.cmpi sgt, %96, %97 : vector<16x1xi32>
    %99 = arith.extui %98 : vector<16x1xi1> to vector<16x1xi32>
    %100 = arith.sitofp %99 : vector<16x1xi32> to vector<16x1xf32>
    %101 = vector.extract_strided_slice %82 {offsets = [0, 0], sizes = [16, 128], strides = [1, 1]} : vector<16x256xbf16> to vector<16x128xbf16>
    %102 = vector.extract_strided_slice %84 {offsets = [0, 0], sizes = [16, 128], strides = [1, 1]} : vector<16x256xbf16> to vector<16x128xbf16>
    %103 = vector.extract_strided_slice %86 {offsets = [0, 0], sizes = [16, 128], strides = [1, 1]} : vector<16x256xbf16> to vector<16x128xbf16>
    %cst_35 = arith.constant dense<0.000000e+00> : vector<16x16xf32>
    %104 = tpu.matmul %101, %102, %cst_35 {dimension_numbers = #tpu.dot_dimension_numbers<[1], [1], [0], [0], [0, 0, 1, 0], [], []>} : vector<16x128xbf16>, vector<16x128xbf16>, vector<16x16xf32> -> vector<16x16xf32>
    %105 = arith.addf %104, %94 : vector<16x16xf32>
    %cst_36 = arith.constant dense<0xFF800000> : vector<16xf32>
    %106 = vector.multi_reduction <maximumf>, %105, %cst_36 [1] : vector<16x16xf32> to vector<16xf32>
    %107 = vector.shape_cast %106 : vector<16xf32> to vector<16x1xf32>
    %108 = vector.broadcast %107 : vector<16x1xf32> to vector<16x16xf32>
    %109 = arith.subf %105, %108 : vector<16x16xf32>
    %110 = math.exp %109 : vector<16x16xf32>
    %cst_37 = arith.constant dense<0.000000e+00> : vector<16xf32>
    %111 = vector.multi_reduction <add>, %110, %cst_37 [1] : vector<16x16xf32> to vector<16xf32>
    %112 = vector.shape_cast %111 : vector<16xf32> to vector<16x1xf32>
    %cst_38 = arith.constant 9.99999968E-21 : f32
    %113 = vector.broadcast %cst_38 : f32 to vector<16x1xf32>
    %114 = arith.maximumf %112, %113 : vector<16x1xf32>
    %115 = tpu.reciprocal %114 {approx = true} : vector<16x1xf32> -> vector<16x1xf32>
    %116 = arith.mulf %115, %100 : vector<16x1xf32>
    %117 = vector.broadcast %116 : vector<16x1xf32> to vector<16x16xf32>
    %118 = arith.mulf %110, %117 : vector<16x16xf32>
    %119 = arith.truncf %118 : vector<16x16xf32> to vector<16x16xbf16>
    %cst_39 = arith.constant dense<0.000000e+00> : vector<16x128xf32>
    %120 = tpu.matmul %119, %103, %cst_39 {dimension_numbers = #tpu.dot_dimension_numbers<[1], [0], [0], [1], [0, 0, 1, 1], [], []>} : vector<16x16xbf16>, vector<16x128xbf16>, vector<16x128xf32> -> vector<16x128xf32>
    %121 = vector.extract_strided_slice %82 {offsets = [0, 128], sizes = [16, 128], strides = [1, 1]} : vector<16x256xbf16> to vector<16x128xbf16>
    %122 = vector.extract_strided_slice %84 {offsets = [0, 128], sizes = [16, 128], strides = [1, 1]} : vector<16x256xbf16> to vector<16x128xbf16>
    %123 = vector.extract_strided_slice %86 {offsets = [0, 128], sizes = [16, 128], strides = [1, 1]} : vector<16x256xbf16> to vector<16x128xbf16>
    %cst_40 = arith.constant dense<0.000000e+00> : vector<16x16xf32>
    %124 = tpu.matmul %121, %122, %cst_40 {dimension_numbers = #tpu.dot_dimension_numbers<[1], [1], [0], [0], [0, 0, 1, 0], [], []>} : vector<16x128xbf16>, vector<16x128xbf16>, vector<16x16xf32> -> vector<16x16xf32>
    %125 = arith.addf %124, %94 : vector<16x16xf32>
    %cst_41 = arith.constant dense<0xFF800000> : vector<16xf32>
    %126 = vector.multi_reduction <maximumf>, %125, %cst_41 [1] : vector<16x16xf32> to vector<16xf32>
    %127 = vector.shape_cast %126 : vector<16xf32> to vector<16x1xf32>
    %128 = vector.broadcast %127 : vector<16x1xf32> to vector<16x16xf32>
    %129 = arith.subf %125, %128 : vector<16x16xf32>
    %130 = math.exp %129 : vector<16x16xf32>
    %cst_42 = arith.constant dense<0.000000e+00> : vector<16xf32>
    %131 = vector.multi_reduction <add>, %130, %cst_42 [1] : vector<16x16xf32> to vector<16xf32>
    %132 = vector.shape_cast %131 : vector<16xf32> to vector<16x1xf32>
    %cst_43 = arith.constant 9.99999968E-21 : f32
    %133 = vector.broadcast %cst_43 : f32 to vector<16x1xf32>
    %134 = arith.maximumf %132, %133 : vector<16x1xf32>
    %135 = tpu.reciprocal %134 {approx = true} : vector<16x1xf32> -> vector<16x1xf32>
    %136 = arith.mulf %135, %100 : vector<16x1xf32>
    %137 = vector.broadcast %136 : vector<16x1xf32> to vector<16x16xf32>
    %138 = arith.mulf %130, %137 : vector<16x16xf32>
    %139 = arith.truncf %138 : vector<16x16xf32> to vector<16x16xbf16>
    %cst_44 = arith.constant dense<0.000000e+00> : vector<16x128xf32>
    %140 = tpu.matmul %139, %123, %cst_44 {dimension_numbers = #tpu.dot_dimension_numbers<[1], [0], [0], [1], [0, 0, 1, 1], [], []>} : vector<16x16xbf16>, vector<16x128xbf16>, vector<16x128xf32> -> vector<16x128xf32>
    %141 = tpu.concatenate %120, %140 in 1 : vector<16x128xf32>, vector<16x128xf32> -> vector<16x256xf32>
    %142 = arith.addf %141, %87 : vector<16x256xf32>
    %cst_45 = arith.constant 0.000000e+00 : f32
    %143 = vector.broadcast %cst_45 : f32 to vector<16x256xf32>
    %144 = arith.cmpf ogt, %142, %143 : vector<16x256xf32>
    %145 = math.exp %142 : vector<16x256xf32>
    %cst_46 = arith.constant 1.000000e+00 : f32
    %146 = vector.broadcast %cst_46 : f32 to vector<16x256xf32>
    %147 = arith.subf %145, %146 : vector<16x256xf32>
    %148 = arith.select %144, %142, %147 : vector<16x256xi1>, vector<16x256xf32>
    %149 = arith.truncf %148 : vector<16x256xf32> to vector<16x256xbf16>
    %c0_47 = arith.constant 0 : index
    %c0_48 = arith.constant 0 : index
    %150 = vector.load %arg6[%c0_47, %c0_48] : memref<256x896xbf16, #tpu.memory_space<vmem>>, vector<256x896xbf16>
    %cst_49 = arith.constant dense<0.000000e+00> : vector<16x896xf32>
    %151 = tpu.matmul %149, %150, %cst_49 {dimension_numbers = #tpu.dot_dimension_numbers<[1], [0], [0], [1], [0, 0, 1, 1], [], []>} : vector<16x256xbf16>, vector<256x896xbf16>, vector<16x896xf32> -> vector<16x896xf32>
    %c0_50 = arith.constant 0 : index
    %c0_51 = arith.constant 0 : index
    %152 = vector.load %arg7[%c0_50, %c0_51] : memref<1x896xf32, #tpu.memory_space<vmem>>, vector<1x896xf32>
    %153 = vector.broadcast %152 : vector<1x896xf32> to vector<16x896xf32>
    %154 = arith.addf %151, %153 : vector<16x896xf32>
    %155 = vector.extract_strided_slice %154 {offsets = [0, 0], sizes = [16, 256], strides = [1, 1]} : vector<16x896xf32> to vector<16x256xf32>
    %156 = arith.truncf %155 : vector<16x256xf32> to vector<16x256xbf16>
    %157 = vector.extract_strided_slice %154 {offsets = [0, 256], sizes = [16, 256], strides = [1, 1]} : vector<16x896xf32> to vector<16x256xf32>
    %158 = arith.truncf %157 : vector<16x256xf32> to vector<16x256xbf16>
    %159 = vector.extract_strided_slice %154 {offsets = [0, 512], sizes = [16, 256], strides = [1, 1]} : vector<16x896xf32> to vector<16x256xf32>
    %160 = arith.truncf %159 : vector<16x256xf32> to vector<16x256xbf16>
    %161 = vector.extract_strided_slice %154 {offsets = [0, 768], sizes = [16, 128], strides = [1, 1]} : vector<16x896xf32> to vector<16x128xf32>
    %c0_52 = arith.constant 0 : index
    %c0_53 = arith.constant 0 : index
    %162 = vector.load %arg0[%c0_52, %c0_53] : memref<16x16xi8, #tpu.memory_space<vmem>>, vector<16x16xi8>
    %163 = arith.extsi %162 : vector<16x16xi8> to vector<16x16xi32>
    %c0_i32_54 = arith.constant 0 : i32
    %164 = vector.broadcast %c0_i32_54 : i32 to vector<16x16xi32>
    %165 = arith.cmpi eq, %163, %164 : vector<16x16xi32>
    %cst_55 = arith.constant -1.000000e+30 : f32
    %cst_56 = arith.constant 0.000000e+00 : f32
    %166 = vector.broadcast %cst_55 : f32 to vector<16x16xf32>
    %167 = vector.broadcast %cst_56 : f32 to vector<16x16xf32>
    %168 = arith.select %165, %166, %167 : vector<16x16xi1>, vector<16x16xf32>
    %cst_57 = arith.constant dense<-2147483648> : vector<16xi32>
    %169 = vector.multi_reduction <maxsi>, %163, %cst_57 [1] : vector<16x16xi32> to vector<16xi32>
    %170 = vector.shape_cast %169 : vector<16xi32> to vector<16x1xi32>
    %c0_i32_58 = arith.constant 0 : i32
    %171 = vector.broadcast %c0_i32_58 : i32 to vector<16x1xi32>
    %172 = arith.cmpi sgt, %170, %171 : vector<16x1xi32>
    %173 = arith.extui %172 : vector<16x1xi1> to vector<16x1xi32>
    %174 = arith.sitofp %173 : vector<16x1xi32> to vector<16x1xf32>
    %175 = vector.extract_strided_slice %156 {offsets = [0, 0], sizes = [16, 128], strides = [1, 1]} : vector<16x256xbf16> to vector<16x128xbf16>
    %176 = vector.extract_strided_slice %158 {offsets = [0, 0], sizes = [16, 128], strides = [1, 1]} : vector<16x256xbf16> to vector<16x128xbf16>
    %177 = vector.extract_strided_slice %160 {offsets = [0, 0], sizes = [16, 128], strides = [1, 1]} : vector<16x256xbf16> to vector<16x128xbf16>
    %cst_59 = arith.constant dense<0.000000e+00> : vector<16x16xf32>
    %178 = tpu.matmul %175, %176, %cst_59 {dimension_numbers = #tpu.dot_dimension_numbers<[1], [1], [0], [0], [0, 0, 1, 0], [], []>} : vector<16x128xbf16>, vector<16x128xbf16>, vector<16x16xf32> -> vector<16x16xf32>
    %179 = arith.addf %178, %168 : vector<16x16xf32>
    %cst_60 = arith.constant dense<0xFF800000> : vector<16xf32>
    %180 = vector.multi_reduction <maximumf>, %179, %cst_60 [1] : vector<16x16xf32> to vector<16xf32>
    %181 = vector.shape_cast %180 : vector<16xf32> to vector<16x1xf32>
    %182 = vector.broadcast %181 : vector<16x1xf32> to vector<16x16xf32>
    %183 = arith.subf %179, %182 : vector<16x16xf32>
    %184 = math.exp %183 : vector<16x16xf32>
    %cst_61 = arith.constant dense<0.000000e+00> : vector<16xf32>
    %185 = vector.multi_reduction <add>, %184, %cst_61 [1] : vector<16x16xf32> to vector<16xf32>
    %186 = vector.shape_cast %185 : vector<16xf32> to vector<16x1xf32>
    %cst_62 = arith.constant 9.99999968E-21 : f32
    %187 = vector.broadcast %cst_62 : f32 to vector<16x1xf32>
    %188 = arith.maximumf %186, %187 : vector<16x1xf32>
    %189 = tpu.reciprocal %188 {approx = true} : vector<16x1xf32> -> vector<16x1xf32>
    %190 = arith.mulf %189, %174 : vector<16x1xf32>
    %191 = vector.broadcast %190 : vector<16x1xf32> to vector<16x16xf32>
    %192 = arith.mulf %184, %191 : vector<16x16xf32>
    %193 = arith.truncf %192 : vector<16x16xf32> to vector<16x16xbf16>
    %cst_63 = arith.constant dense<0.000000e+00> : vector<16x128xf32>
    %194 = tpu.matmul %193, %177, %cst_63 {dimension_numbers = #tpu.dot_dimension_numbers<[1], [0], [0], [1], [0, 0, 1, 1], [], []>} : vector<16x16xbf16>, vector<16x128xbf16>, vector<16x128xf32> -> vector<16x128xf32>
    %195 = vector.extract_strided_slice %156 {offsets = [0, 128], sizes = [16, 128], strides = [1, 1]} : vector<16x256xbf16> to vector<16x128xbf16>
    %196 = vector.extract_strided_slice %158 {offsets = [0, 128], sizes = [16, 128], strides = [1, 1]} : vector<16x256xbf16> to vector<16x128xbf16>
    %197 = vector.extract_strided_slice %160 {offsets = [0, 128], sizes = [16, 128], strides = [1, 1]} : vector<16x256xbf16> to vector<16x128xbf16>
    %cst_64 = arith.constant dense<0.000000e+00> : vector<16x16xf32>
    %198 = tpu.matmul %195, %196, %cst_64 {dimension_numbers = #tpu.dot_dimension_numbers<[1], [1], [0], [0], [0, 0, 1, 0], [], []>} : vector<16x128xbf16>, vector<16x128xbf16>, vector<16x16xf32> -> vector<16x16xf32>
    %199 = arith.addf %198, %168 : vector<16x16xf32>
    %cst_65 = arith.constant dense<0xFF800000> : vector<16xf32>
    %200 = vector.multi_reduction <maximumf>, %199, %cst_65 [1] : vector<16x16xf32> to vector<16xf32>
    %201 = vector.shape_cast %200 : vector<16xf32> to vector<16x1xf32>
    %202 = vector.broadcast %201 : vector<16x1xf32> to vector<16x16xf32>
    %203 = arith.subf %199, %202 : vector<16x16xf32>
    %204 = math.exp %203 : vector<16x16xf32>
    %cst_66 = arith.constant dense<0.000000e+00> : vector<16xf32>
    %205 = vector.multi_reduction <add>, %204, %cst_66 [1] : vector<16x16xf32> to vector<16xf32>
    %206 = vector.shape_cast %205 : vector<16xf32> to vector<16x1xf32>
    %cst_67 = arith.constant 9.99999968E-21 : f32
    %207 = vector.broadcast %cst_67 : f32 to vector<16x1xf32>
    %208 = arith.maximumf %206, %207 : vector<16x1xf32>
    %209 = tpu.reciprocal %208 {approx = true} : vector<16x1xf32> -> vector<16x1xf32>
    %210 = arith.mulf %209, %174 : vector<16x1xf32>
    %211 = vector.broadcast %210 : vector<16x1xf32> to vector<16x16xf32>
    %212 = arith.mulf %204, %211 : vector<16x16xf32>
    %213 = arith.truncf %212 : vector<16x16xf32> to vector<16x16xbf16>
    %cst_68 = arith.constant dense<0.000000e+00> : vector<16x128xf32>
    %214 = tpu.matmul %213, %197, %cst_68 {dimension_numbers = #tpu.dot_dimension_numbers<[1], [0], [0], [1], [0, 0, 1, 1], [], []>} : vector<16x16xbf16>, vector<16x128xbf16>, vector<16x128xf32> -> vector<16x128xf32>
    %215 = arith.addf %194, %214 : vector<16x128xf32>
    %cst_69 = arith.constant 5.000000e-01 : f32
    %216 = vector.broadcast %cst_69 : f32 to vector<16x128xf32>
    %217 = arith.mulf %215, %216 : vector<16x128xf32>
    %218 = arith.addf %217, %161 : vector<16x128xf32>
    %c0_70 = arith.constant 0 : index
    %c0_71 = arith.constant 0 : index
    %219 = vector.load %arg8[%c0_70, %c0_71] : memref<16x128xf32, #tpu.memory_space<vmem>>, vector<16x128xf32>
    tpu.vector_store %arg8[%c0_70, %c0_71], %218 {strides = array<i32>} : memref<16x128xf32, #tpu.memory_space<vmem>>, vector<16x128xf32>,
    return
  }
}

</mosaic_0001>

<llo_original>
// kernel: tpu_custom_call.1
$region0: #{tpu_custom_call.1}
  #allocation0 [shape = 'u32[]', space=smem, size = 0x4, offset = 0x4, fixed_abs, tag = 'smem constant byte address 0x4 - core index']
  #allocation1 [shape = 'u32[144,128]{1,0:T(1,128)}', space=vmem, size = 0x12000, scoped, tag = 'internal scratch']
  %s0 = inlined_call_operand.hbm [shape: s8[16,16], index: 0, kind: input, shape index: {}]
  %s1 = inlined_call_operand.vmem [shape: f32[16,8], index: 1, kind: input, shape index: {}]
  %s2 = inlined_call_operand.hbm [shape: bf16[8,1024], index: 2, kind: input, shape index: {}]
  %s3 = inlined_call_operand.vmem [shape: f32[1,1024], index: 3, kind: input, shape index: {}]
  %s4 = inlined_call_operand.hbm [shape: bf16[256,1024], index: 4, kind: input, shape index: {}]
  %s5 = inlined_call_operand.vmem [shape: f32[1,1024], index: 5, kind: input, shape index: {}]
  %s6 = inlined_call_operand.hbm [shape: bf16[256,896], index: 6, kind: input, shape index: {}]
  %s7 = inlined_call_operand.vmem [shape: f32[1,896], index: 7, kind: input, shape index: {}]
  %s8 = inlined_call_operand.hbm [shape: f32[16,128], index: 8, kind: output, shape index: {}]
  %s9 = sld [smem:[#allocation0]]
  $region58: #{tpu_custom_call.1} parent=0
    _
  %s11 = ssub.s32 1, %s9
  %s12 = scalar_select 0, %s11, %s9
  $region1: #{tpu_custom_call.1} parent=0
    #allocation2 [shape = 'u8[2048]{0}', space=vmem, size = 0x800, scoped, tag = 'input window, operand 0, single buffered']
    #allocation3 [shape = 's32[1]{0}', space=sflag, size = 0x4, scoped, tag = 'scoped memory for tpu_custom_call.1']
    #allocation4 [shape = 's32[1]{0}', space=sflag, size = 0x4, scoped, tag = 'scoped memory for tpu_custom_call.1']
    #allocation5 [shape = 'u8[16384]{0}', space=vmem, size = 0x4000, scoped, tag = 'input window, operand 2, single buffered']
    #allocation6 [shape = 's32[1]{0}', space=sflag, size = 0x4, scoped, tag = 'scoped memory for tpu_custom_call.1']
    #allocation7 [shape = 'u8[524288]{0}', space=vmem, size = 0x80000, scoped, tag = 'input window, operand 4, single buffered']
    #allocation8 [shape = 'u8[458752]{0}', space=vmem, size = 0x70000, scoped, tag = 'input window, operand 6, single buffered']
    #allocation9 [shape = 's32[1]{0}', space=sflag, size = 0x4, scoped, tag = 'scoped memory for tpu_custom_call.1']
    #allocation10 [shape = 'u8[8192]{0}', space=vmem, size = 0x2000, scoped, tag = 'output window, operand 0, single buffered']
    %13 = vsyncpa [#allocation3], 0
    %14 = vsyncpa [#allocation6], 0
    %15 = vsyncpa [#allocation9], 0
    %16 = vsyncpa [#allocation4], 0
    // Predicated region
    $region2: #{tpu_custom_call.1} parent=1 // pred_check
      _
    $region3: #{tpu_custom_call.1} parent=1 // pred_check_branch
      %18 = sbr.rel (0) target = $region5
    $region4: #{tpu_custom_call.1} parent=1 // pred_region
      %s20 = ssub.s32 64, 64
      %21 = vsyncadd [#allocation3], %s20
      %s22 = sshll.u32 [#allocation2], 4
      %s23 = int_to_ptr.vmem [resolvable:$true] %s22
      %28 = dma.hbm_to_vmem [thread:$0]  %s0, 64, %s23, [#allocation3], 32, 32, 2
    $region5: #{tpu_custom_call.1} parent=1 // pred_fallthru
      _
    // Predicated region
    $region6: #{tpu_custom_call.1} parent=1 // pred_check
      _
    $region7: #{tpu_custom_call.1} parent=1 // pred_check_branch
      %30 = sbr.rel (0) target = $region9
    $region8: #{tpu_custom_call.1} parent=1 // pred_region
      _
    $region9: #{tpu_custom_call.1} parent=1 // pred_fallthru
      _
    // Predicated region
    $region10: #{tpu_custom_call.1} parent=1 // pred_check
      _
    $region11: #{tpu_custom_call.1} parent=1 // pred_check_branch
      %32 = sbr.rel (0) target = $region13
    $region12: #{tpu_custom_call.1} parent=1 // pred_region
      %s34 = ssub.s32 512, 512
      %35 = vsyncadd [#allocation6], %s34
      %s37 = sshll.u32 [#allocation5], 4
      %s38 = int_to_ptr.vmem [resolvable:$true] %s37
      %40 = dma.hbm_to_vmem [thread:$0]  %s2, 512, %s38, [#allocation6]
    $region13: #{tpu_custom_call.1} parent=1 // pred_fallthru
      _
    // Predicated region
    $region14: #{tpu_custom_call.1} parent=1 // pred_check
      _
    $region15: #{tpu_custom_call.1} parent=1 // pred_check_branch
      %42 = sbr.rel (0) target = $region17
    $region16: #{tpu_custom_call.1} parent=1 // pred_region
      _
    $region17: #{tpu_custom_call.1} parent=1 // pred_fallthru
      _
    // Predicated region
    $region18: #{tpu_custom_call.1} parent=1 // pred_check
      _
    $region19: #{tpu_custom_call.1} parent=1 // pred_check_branch
      %44 = sbr.rel (0) target = $region21
    $region20: #{tpu_custom_call.1} parent=1 // pred_region
      %s46 = ssub.s32 16384, 16384
      %47 = vsyncadd [#allocation6], %s46
      %s48 = sshll.u32 [#allocation7], 4
      %s49 = int_to_ptr.vmem [resolvable:$true] %s48
      %54 = dma.hbm_to_vmem [thread:$0]  %s4, 16384, %s49, [#allocation6], 512, 512, 32
    $region21: #{tpu_custom_call.1} parent=1 // pred_fallthru
      _
    // Predicated region
    $region22: #{tpu_custom_call.1} parent=1 // pred_check
      _
    $region23: #{tpu_custom_call.1} parent=1 // pred_check_branch
      %56 = sbr.rel (0) target = $region25
    $region24: #{tpu_custom_call.1} parent=1 // pred_region
      _
    $region25: #{tpu_custom_call.1} parent=1 // pred_fallthru
      _
    // Predicated region
    $region26: #{tpu_custom_call.1} parent=1 // pred_check
      _
    $region27: #{tpu_custom_call.1} parent=1 // pred_check_branch
      %58 = sbr.rel (0) target = $region29
    $region28: #{tpu_custom_call.1} parent=1 // pred_region
      %s60 = ssub.s32 14336, 14336
      %61 = vsyncadd [#allocation9], %s60
      %s62 = sshll.u32 [#allocation8], 4
      %s63 = int_to_ptr.vmem [resolvable:$true] %s62
      %68 = dma.hbm_to_vmem [thread:$0]  %s6, 14336, %s63, [#allocation9], 448, 448, 28
    $region29: #{tpu_custom_call.1} parent=1 // pred_fallthru
      _
    // Predicated region
    $region30: #{tpu_custom_call.1} parent=1 // pred_check
      _
    $region31: #{tpu_custom_call.1} parent=1 // pred_check_branch
      %70 = sbr.rel (0) target = $region33
    $region32: #{tpu_custom_call.1} parent=1 // pred_region
      _
    $region33: #{tpu_custom_call.1} parent=1 // pred_fallthru
      _
    // Predicated region
    $region34: #{tpu_custom_call.1} parent=1 // pred_check
      _
    $region35: #{tpu_custom_call.1} parent=1 // pred_check_branch
      %72 = sbr.rel (0) target = $region37
    $region36: #{tpu_custom_call.1} parent=1 // pred_region
      %73 = dma.done [#allocation3], 64
    $region37: #{tpu_custom_call.1} parent=1 // pred_fallthru
      _
    // Predicated region
    $region38: #{tpu_custom_call.1} parent=1 // pred_check
      _
    $region39: #{tpu_custom_call.1} parent=1 // pred_check_branch
      %75 = sbr.rel (0) target = $region41
    $region40: #{tpu_custom_call.1} parent=1 // pred_region
      %76 = dma.done [#allocation6], 512
    $region41: #{tpu_custom_call.1} parent=1 // pred_fallthru
      _
    // Predicated region
    $region42: #{tpu_custom_call.1} parent=1 // pred_check
      _
    $region43: #{tpu_custom_call.1} parent=1 // pred_check_branch
      %78 = sbr.rel (0) target = $region45
    $region44: #{tpu_custom_call.1} parent=1 // pred_region
      %79 = dma.done [#allocation6], 16384
    $region45: #{tpu_custom_call.1} parent=1 // pred_fallthru
      _
    // Predicated region
    $region46: #{tpu_custom_call.1} parent=1 // pred_check
      _
    $region47: #{tpu_custom_call.1} parent=1 // pred_check_branch
      %81 = sbr.rel (0) target = $region49
    $region48: #{tpu_custom_call.1} parent=1 // pred_region
      %82 = dma.done [#allocation9], 14336
    $region49: #{tpu_custom_call.1} parent=1 // pred_fallthru
      _
    %v84 = vld [vmem:[%s1] sm:$0xff]
    %v85 = vld [vmem:[%s1 + $0x8] sm:$0xff]
    %v86 = vpack.c.bf16 %v85, %v84
    %v87 = vld [vmem:[#allocation5] sm:$0xff]
    %v88 = vld [vmem:[#allocation5 + $0x8] sm:$0xff]
    %v89 = vld [vmem:[#allocation5 + $0x10] sm:$0xff]
    %v90 = vld [vmem:[#allocation5 + $0x18] sm:$0xff]
    %v91 = vld [vmem:[%s3] sm:$0xff]
    %v93 = vlaneseq
    %v94 = vshrl.u32 %v93, 7
    %v95 = vsub.s32 0, %v94
    %v96 = vrot.slane %v91, %v95
    %v97 = vlaneseq
    %v98 = vshrl.u32 %v97, 7
    %v99 = vsub.s32 1, %v98
    %v100 = vrot.slane %v91, %v99
    %v101 = vlaneseq
    %v102 = vshrl.u32 %v101, 7
    %v103 = vsub.s32 2, %v102
    %v104 = vrot.slane %v91, %v103
    %v105 = vlaneseq
    %v106 = vshrl.u32 %v105, 7
    %v107 = vsub.s32 3, %v106
    %v108 = vrot.slane %v91, %v107
    %v109 = vlaneseq
    %v110 = vshrl.u32 %v109, 7
    %v111 = vsub.s32 4, %v110
    %v112 = vrot.slane %v91, %v111
    %v113 = vlaneseq
    %v114 = vshrl.u32 %v113, 7
    %v115 = vsub.s32 5, %v114
    %v116 = vrot.slane %v91, %v115
    %v117 = vlaneseq
    %v118 = vshrl.u32 %v117, 7
    %v119 = vsub.s32 6, %v118
    %v120 = vrot.slane %v91, %v119
    %v121 = vlaneseq
    %v122 = vshrl.u32 %v121, 7
    %v123 = vsub.s32 7, %v122
    %v124 = vrot.slane %v91, %v123
    %v137 = vunpack.c.l.b16 %v87
    %v138 = vunpack.c.h.b16 %v87
    %v139 = vunpack.c.l.b16 %v88
    %v140 = vunpack.c.h.b16 %v88
    %v141 = vunpack.c.l.b16 %v89
    %v142 = vunpack.c.h.b16 %v89
    %v143 = vunpack.c.l.b16 %v90
    %v144 = vunpack.c.h.b16 %v90
    %v145 = vpack.c.b16 %v137, %v137
    %v146 = vpack.c.b16 %v138, %v138
    %v147 = vpack.c.b16 %v139, %v139
    %v148 = vpack.c.b16 %v140, %v140
    %v149 = vpack.c.b16 %v141, %v141
    %v150 = vpack.c.b16 %v142, %v142
    %v151 = vpack.c.b16 %v143, %v143
    %v152 = vpack.c.b16 %v144, %v144
    %vm153 = vcmask 64512
    %v155 = vsel %vm153, %v86, 0
    %vm157 = vcmask 1043456
    %v159 = vsel %vm157, %v145, 0
    %v162 = vsel %vm157, %v146, 0
    %v165 = vsel %vm157, %v147, 0
    %v168 = vsel %vm157, %v148, 0
    %v171 = vsel %vm157, %v149, 0
    %v174 = vsel %vm157, %v150, 0
    %v177 = vsel %vm157, %v151, 0
    %v180 = vsel %vm157, %v152, 0
    %182 = vmatprep.subr.bf16.mxu0 %v162
    %183 = vmatpush1.bf16.msra.mxu0 %v159
    %184 = vmatprep.subr.bf16.mxu0 0
    %185 = vmatpush1.bf16.msra.mxu0 0
    %186 = vmatprep.subr.bf16.mxu0 0
    %187 = vmatpush1.bf16.msra.mxu0 0
    %188 = vmatprep.subr.bf16.mxu0 0
    %189 = vmatpush1.bf16.msra.mxu0 0
    %190 = vmatprep.subr.bf16.mxu0 0
    %191 = vmatpush1.bf16.msra.mxu0 0
    %192 = vmatprep.subr.bf16.mxu0 0
    %193 = vmatpush1.bf16.msra.mxu0 0
    %194 = vmatprep.subr.bf16.mxu0 0
    %195 = vmatpush1.bf16.msra.mxu0 0
    %196 = vmatprep.subr.bf16.mxu0 0
    %197 = vmatpush1.bf16.msra.mxu0 0
    %198 = vmatprep.subr.bf16.mxu0 0
    %199 = vmatpush1.bf16.msra.mxu0 0
    %200 = vmatprep.subr.bf16.mxu0 0
    %201 = vmatpush1.bf16.msra.mxu0 0
    %202 = vmatprep.subr.bf16.mxu0 0
    %203 = vmatpush1.bf16.msra.mxu0 0
    %204 = vmatprep.subr.bf16.mxu0 0
    %205 = vmatpush1.bf16.msra.mxu0 0
    %206 = vmatprep.subr.bf16.mxu0 0
    %207 = vmatpush1.bf16.msra.mxu0 0
    %208 = vmatprep.subr.bf16.mxu0 0
    %209 = vmatpush1.bf16.msra.mxu0 0
    %210 = vmatprep.subr.bf16.mxu0 0
    %211 = vmatpush1.bf16.msra.mxu0 0
    %212 = vmatprep.subr.bf16.mxu0 0
    %213 = vmatpush1.bf16.msra.mxu0 0
    %214 = vmatprep.mubr.bf16.mxu0 0
    %215 = vmatmul.mubr.bf16.gmra.mrb[0].mxu0 %v155
    %v216 = vpop.f32.mrb[0].mxu0
    %v217 = vadd.f32 %v96, %v216
    %v218 = vpop.f32.mrb[0].mxu0
    %v219 = vadd.f32 %v100, %v218
    %v220 = vpop.f32.mrb[0].mxu0
    %v221 = vadd.f32 %v96, %v220
    %v222 = vpop.f32.mrb[0].mxu0
    %v223 = vadd.f32 %v100, %v222
    %224 = vdwg.mxu0
    %225 = vmatprep.subr.bf16.mxu0 %v168
    %226 = vmatpush1.bf16.msra.mxu0 %v165
    %227 = vmatprep.subr.bf16.mxu0 0
    %228 = vmatpush1.bf16.msra.mxu0 0
    %229 = vmatprep.subr.bf16.mxu0 0
    %230 = vmatpush1.bf16.msra.mxu0 0
    %231 = vmatprep.subr.bf16.mxu0 0
    %232 = vmatpush1.bf16.msra.mxu0 0
    %233 = vmatprep.subr.bf16.mxu0 0
    %234 = vmatpush1.bf16.msra.mxu0 0
    %235 = vmatprep.subr.bf16.mxu0 0
    %236 = vmatpush1.bf16.msra.mxu0 0
    %237 = vmatprep.subr.bf16.mxu0 0
    %238 = vmatpush1.bf16.msra.mxu0 0
    %239 = vmatprep.subr.bf16.mxu0 0
    %240 = vmatpush1.bf16.msra.mxu0 0
    %241 = vmatprep.subr.bf16.mxu0 0
    %242 = vmatpush1.bf16.msra.mxu0 0
    %243 = vmatprep.subr.bf16.mxu0 0
    %244 = vmatpush1.bf16.msra.mxu0 0
    %245 = vmatprep.subr.bf16.mxu0 0
    %246 = vmatpush1.bf16.msra.mxu0 0
    %247 = vmatprep.subr.bf16.mxu0 0
    %248 = vmatpush1.bf16.msra.mxu0 0
    %249 = vmatprep.subr.bf16.mxu0 0
    %250 = vmatpush1.bf16.msra.mxu0 0
    %251 = vmatprep.subr.bf16.mxu0 0
    %252 = vmatpush1.bf16.msra.mxu0 0
    %253 = vmatprep.subr.bf16.mxu0 0
    %254 = vmatpush1.bf16.msra.mxu0 0
    %255 = vmatprep.subr.bf16.mxu0 0
    %256 = vmatpush1.bf16.msra.mxu0 0
    %257 = vmatprep.mubr.bf16.mxu0 0
    %258 = vmatmul.mubr.bf16.gmra.mrb[0].mxu0 %v155
    %v259 = vpop.f32.mrb[0].mxu0
    %v260 = vadd.f32 %v104, %v259
    %v261 = vpop.f32.mrb[0].mxu0
    %v262 = vadd.f32 %v108, %v261
    %v263 = vpop.f32.mrb[0].mxu0
    %v264 = vadd.f32 %v104, %v263
    %v265 = vpop.f32.mrb[0].mxu0
    %v266 = vadd.f32 %v108, %v265
    %267 = vdwg.mxu0
    %268 = vmatprep.subr.bf16.mxu0 %v174
    %269 = vmatpush1.bf16.msra.mxu0 %v171
    %270 = vmatprep.subr.bf16.mxu0 0
    %271 = vmatpush1.bf16.msra.mxu0 0
    %272 = vmatprep.subr.bf16.mxu0 0
    %273 = vmatpush1.bf16.msra.mxu0 0
    %274 = vmatprep.subr.bf16.mxu0 0
    %275 = vmatpush1.bf16.msra.mxu0 0
    %276 = vmatprep.subr.bf16.mxu0 0
    %277 = vmatpush1.bf16.msra.mxu0 0
    %278 = vmatprep.subr.bf16.mxu0 0
    %279 = vmatpush1.bf16.msra.mxu0 0
    %280 = vmatprep.subr.bf16.mxu0 0
    %281 = vmatpush1.bf16.msra.mxu0 0
    %282 = vmatprep.subr.bf16.mxu0 0
    %283 = vmatpush1.bf16.msra.mxu0 0
    %284 = vmatprep.subr.bf16.mxu0 0
    %285 = vmatpush1.bf16.msra.mxu0 0
    %286 = vmatprep.subr.bf16.mxu0 0
    %287 = vmatpush1.bf16.msra.mxu0 0
    %288 = vmatprep.subr.bf16.mxu0 0
    %289 = vmatpush1.bf16.msra.mxu0 0
    %290 = vmatprep.subr.bf16.mxu0 0
    %291 = vmatpush1.bf16.msra.mxu0 0
    %292 = vmatprep.subr.bf16.mxu0 0
    %293 = vmatpush1.bf16.msra.mxu0 0
    %294 = vmatprep.subr.bf16.mxu0 0
    %295 = vmatpush1.bf16.msra.mxu0 0
    %296 = vmatprep.subr.bf16.mxu0 0
    %297 = vmatpush1.bf16.msra.mxu0 0
    %298 = vmatprep.subr.bf16.mxu0 0
    %299 = vmatpush1.bf16.msra.mxu0 0
    %300 = vmatprep.mubr.bf16.mxu0 0
    %301 = vmatmul.mubr.bf16.gmra.mrb[0].mxu0 %v155
    %v302 = vpop.f32.mrb[0].mxu0
    %v303 = vadd.f32 %v112, %v302
    %v304 = vpop.f32.mrb[0].mxu0
    %v305 = vadd.f32 %v116, %v304
    %v306 = vpop.f32.mrb[0].mxu0
    %v307 = vadd.f32 %v112, %v306
    %v308 = vpop.f32.mrb[0].mxu0
    %v309 = vadd.f32 %v116, %v308
    %310 = vdwg.mxu0
    %311 = vmatprep.subr.bf16.mxu0 %v180
    %312 = vmatpush1.bf16.msra.mxu0 %v177
    %313 = vmatprep.subr.bf16.mxu0 0
    %314 = vmatpush1.bf16.msra.mxu0 0
    %315 = vmatprep.subr.bf16.mxu0 0
    %316 = vmatpush1.bf16.msra.mxu0 0
    %317 = vmatprep.subr.bf16.mxu0 0
    %318 = vmatpush1.bf16.msra.mxu0 0
    %319 = vmatprep.subr.bf16.mxu0 0
    %320 = vmatpush1.bf16.msra.mxu0 0
    %321 = vmatprep.subr.bf16.mxu0 0
    %322 = vmatpush1.bf16.msra.mxu0 0
    %323 = vmatprep.subr.bf16.mxu0 0
    %324 = vmatpush1.bf16.msra.mxu0 0
    %325 = vmatprep.subr.bf16.mxu0 0
    %326 = vmatpush1.bf16.msra.mxu0 0
    %327 = vmatprep.subr.bf16.mxu0 0
    %328 = vmatpush1.bf16.msra.mxu0 0
    %329 = vmatprep.subr.bf16.mxu0 0
    %330 = vmatpush1.bf16.msra.mxu0 0
    %331 = vmatprep.subr.bf16.mxu0 0
    %332 = vmatpush1.bf16.msra.mxu0 0
    %333 = vmatprep.subr.bf16.mxu0 0
    %334 = vmatpush1.bf16.msra.mxu0 0
    %335 = vmatprep.subr.bf16.mxu0 0
    %336 = vmatpush1.bf16.msra.mxu0 0
    %337 = vmatprep.subr.bf16.mxu0 0
    %338 = vmatpush1.bf16.msra.mxu0 0
    %339 = vmatprep.subr.bf16.mxu0 0
    %340 = vmatpush1.bf16.msra.mxu0 0
    %341 = vmatprep.subr.bf16.mxu0 0
    %342 = vmatpush1.bf16.msra.mxu0 0
    %343 = vmatprep.mubr.bf16.mxu0 0
    %344 = vmatmul.mubr.bf16.gmra.mrb[0].mxu0 %v155
    %v345 = vpop.f32.mrb[0].mxu0
    %v346 = vadd.f32 %v120, %v345
    %v347 = vpop.f32.mrb[0].mxu0
    %v348 = vadd.f32 %v124, %v347
    %v349 = vpop.f32.mrb[0].mxu0
    %v350 = vadd.f32 %v120, %v349
    %v351 = vpop.f32.mrb[0].mxu0
    %v352 = vadd.f32 %v124, %v351
    %353 = vdwg.mxu0
    %v354 = vpack.c.bf16 %v221, %v217
    %v355 = vpack.c.bf16 %v223, %v219
    %v356 = vpack.c.bf16 %v264, %v260
    %v357 = vpack.c.bf16 %v266, %v262
    %v358 = vpack.c.bf16 %v307, %v303
    %v359 = vpack.c.bf16 %v309, %v305
    %v360 = vld [vmem:[#allocation2] sm:$0x3]
    %v361 = vld [vmem:[#allocation2 + $0x2] sm:$0x3]
    %v362 = vunpack.c.0.s8 %v360
    %v363 = vunpack.c.0.s8 %v361
    %vm364 = vcmp.eq.s32.totalorder %v362, 0
    %vm365 = vcmp.eq.s32.totalorder %v363, 0
    %v366 = vsel %vm364, -1e+30, 0.0
    %v367 = vsel %vm365, -1e+30, 0.0
    %vm368 = vcmask 130048
    %v369 = vsel %vm368, %v362, 2147483648
    %v370 = vand.u32 %v369, 65535
    %v371 = vshra.s32 %v369, 16
    %v372 = vcvt.s32.f32 %v370
    %v373 = vcvt.s32.f32 %v371
    %374 = vmax.xlane.f32.xlu0 %v373
    %v375 = vpop.xlane.xlu0 %374
    %vm376 = vcmp.eq.f32.partialorder %v373, %v375
    %v377 = vsel %vm376, %v372, -inf
    %378 = vmax.xlane.f32.xlu0 %v377
    %v379 = vpop.xlane.xlu0 %378
    %v380 = vcvt.f32.s32 %v379
    %v381 = vcvt.f32.s32 %v375
    %v382 = vshll.u32 %v381, 16
    %v383 = vadd.s32 %v382, %v380
    %v384 = vsel %vm368, %v363, 2147483648
    %v385 = vand.u32 %v384, 65535
    %v386 = vshra.s32 %v384, 16
    %v387 = vcvt.s32.f32 %v385
    %v388 = vcvt.s32.f32 %v386
    %389 = vmax.xlane.f32.xlu0 %v388
    %v390 = vpop.xlane.xlu0 %389
    %vm391 = vcmp.eq.f32.partialorder %v388, %v390
    %v392 = vsel %vm391, %v387, -inf
    %393 = vmax.xlane.f32.xlu0 %v392
    %v394 = vpop.xlane.xlu0 %393
    %v395 = vcvt.f32.s32 %v394
    %v396 = vcvt.f32.s32 %v390
    %v397 = vshll.u32 %v396, 16
    %v398 = vadd.s32 %v397, %v395
    %vm399 = vcmp.gt.s32.totalorder %v383, 0
    %vm400 = vcmp.gt.s32.totalorder %v398, 0
    %v401 = vsel %vm399, 1, 0
    %v402 = vsel %vm400, 1, 0
    %v403 = vcvt.s32.f32 %v401
    %v404 = vcvt.s32.f32 %v402
    %405 = vmatprep.subr.bf16.mxu0 0
    %406 = vmatpush1.bf16.xpose.msra.mxu0 %v356
    %407 = vmatprep.subr.bf16.mxu0 0
    %408 = vmatpush1.bf16.xpose.msra.mxu0 0
    %409 = vmatprep.subr.bf16.mxu0 0
    %410 = vmatpush1.bf16.xpose.msra.mxu0 0
    %411 = vmatprep.subr.bf16.mxu0 0
    %412 = vmatpush1.bf16.xpose.msra.mxu0 0
    %413 = vmatprep.subr.bf16.mxu0 0
    %414 = vmatpush1.bf16.xpose.msra.mxu0 0
    %415 = vmatprep.subr.bf16.mxu0 0
    %416 = vmatpush1.bf16.xpose.msra.mxu0 0
    %417 = vmatprep.subr.bf16.mxu0 0
    %418 = vmatpush1.bf16.xpose.msra.mxu0 0
    %419 = vmatprep.subr.bf16.mxu0 0
    %420 = vmatpush1.bf16.xpose.msra.mxu0 0
    %421 = vmatprep.subr.bf16.mxu0 0
    %422 = vmatpush1.bf16.xpose.msra.mxu0 0
    %423 = vmatprep.subr.bf16.mxu0 0
    %424 = vmatpush1.bf16.xpose.msra.mxu0 0
    %425 = vmatprep.subr.bf16.mxu0 0
    %426 = vmatpush1.bf16.xpose.msra.mxu0 0
    %427 = vmatprep.subr.bf16.mxu0 0
    %428 = vmatpush1.bf16.xpose.msra.mxu0 0
    %429 = vmatprep.subr.bf16.mxu0 0
    %430 = vmatpush1.bf16.xpose.msra.mxu0 0
    %431 = vmatprep.subr.bf16.mxu0 0
    %432 = vmatpush1.bf16.xpose.msra.mxu0 0
    %433 = vmatprep.subr.bf16.mxu0 0
    %434 = vmatpush1.bf16.xpose.msra.mxu0 0
    %435 = vmatprep.subr.bf16.mxu0 0
    %436 = vmatpush1.bf16.xpose.msra.mxu0 0
    %437 = vmatprep.mubr.bf16.mxu0 0
    %438 = vmatmul.mubr.bf16.gmra.mrb[0].mxu0 %v354
    %v439 = vpop.f32.mrb[0].mxu0
    %v440 = vadd.f32 %v366, %v439
    %v441 = vpop.f32.mrb[0].mxu0
    %v442 = vpop.f32.mrb[0].mxu0
    %v443 = vadd.f32 %v367, %v442
    %v444 = vpop.f32.mrb[0].mxu0
    %445 = vdwg.mxu0
    %v446 = vsel %vm368, %v440, -inf
    %447 = vmax.xlane.f32.xlu0 %v446
    %v448 = vpop.xlane.xlu0 %447
    %v449 = vsel %vm368, %v443, -inf
    %450 = vmax.xlane.f32.xlu0 %v449
    %v451 = vpop.xlane.xlu0 %450
    %v452 = vsub.f32 %v440, %v448
    %v453 = vsub.f32 %v443, %v451
    %v454 = vmul.f32 %v452, 1.442695
    %v455 = vpow.pop %v454
    %v456 = vmul.f32 %v453, 1.442695
    %v457 = vpow.pop %v456
    %v458 = vsel %vm368, %v455, 0.0
    %459 = vadd.xlane.f32.xlu0 %v458
    %v460 = vpop.xlane.xlu0 %459
    %v461 = vsel %vm368, %v457, 0.0
    %462 = vadd.xlane.f32.xlu0 %v461
    %v463 = vpop.xlane.xlu0 %462
    %v464 = vmax.f32 %v460, 1e-20
    %v465 = vmax.f32 %v463, 1e-20
    %v466 = vrcp.pop %v464
    %v467 = vrcp.pop %v465
    %v468 = vmul.f32 %v466, %v403
    %v469 = vmul.f32 %v467, %v404
    %v470 = vmul.f32 %v455, %v468
    %v471 = vmul.f32 %v457, %v469
    %v472 = vpack.c.bf16 %v471, %v470
    %v474 = vsel %vm368, %v472, 0
    %476 = vmatprep.subr.bf16.mxu0 0
    %477 = vmatpush1.bf16.msra.mxu0 %v358
    %478 = vmatprep.subr.bf16.mxu0 0
    %479 = vmatpush1.bf16.msra.mxu0 0
    %480 = vmatprep.subr.bf16.mxu0 0
    %481 = vmatpush1.bf16.msra.mxu0 0
    %482 = vmatprep.subr.bf16.mxu0 0
    %483 = vmatpush1.bf16.msra.mxu0 0
    %484 = vmatprep.subr.bf16.mxu0 0
    %485 = vmatpush1.bf16.msra.mxu0 0
    %486 = vmatprep.subr.bf16.mxu0 0
    %487 = vmatpush1.bf16.msra.mxu0 0
    %488 = vmatprep.subr.bf16.mxu0 0
    %489 = vmatpush1.bf16.msra.mxu0 0
    %490 = vmatprep.subr.bf16.mxu0 0
    %491 = vmatpush1.bf16.msra.mxu0 0
    %492 = vmatprep.subr.bf16.mxu0 0
    %493 = vmatpush1.bf16.msra.mxu0 0
    %494 = vmatprep.subr.bf16.mxu0 0
    %495 = vmatpush1.bf16.msra.mxu0 0
    %496 = vmatprep.subr.bf16.mxu0 0
    %497 = vmatpush1.bf16.msra.mxu0 0
    %498 = vmatprep.subr.bf16.mxu0 0
    %499 = vmatpush1.bf16.msra.mxu0 0
    %500 = vmatprep.subr.bf16.mxu0 0
    %501 = vmatpush1.bf16.msra.mxu0 0
    %502 = vmatprep.subr.bf16.mxu0 0
    %503 = vmatpush1.bf16.msra.mxu0 0
    %504 = vmatprep.subr.bf16.mxu0 0
    %505 = vmatpush1.bf16.msra.mxu0 0
    %506 = vmatprep.subr.bf16.mxu0 0
    %507 = vmatpush1.bf16.msra.mxu0 0
    %508 = vmatprep.mubr.bf16.mxu0 0
    %509 = vmatmul.mubr.bf16.gmra.mrb[0].mxu0 %v474
    %v510 = vpop.f32.mrb[0].mxu0
    %v511 = vadd.f32 0.0, %v510
    %v512 = vpop.f32.mrb[0].mxu0
    %v513 = vpop.f32.mrb[0].mxu0
    %v514 = vadd.f32 0.0, %v513
    %v515 = vpop.f32.mrb[0].mxu0
    %516 = vdwg.mxu0
    %517 = vmatprep.subr.bf16.mxu0 0
    %518 = vmatpush1.bf16.xpose.msra.mxu0 %v357
    %519 = vmatprep.subr.bf16.mxu0 0
    %520 = vmatpush1.bf16.xpose.msra.mxu0 0
    %521 = vmatprep.subr.bf16.mxu0 0
    %522 = vmatpush1.bf16.xpose.msra.mxu0 0
    %523 = vmatprep.subr.bf16.mxu0 0
    %524 = vmatpush1.bf16.xpose.msra.mxu0 0
    %525 = vmatprep.subr.bf16.mxu0 0
    %526 = vmatpush1.bf16.xpose.msra.mxu0 0
    %527 = vmatprep.subr.bf16.mxu0 0
    %528 = vmatpush1.bf16.xpose.msra.mxu0 0
    %529 = vmatprep.subr.bf16.mxu0 0
    %530 = vmatpush1.bf16.xpose.msra.mxu0 0
    %531 = vmatprep.subr.bf16.mxu0 0
    %532 = vmatpush1.bf16.xpose.msra.mxu0 0
    %533 = vmatprep.subr.bf16.mxu0 0
    %534 = vmatpush1.bf16.xpose.msra.mxu0 0
    %535 = vmatprep.subr.bf16.mxu0 0
    %536 = vmatpush1.bf16.xpose.msra.mxu0 0
    %537 = vmatprep.subr.bf16.mxu0 0
    %538 = vmatpush1.bf16.xpose.msra.mxu0 0
    %539 = vmatprep.subr.bf16.mxu0 0
    %540 = vmatpush1.bf16.xpose.msra.mxu0 0
    %541 = vmatprep.subr.bf16.mxu0 0
    %542 = vmatpush1.bf16.xpose.msra.mxu0 0
    %543 = vmatprep.subr.bf16.mxu0 0
    %544 = vmatpush1.bf16.xpose.msra.mxu0 0
    %545 = vmatprep.subr.bf16.mxu0 0
    %546 = vmatpush1.bf16.xpose.msra.mxu0 0
    %547 = vmatprep.subr.bf16.mxu0 0
    %548 = vmatpush1.bf16.xpose.msra.mxu0 0
    %549 = vmatprep.mubr.bf16.mxu0 0
    %550 = vmatmul.mubr.bf16.gmra.mrb[0].mxu0 %v355
    %v551 = vpop.f32.mrb[0].mxu0
    %v552 = vadd.f32 %v366, %v551
    %v553 = vpop.f32.mrb[0].mxu0
    %v554 = vpop.f32.mrb[0].mxu0
    %v555 = vadd.f32 %v367, %v554
    %v556 = vpop.f32.mrb[0].mxu0
    %557 = vdwg.mxu0
    %v558 = vsel %vm368, %v552, -inf
    %559 = vmax.xlane.f32.xlu0 %v558
    %v560 = vpop.xlane.xlu0 %559
    %v561 = vsel %vm368, %v555, -inf
    %562 = vmax.xlane.f32.xlu0 %v561
    %v563 = vpop.xlane.xlu0 %562
    %v564 = vsub.f32 %v552, %v560
    %v565 = vsub.f32 %v555, %v563
    %v566 = vmul.f32 %v564, 1.442695
    %v567 = vpow.pop %v566
    %v568 = vmul.f32 %v565, 1.442695
    %v569 = vpow.pop %v568
    %v570 = vsel %vm368, %v567, 0.0
    %571 = vadd.xlane.f32.xlu0 %v570
    %v572 = vpop.xlane.xlu0 %571
    %v573 = vsel %vm368, %v569, 0.0
    %574 = vadd.xlane.f32.xlu0 %v573
    %v575 = vpop.xlane.xlu0 %574
    %v576 = vmax.f32 %v572, 1e-20
    %v577 = vmax.f32 %v575, 1e-20
    %v578 = vrcp.pop %v576
    %v579 = vrcp.pop %v577
    %v580 = vmul.f32 %v578, %v403
    %v581 = vmul.f32 %v579, %v404
    %v582 = vmul.f32 %v567, %v580
    %v583 = vmul.f32 %v569, %v581
    %v584 = vpack.c.bf16 %v583, %v582
    %v586 = vsel %vm368, %v584, 0
    %588 = vmatprep.subr.bf16.mxu0 0
    %589 = vmatpush1.bf16.msra.mxu0 %v359
    %590 = vmatprep.subr.bf16.mxu0 0
    %591 = vmatpush1.bf16.msra.mxu0 0
    %592 = vmatprep.subr.bf16.mxu0 0
    %593 = vmatpush1.bf16.msra.mxu0 0
    %594 = vmatprep.subr.bf16.mxu0 0
    %595 = vmatpush1.bf16.msra.mxu0 0
    %596 = vmatprep.subr.bf16.mxu0 0
    %597 = vmatpush1.bf16.msra.mxu0 0
    %598 = vmatprep.subr.bf16.mxu0 0
    %599 = vmatpush1.bf16.msra.mxu0 0
    %600 = vmatprep.subr.bf16.mxu0 0
    %601 = vmatpush1.bf16.msra.mxu0 0
    %602 = vmatprep.subr.bf16.mxu0 0
    %603 = vmatpush1.bf16.msra.mxu0 0
    %604 = vmatprep.subr.bf16.mxu0 0
    %605 = vmatpush1.bf16.msra.mxu0 0
    %606 = vmatprep.subr.bf16.mxu0 0
    %607 = vmatpush1.bf16.msra.mxu0 0
    %608 = vmatprep.subr.bf16.mxu0 0
    %609 = vmatpush1.bf16.msra.mxu0 0
    %610 = vmatprep.subr.bf16.mxu0 0
    %611 = vmatpush1.bf16.msra.mxu0 0
    %612 = vmatprep.subr.bf16.mxu0 0
    %613 = vmatpush1.bf16.msra.mxu0 0
    %614 = vmatprep.subr.bf16.mxu0 0
    %615 = vmatpush1.bf16.msra.mxu0 0
    %616 = vmatprep.subr.bf16.mxu0 0
    %617 = vmatpush1.bf16.msra.mxu0 0
    %618 = vmatprep.subr.bf16.mxu0 0
    %619 = vmatpush1.bf16.msra.mxu0 0
    %620 = vmatprep.mubr.bf16.mxu0 0
    %621 = vmatmul.mubr.bf16.gmra.mrb[0].mxu0 %v586
    %v622 = vpop.f32.mrb[0].mxu0
    %v623 = vadd.f32 0.0, %v622
    %v624 = vpop.f32.mrb[0].mxu0
    %v625 = vpop.f32.mrb[0].mxu0
    %v626 = vadd.f32 0.0, %v625
    %v627 = vpop.f32.mrb[0].mxu0
    %628 = vdwg.mxu0
    %v629 = vadd.f32 %v511, %v346
    %v630 = vadd.f32 %v623, %v348
    %v631 = vadd.f32 %v514, %v350
    %v632 = vadd.f32 %v626, %v352
    %vm633 = vcmp.gt.f32.partialorder %v629, 0.0
    %vm634 = vcmp.gt.f32.partialorder %v630, 0.0
    %vm635 = vcmp.gt.f32.partialorder %v631, 0.0
    %vm636 = vcmp.gt.f32.partialorder %v632, 0.0
    %v637 = vmul.f32 %v629, 1.442695
    %v638 = vpow.pop %v637
    %v639 = vmul.f32 %v630, 1.442695
    %v640 = vpow.pop %v639
    %v641 = vmul.f32 %v631, 1.442695
    %v642 = vpow.pop %v641
    %v643 = vmul.f32 %v632, 1.442695
    %v644 = vpow.pop %v643
    %v645 = vsub.f32 %v638, 1.0
    %v646 = vsub.f32 %v640, 1.0
    %v647 = vsub.f32 %v642, 1.0
    %v648 = vsub.f32 %v644, 1.0
    %v649 = vsel %vm633, %v629, %v645
    %v650 = vsel %vm634, %v630, %v646
    %v651 = vsel %vm635, %v631, %v647
    %v652 = vsel %vm636, %v632, %v648
    %v653 = vpack.c.bf16 %v651, %v649
    %v654 = vpack.c.bf16 %v652, %v650
    %v655 = vld [vmem:[#allocation7] sm:$0xff]
    %v656 = vld [vmem:[#allocation7 + $0x8] sm:$0xff]
    %v657 = vld [vmem:[#allocation7 + $0x10] sm:$0xff]
    %v658 = vld [vmem:[#allocation7 + $0x18] sm:$0xff]
    %v659 = vld [vmem:[#allocation7 + $0x20] sm:$0xff]
    %v660 = vld [vmem:[#allocation7 + $0x28] sm:$0xff]
    %v661 = vld [vmem:[#allocation7 + $0x30] sm:$0xff]
    %v662 = vld [vmem:[#allocation7 + $0x38] sm:$0xff]
    %v663 = vld [vmem:[#allocation7 + $0x40] sm:$0xff]
    %v664 = vld [vmem:[#allocation7 + $0x48] sm:$0xff]
    %v665 = vld [vmem:[#allocation7 + $0x50] sm:$0xff]
    %v666 = vld [vmem:[#allocation7 + $0x58] sm:$0xff]
    %v667 = vld [vmem:[#allocation7 + $0x60] sm:$0xff]
    %v668 = vld [vmem:[#allocation7 + $0x68] sm:$0xff]
    %v669 = vld [vmem:[#allocation7 + $0x70] sm:$0xff]
    %v670 = vld [vmem:[#allocation7 + $0x78] sm:$0xff]
    %v671 = vld [vmem:[#allocation7 + $0x80] sm:$0xff]
    %v672 = vld [vmem:[#allocation7 + $0x88] sm:$0xff]
    %v673 = vld [vmem:[#allocation7 + $0x90] sm:$0xff]
    %v674 = vld [vmem:[#allocation7 + $0x98] sm:$0xff]
    %v675 = vld [vmem:[#allocation7 + $0xa0] sm:$0xff]
    %v676 = vld [vmem:[#allocation7 + $0xa8] sm:$0xff]
    %v677 = vld [vmem:[#allocation7 + $0xb0] sm:$0xff]
    %v678 = vld [vmem:[#allocation7 + $0xb8] sm:$0xff]
    %v679 = vld [vmem:[#allocation7 + $0xc0] sm:$0xff]
    %v680 = vld [vmem:[#allocation7 + $0xc8] sm:$0xff]
    %v681 = vld [vmem:[#allocation7 + $0xd0] sm:$0xff]
    %v682 = vld [vmem:[#allocation7 + $0xd8] sm:$0xff]
    %v683 = vld [vmem:[#allocation7 + $0xe0] sm:$0xff]
    %v684 = vld [vmem:[#allocation7 + $0xe8] sm:$0xff]
    %v685 = vld [vmem:[#allocation7 + $0xf0] sm:$0xff]
    %v686 = vld [vmem:[#allocation7 + $0xf8] sm:$0xff]
    %v687 = vld [vmem:[#allocation7 + $0x100] sm:$0xff]
    %v688 = vld [vmem:[#allocation7 + $0x108] sm:$0xff]
    %v689 = vld [vmem:[#allocation7 + $0x110] sm:$0xff]
    %v690 = vld [vmem:[#allocation7 + $0x118] sm:$0xff]
    %v691 = vld [vmem:[#allocation7 + $0x120] sm:$0xff]
    %v692 = vld [vmem:[#allocation7 + $0x128] sm:$0xff]
    %v693 = vld [vmem:[#allocation7 + $0x130] sm:$0xff]
    %v694 = vld [vmem:[#allocation7 + $0x138] sm:$0xff]
    %v695 = vld [vmem:[#allocation7 + $0x140] sm:$0xff]
    %v696 = vld [vmem:[#allocation7 + $0x148] sm:$0xff]
    %v697 = vld [vmem:[#allocation7 + $0x150] sm:$0xff]
    %v698 = vld [vmem:[#allocation7 + $0x158] sm:$0xff]
    %v699 = vld [vmem:[#allocation7 + $0x160] sm:$0xff]
    %v700 = vld [vmem:[#allocation7 + $0x168] sm:$0xff]
    %v701 = vld [vmem:[#allocation7 + $0x170] sm:$0xff]
    %v702 = vld [vmem:[#allocation7 + $0x178] sm:$0xff]
    %v703 = vld [vmem:[#allocation7 + $0x180] sm:$0xff]
    %v704 = vld [vmem:[#allocation7 + $0x188] sm:$0xff]
    %v705 = vld [vmem:[#allocation7 + $0x190] sm:$0xff]
    %v706 = vld [vmem:[#allocation7 + $0x198] sm:$0xff]
    %v707 = vld [vmem:[#allocation7 + $0x1a0] sm:$0xff]
    %v708 = vld [vmem:[#allocation7 + $0x1a8] sm:$0xff]
    %v709 = vld [vmem:[#allocation7 + $0x1b0] sm:$0xff]
    %v710 = vld [vmem:[#allocation7 + $0x1b8] sm:$0xff]
    %v711 = vld [vmem:[#allocation7 + $0x1c0] sm:$0xff]
    %v712 = vld [vmem:[#allocation7 + $0x1c8] sm:$0xff]
    %v713 = vld [vmem:[#allocation7 + $0x1d0] sm:$0xff]
    %v714 = vld [vmem:[#allocation7 + $0x1d8] sm:$0xff]
    %v715 = vld [vmem:[#allocation7 + $0x1e0] sm:$0xff]
    %v716 = vld [vmem:[#allocation7 + $0x1e8] sm:$0xff]
    %v717 = vld [vmem:[#allocation7 + $0x1f0] sm:$0xff]
    %v718 = vld [vmem:[#allocation7 + $0x1f8] sm:$0xff]
    %v719 = vld [vmem:[#allocation7 + $0x200] sm:$0xff]
    %v720 = vld [vmem:[#allocation7 + $0x208] sm:$0xff]
    %v721 = vld [vmem:[#allocation7 + $0x210] sm:$0xff]
    %v722 = vld [vmem:[#allocation7 + $0x218] sm:$0xff]
    %v723 = vld [vmem:[#allocation7 + $0x220] sm:$0xff]
    %v724 = vld [vmem:[#allocation7 + $0x228] sm:$0xff]
    %v725 = vld [vmem:[#allocation7 + $0x230] sm:$0xff]
    %v726 = vld [vmem:[#allocation7 + $0x238] sm:$0xff]
    %v727 = vld [vmem:[#allocation7 + $0x240] sm:$0xff]
    %v728 = vld [vmem:[#allocation7 + $0x248] sm:$0xff]
    %v729 = vld [vmem:[#allocation7 + $0x250] sm:$0xff]
    %v730 = vld [vmem:[#allocation7 + $0x258] sm:$0xff]
    %v731 = vld [vmem:[#allocation7 + $0x260] sm:$0xff]
    %v732 = vld [vmem:[#allocation7 + $0x268] sm:$0xff]
    %v733 = vld [vmem:[#allocation7 + $0x270] sm:$0xff]
    %v734 = vld [vmem:[#allocation7 + $0x278] sm:$0xff]
    %v735 = vld [vmem:[#allocation7 + $0x280] sm:$0xff]
    %v736 = vld [vmem:[#allocation7 + $0x288] sm:$0xff]
    %v737 = vld [vmem:[#allocation7 + $0x290] sm:$0xff]
    %v738 = vld [vmem:[#allocation7 + $0x298] sm:$0xff]
    %v739 = vld [vmem:[#allocation7 + $0x2a0] sm:$0xff]
    %v740 = vld [vmem:[#allocation7 + $0x2a8] sm:$0xff]
    %v741 = vld [vmem:[#allocation7 + $0x2b0] sm:$0xff]
    %v742 = vld [vmem:[#allocation7 + $0x2b8] sm:$0xff]
    %v743 = vld [vmem:[#allocation7 + $0x2c0] sm:$0xff]
    %v744 = vld [vmem:[#allocation7 + $0x2c8] sm:$0xff]
    %v745 = vld [vmem:[#allocation7 + $0x2d0] sm:$0xff]
    %v746 = vld [vmem:[#allocation7 + $0x2d8] sm:$0xff]
    %v747 = vld [vmem:[#allocation7 + $0x2e0] sm:$0xff]
    %v748 = vld [vmem:[#allocation7 + $0x2e8] sm:$0xff]
    %v749 = vld [vmem:[#allocation7 + $0x2f0] sm:$0xff]
    %v750 = vld [vmem:[#allocation7 + $0x2f8] sm:$0xff]
    %v751 = vld [vmem:[#allocation7 + $0x300] sm:$0xff]
    %v752 = vld [vmem:[#allocation7 + $0x308] sm:$0xff]
    %v753 = vld [vmem:[#allocation7 + $0x310] sm:$0xff]
    %v754 = vld [vmem:[#allocation7 + $0x318] sm:$0xff]
    %v755 = vld [vmem:[#allocation7 + $0x320] sm:$0xff]
    %v756 = vld [vmem:[#allocation7 + $0x328] sm:$0xff]
    %v757 = vld [vmem:[#allocation7 + $0x330] sm:$0xff]
    %v758 = vld [vmem:[#allocation7 + $0x338] sm:$0xff]
    %v759 = vld [vmem:[#allocation7 + $0x340] sm:$0xff]
    %v760 = vld [vmem:[#allocation7 + $0x348] sm:$0xff]
    %v761 = vld [vmem:[#allocation7 + $0x350] sm:$0xff]
    %v762 = vld [vmem:[#allocation7 + $0x358] sm:$0xff]
    %v763 = vld [vmem:[#allocation7 + $0x360] sm:$0xff]
    %v764 = vld [vmem:[#allocation7 + $0x368] sm:$0xff]
    %v765 = vld [vmem:[#allocation7 + $0x370] sm:$0xff]
    %v766 = vld [vmem:[#allocation7 + $0x378] sm:$0xff]
    %v767 = vld [vmem:[#allocation7 + $0x380] sm:$0xff]
    %v768 = vld [vmem:[#allocation7 + $0x388] sm:$0xff]
    %v769 = vld [vmem:[#allocation7 + $0x390] sm:$0xff]
    %v770 = vld [vmem:[#allocation7 + $0x398] sm:$0xff]
    %v771 = vld [vmem:[#allocation7 + $0x3a0] sm:$0xff]
    %v772 = vld [vmem:[#allocation7 + $0x3a8] sm:$0xff]
    %v773 = vld [vmem:[#allocation7 + $0x3b0] sm:$0xff]
    %v774 = vld [vmem:[#allocation7 + $0x3b8] sm:$0xff]
    %v775 = vld [vmem:[#allocation7 + $0x3c0] sm:$0xff]
    %v776 = vld [vmem:[#allocation7 + $0x3c8] sm:$0xff]
    %v777 = vld [vmem:[#allocation7 + $0x3d0] sm:$0xff]
    %v778 = vld [vmem:[#allocation7 + $0x3d8] sm:$0xff]
    %v779 = vld [vmem:[#allocation7 + $0x3e0] sm:$0xff]
    %v780 = vld [vmem:[#allocation7 + $0x3e8] sm:$0xff]
    %v781 = vld [vmem:[#allocation7 + $0x3f0] sm:$0xff]
    %v782 = vld [vmem:[#allocation7 + $0x3f8] sm:$0xff]
    %v783 = vld [vmem:[%s5] sm:$0xff]
    %v785 = vlaneseq
    %v786 = vshrl.u32 %v785, 7
    %v787 = vsub.s32 0, %v786
    %v788 = vrot.slane %v783, %v787
    %v789 = vlaneseq
    %v790 = vshrl.u32 %v789, 7
    %v791 = vsub.s32 1, %v790
    %v792 = vrot.slane %v783, %v791
    %v793 = vlaneseq
    %v794 = vshrl.u32 %v793, 7
    %v795 = vsub.s32 2, %v794
    %v796 = vrot.slane %v783, %v795
    %v797 = vlaneseq
    %v798 = vshrl.u32 %v797, 7
    %v799 = vsub.s32 3, %v798
    %v800 = vrot.slane %v783, %v799
    %v801 = vlaneseq
    %v802 = vshrl.u32 %v801, 7
    %v803 = vsub.s32 4, %v802
    %v804 = vrot.slane %v783, %v803
    %v805 = vlaneseq
    %v806 = vshrl.u32 %v805, 7
    %v807 = vsub.s32 5, %v806
    %v808 = vrot.slane %v783, %v807
    %v809 = vlaneseq
    %v810 = vshrl.u32 %v809, 7
    %v811 = vsub.s32 6, %v810
    %v812 = vrot.slane %v783, %v811
    %v813 = vlaneseq
    %v814 = vshrl.u32 %v813, 7
    %v815 = vsub.s32 7, %v814
    %v816 = vrot.slane %v783, %v815
    %v953 = vunpack.c.l.b16 %v655
    %v954 = vunpack.c.h.b16 %v655
    %v955 = vunpack.c.l.b16 %v656
    %v956 = vunpack.c.h.b16 %v656
    %v957 = vunpack.c.l.b16 %v657
    %v958 = vunpack.c.h.b16 %v657
    %v959 = vunpack.c.l.b16 %v658
    %v960 = vunpack.c.h.b16 %v658
    %v961 = vunpack.c.l.b16 %v659
    %v962 = vunpack.c.h.b16 %v659
    %v963 = vunpack.c.l.b16 %v660
    %v964 = vunpack.c.h.b16 %v660
    %v965 = vunpack.c.l.b16 %v661
    %v966 = vunpack.c.h.b16 %v661
    %v967 = vunpack.c.l.b16 %v662
    %v968 = vunpack.c.h.b16 %v662
    %v969 = vunpack.c.l.b16 %v663
    %v970 = vunpack.c.h.b16 %v663
    %v971 = vunpack.c.l.b16 %v664
    %v972 = vunpack.c.h.b16 %v664
    %v973 = vunpack.c.l.b16 %v665
    %v974 = vunpack.c.h.b16 %v665
    %v975 = vunpack.c.l.b16 %v666
    %v976 = vunpack.c.h.b16 %v666
    %v977 = vunpack.c.l.b16 %v667
    %v978 = vunpack.c.h.b16 %v667
    %v979 = vunpack.c.l.b16 %v668
    %v980 = vunpack.c.h.b16 %v668
    %v981 = vunpack.c.l.b16 %v669
    %v982 = vunpack.c.h.b16 %v669
    %v983 = vunpack.c.l.b16 %v670
    %v984 = vunpack.c.h.b16 %v670
    %v985 = vunpack.c.l.b16 %v671
    %v986 = vunpack.c.h.b16 %v671
    %v987 = vunpack.c.l.b16 %v672
    %v988 = vunpack.c.h.b16 %v672
    %v989 = vunpack.c.l.b16 %v673
    %v990 = vunpack.c.h.b16 %v673
    %v991 = vunpack.c.l.b16 %v674
    %v992 = vunpack.c.h.b16 %v674
    %v993 = vunpack.c.l.b16 %v675
    %v994 = vunpack.c.h.b16 %v675
    %v995 = vunpack.c.l.b16 %v676
    %v996 = vunpack.c.h.b16 %v676
    %v997 = vunpack.c.l.b16 %v677
    %v998 = vunpack.c.h.b16 %v677
    %v999 = vunpack.c.l.b16 %v678
    %v1000 = vunpack.c.h.b16 %v678
    %v1001 = vunpack.c.l.b16 %v679
    %v1002 = vunpack.c.h.b16 %v679
    %v1003 = vunpack.c.l.b16 %v680
    %v1004 = vunpack.c.h.b16 %v680
    %v1005 = vunpack.c.l.b16 %v681
    %v1006 = vunpack.c.h.b16 %v681
    %v1007 = vunpack.c.l.b16 %v682
    %v1008 = vunpack.c.h.b16 %v682
    %v1009 = vunpack.c.l.b16 %v683
    %v1010 = vunpack.c.h.b16 %v683
    %v1011 = vunpack.c.l.b16 %v684
    %v1012 = vunpack.c.h.b16 %v684
    %v1013 = vunpack.c.l.b16 %v685
    %v1014 = vunpack.c.h.b16 %v685
    %v1015 = vunpack.c.l.b16 %v686
    %v1016 = vunpack.c.h.b16 %v686
    %v1017 = vunpack.c.l.b16 %v687
    %v1018 = vunpack.c.h.b16 %v687
    %v1019 = vunpack.c.l.b16 %v688
    %v1020 = vunpack.c.h.b16 %v688
    %v1021 = vunpack.c.l.b16 %v689
    %v1022 = vunpack.c.h.b16 %v689
    %v1023 = vunpack.c.l.b16 %v690
    %v1024 = vunpack.c.h.b16 %v690
    %v1025 = vunpack.c.l.b16 %v691
    %v1026 = vunpack.c.h.b16 %v691
    %v1027 = vunpack.c.l.b16 %v692
    %v1028 = vunpack.c.h.b16 %v692
    %v1029 = vunpack.c.l.b16 %v693
    %v1030 = vunpack.c.h.b16 %v693
    %v1031 = vunpack.c.l.b16 %v694
    %v1032 = vunpack.c.h.b16 %v694
    %v1033 = vunpack.c.l.b16 %v695
    %v1034 = vunpack.c.h.b16 %v695
    %v1035 = vunpack.c.l.b16 %v696
    %v1036 = vunpack.c.h.b16 %v696
    %v1037 = vunpack.c.l.b16 %v697
    %v1038 = vunpack.c.h.b16 %v697
    %v1039 = vunpack.c.l.b16 %v698
    %v1040 = vunpack.c.h.b16 %v698
    %v1041 = vunpack.c.l.b16 %v699
    %v1042 = vunpack.c.h.b16 %v699
    %v1043 = vunpack.c.l.b16 %v700
    %v1044 = vunpack.c.h.b16 %v700
    %v1045 = vunpack.c.l.b16 %v701
    %v1046 = vunpack.c.h.b16 %v701
    %v1047 = vunpack.c.l.b16 %v702
    %v1048 = vunpack.c.h.b16 %v702
    %v1049 = vunpack.c.l.b16 %v703
    %v1050 = vunpack.c.h.b16 %v703
    %v1051 = vunpack.c.l.b16 %v704
    %v1052 = vunpack.c.h.b16 %v704
    %v1053 = vunpack.c.l.b16 %v705
    %v1054 = vunpack.c.h.b16 %v705
    %v1055 = vunpack.c.l.b16 %v706
    %v1056 = vunpack.c.h.b16 %v706
    %v1057 = vunpack.c.l.b16 %v707
    %v1058 = vunpack.c.h.b16 %v707
    %v1059 = vunpack.c.l.b16 %v708
    %v1060 = vunpack.c.h.b16 %v708
    %v1061 = vunpack.c.l.b16 %v709
    %v1062 = vunpack.c.h.b16 %v709
    %v1063 = vunpack.c.l.b16 %v710
    %v1064 = vunpack.c.h.b16 %v710
    %v1065 = vunpack.c.l.b16 %v711
    %v1066 = vunpack.c.h.b16 %v711
    %v1067 = vunpack.c.l.b16 %v712
    %v1068 = vunpack.c.h.b16 %v712
    %v1069 = vunpack.c.l.b16 %v713
    %v1070 = vunpack.c.h.b16 %v713
    %v1071 = vunpack.c.l.b16 %v714
    %v1072 = vunpack.c.h.b16 %v714
    %v1073 = vunpack.c.l.b16 %v715
    %v1074 = vunpack.c.h.b16 %v715
    %v1075 = vunpack.c.l.b16 %v716
    %v1076 = vunpack.c.h.b16 %v716
    %v1077 = vunpack.c.l.b16 %v717
    %v1078 = vunpack.c.h.b16 %v717
    %v1079 = vunpack.c.l.b16 %v718
    %v1080 = vunpack.c.h.b16 %v718
    %v1081 = vunpack.c.l.b16 %v719
    %v1082 = vunpack.c.h.b16 %v719
    %v1083 = vunpack.c.l.b16 %v720
    %v1084 = vunpack.c.h.b16 %v720
    %v1085 = vunpack.c.l.b16 %v721
    %v1086 = vunpack.c.h.b16 %v721
    %v1087 = vunpack.c.l.b16 %v722
    %v1088 = vunpack.c.h.b16 %v722
    %v1089 = vunpack.c.l.b16 %v723
    %v1090 = vunpack.c.h.b16 %v723
    %v1091 = vunpack.c.l.b16 %v724
    %v1092 = vunpack.c.h.b16 %v724
    %v1093 = vunpack.c.l.b16 %v725
    %v1094 = vunpack.c.h.b16 %v725
    %v1095 = vunpack.c.l.b16 %v726
    %v1096 = vunpack.c.h.b16 %v726
    %v1097 = vunpack.c.l.b16 %v727
    %v1098 = vunpack.c.h.b16 %v727
    %v1099 = vunpack.c.l.b16 %v728
    %v1100 = vunpack.c.h.b16 %v728
    %v1101 = vunpack.c.l.b16 %v729
    %v1102 = vunpack.c.h.b16 %v729
    %v1103 = vunpack.c.l.b16 %v730
    %v1104 = vunpack.c.h.b16 %v730
    %v1105 = vunpack.c.l.b16 %v731
    %v1106 = vunpack.c.h.b16 %v731
    %v1107 = vunpack.c.l.b16 %v732
    %v1108 = vunpack.c.h.b16 %v732
    %v1109 = vunpack.c.l.b16 %v733
    %v1110 = vunpack.c.h.b16 %v733
    %v1111 = vunpack.c.l.b16 %v734
    %v1112 = vunpack.c.h.b16 %v734
    %v1113 = vunpack.c.l.b16 %v735
    %v1114 = vunpack.c.h.b16 %v735
    %v1115 = vunpack.c.l.b16 %v736
    %v1116 = vunpack.c.h.b16 %v736
    %v1117 = vunpack.c.l.b16 %v737
    %v1118 = vunpack.c.h.b16 %v737
    %v1119 = vunpack.c.l.b16 %v738
    %v1120 = vunpack.c.h.b16 %v738
    %v1121 = vunpack.c.l.b16 %v739
    %v1122 = vunpack.c.h.b16 %v739
    %v1123 = vunpack.c.l.b16 %v740
    %v1124 = vunpack.c.h.b16 %v740
    %v1125 = vunpack.c.l.b16 %v741
    %v1126 = vunpack.c.h.b16 %v741
    %v1127 = vunpack.c.l.b16 %v742
    %v1128 = vunpack.c.h.b16 %v742
    %v1129 = vunpack.c.l.b16 %v743
    %v1130 = vunpack.c.h.b16 %v743
    %v1131 = vunpack.c.l.b16 %v744
    %v1132 = vunpack.c.h.b16 %v744
    %v1133 = vunpack.c.l.b16 %v745
    %v1134 = vunpack.c.h.b16 %v745
    %v1135 = vunpack.c.l.b16 %v746
    %v1136 = vunpack.c.h.b16 %v746
    %v1137 = vunpack.c.l.b16 %v747
    %v1138 = vunpack.c.h.b16 %v747
    %v1139 = vunpack.c.l.b16 %v748
    %v1140 = vunpack.c.h.b16 %v748
    %v1141 = vunpack.c.l.b16 %v749
    %v1142 = vunpack.c.h.b16 %v749
    %v1143 = vunpack.c.l.b16 %v750
    %v1144 = vunpack.c.h.b16 %v750
    %v1145 = vunpack.c.l.b16 %v751
    %v1146 = vunpack.c.h.b16 %v751
    %v1147 = vunpack.c.l.b16 %v752
    %v1148 = vunpack.c.h.b16 %v752
    %v1149 = vunpack.c.l.b16 %v753
    %v1150 = vunpack.c.h.b16 %v753
    %v1151 = vunpack.c.l.b16 %v754
    %v1152 = vunpack.c.h.b16 %v754
    %v1153 = vunpack.c.l.b16 %v755
    %v1154 = vunpack.c.h.b16 %v755
    %v1155 = vunpack.c.l.b16 %v756
    %v1156 = vunpack.c.h.b16 %v756
    %v1157 = vunpack.c.l.b16 %v757
    %v1158 = vunpack.c.h.b16 %v757
    %v1159 = vunpack.c.l.b16 %v758
    %v1160 = vunpack.c.h.b16 %v758
    %v1161 = vunpack.c.l.b16 %v759
    %v1162 = vunpack.c.h.b16 %v759
    %v1163 = vunpack.c.l.b16 %v760
    %v1164 = vunpack.c.h.b16 %v760
    %v1165 = vunpack.c.l.b16 %v761
    %v1166 = vunpack.c.h.b16 %v761
    %v1167 = vunpack.c.l.b16 %v762
    %v1168 = vunpack.c.h.b16 %v762
    %v1169 = vunpack.c.l.b16 %v763
    %v1170 = vunpack.c.h.b16 %v763
    %v1171 = vunpack.c.l.b16 %v764
    %v1172 = vunpack.c.h.b16 %v764
    %v1173 = vunpack.c.l.b16 %v765
    %v1174 = vunpack.c.h.b16 %v765
    %v1175 = vunpack.c.l.b16 %v766
    %v1176 = vunpack.c.h.b16 %v766
    %v1177 = vunpack.c.l.b16 %v767
    %v1178 = vunpack.c.h.b16 %v767
    %v1179 = vunpack.c.l.b16 %v768
    %v1180 = vunpack.c.h.b16 %v768
    %v1181 = vunpack.c.l.b16 %v769
    %v1182 = vunpack.c.h.b16 %v769
    %v1183 = vunpack.c.l.b16 %v770
    %v1184 = vunpack.c.h.b16 %v770
    %v1185 = vunpack.c.l.b16 %v771
    %v1186 = vunpack.c.h.b16 %v771
    %v1187 = vunpack.c.l.b16 %v772
    %v1188 = vunpack.c.h.b16 %v772
    %v1189 = vunpack.c.l.b16 %v773
    %v1190 = vunpack.c.h.b16 %v773
    %v1191 = vunpack.c.l.b16 %v774
    %v1192 = vunpack.c.h.b16 %v774
    %v1193 = vunpack.c.l.b16 %v775
    %v1194 = vunpack.c.h.b16 %v775
    %v1195 = vunpack.c.l.b16 %v776
    %v1196 = vunpack.c.h.b16 %v776
    %v1197 = vunpack.c.l.b16 %v777
    %v1198 = vunpack.c.h.b16 %v777
    %v1199 = vunpack.c.l.b16 %v778
    %v1200 = vunpack.c.h.b16 %v778
    %v1201 = vunpack.c.l.b16 %v779
    %v1202 = vunpack.c.h.b16 %v779
    %v1203 = vunpack.c.l.b16 %v780
    %v1204 = vunpack.c.h.b16 %v780
    %v1205 = vunpack.c.l.b16 %v781
    %v1206 = vunpack.c.h.b16 %v781
    %v1207 = vunpack.c.l.b16 %v782
    %v1208 = vunpack.c.h.b16 %v782
    %v1209 = vpack.c.b16 %v961, %v953
    %v1210 = vpack.c.b16 %v962, %v954
    %v1211 = vpack.c.b16 %v963, %v955
    %v1212 = vpack.c.b16 %v964, %v956
    %v1213 = vpack.c.b16 %v965, %v957
    %v1214 = vpack.c.b16 %v966, %v958
    %v1215 = vpack.c.b16 %v967, %v959
    %v1216 = vpack.c.b16 %v968, %v960
    %v1217 = vpack.c.b16 %v977, %v969
    %v1218 = vpack.c.b16 %v978, %v970
    %v1219 = vpack.c.b16 %v979, %v971
    %v1220 = vpack.c.b16 %v980, %v972
    %v1221 = vpack.c.b16 %v981, %v973
    %v1222 = vpack.c.b16 %v982, %v974
    %v1223 = vpack.c.b16 %v983, %v975
    %v1224 = vpack.c.b16 %v984, %v976
    %v1225 = vpack.c.b16 %v993, %v985
    %v1226 = vpack.c.b16 %v994, %v986
    %v1227 = vpack.c.b16 %v995, %v987
    %v1228 = vpack.c.b16 %v996, %v988
    %v1229 = vpack.c.b16 %v997, %v989
    %v1230 = vpack.c.b16 %v998, %v990
    %v1231 = vpack.c.b16 %v999, %v991
    %v1232 = vpack.c.b16 %v1000, %v992
    %v1233 = vpack.c.b16 %v1009, %v1001
    %v1234 = vpack.c.b16 %v1010, %v1002
    %v1235 = vpack.c.b16 %v1011, %v1003
    %v1236 = vpack.c.b16 %v1012, %v1004
    %v1237 = vpack.c.b16 %v1013, %v1005
    %v1238 = vpack.c.b16 %v1014, %v1006
    %v1239 = vpack.c.b16 %v1015, %v1007
    %v1240 = vpack.c.b16 %v1016, %v1008
    %v1241 = vpack.c.b16 %v1025, %v1017
    %v1242 = vpack.c.b16 %v1026, %v1018
    %v1243 = vpack.c.b16 %v1027, %v1019
    %v1244 = vpack.c.b16 %v1028, %v1020
    %v1245 = vpack.c.b16 %v1029, %v1021
    %v1246 = vpack.c.b16 %v1030, %v1022
    %v1247 = vpack.c.b16 %v1031, %v1023
    %v1248 = vpack.c.b16 %v1032, %v1024
    %v1249 = vpack.c.b16 %v1041, %v1033
    %v1250 = vpack.c.b16 %v1042, %v1034
    %v1251 = vpack.c.b16 %v1043, %v1035
    %v1252 = vpack.c.b16 %v1044, %v1036
    %v1253 = vpack.c.b16 %v1045, %v1037
    %v1254 = vpack.c.b16 %v1046, %v1038
    %v1255 = vpack.c.b16 %v1047, %v1039
    %v1256 = vpack.c.b16 %v1048, %v1040
    %v1257 = vpack.c.b16 %v1057, %v1049
    %v1258 = vpack.c.b16 %v1058, %v1050
    %v1259 = vpack.c.b16 %v1059, %v1051
    %v1260 = vpack.c.b16 %v1060, %v1052
    %v1261 = vpack.c.b16 %v1061, %v1053
    %v1262 = vpack.c.b16 %v1062, %v1054
    %v1263 = vpack.c.b16 %v1063, %v1055
    %v1264 = vpack.c.b16 %v1064, %v1056
    %v1265 = vpack.c.b16 %v1073, %v1065
    %v1266 = vpack.c.b16 %v1074, %v1066
    %v1267 = vpack.c.b16 %v1075, %v1067
    %v1268 = vpack.c.b16 %v1076, %v1068
    %v1269 = vpack.c.b16 %v1077, %v1069
    %v1270 = vpack.c.b16 %v1078, %v1070
    %v1271 = vpack.c.b16 %v1079, %v1071
    %v1272 = vpack.c.b16 %v1080, %v1072
    %v1273 = vpack.c.b16 %v1089, %v1081
    %v1274 = vpack.c.b16 %v1090, %v1082
    %v1275 = vpack.c.b16 %v1091, %v1083
    %v1276 = vpack.c.b16 %v1092, %v1084
    %v1277 = vpack.c.b16 %v1093, %v1085
    %v1278 = vpack.c.b16 %v1094, %v1086
    %v1279 = vpack.c.b16 %v1095, %v1087
    %v1280 = vpack.c.b16 %v1096, %v1088
    %v1281 = vpack.c.b16 %v1105, %v1097
    %v1282 = vpack.c.b16 %v1106, %v1098
    %v1283 = vpack.c.b16 %v1107, %v1099
    %v1284 = vpack.c.b16 %v1108, %v1100
    %v1285 = vpack.c.b16 %v1109, %v1101
    %v1286 = vpack.c.b16 %v1110, %v1102
    %v1287 = vpack.c.b16 %v1111, %v1103
    %v1288 = vpack.c.b16 %v1112, %v1104
    %v1289 = vpack.c.b16 %v1121, %v1113
    %v1290 = vpack.c.b16 %v1122, %v1114
    %v1291 = vpack.c.b16 %v1123, %v1115
    %v1292 = vpack.c.b16 %v1124, %v1116
    %v1293 = vpack.c.b16 %v1125, %v1117
    %v1294 = vpack.c.b16 %v1126, %v1118
    %v1295 = vpack.c.b16 %v1127, %v1119
    %v1296 = vpack.c.b16 %v1128, %v1120
    %v1297 = vpack.c.b16 %v1137, %v1129
    %v1298 = vpack.c.b16 %v1138, %v1130
    %v1299 = vpack.c.b16 %v1139, %v1131
    %v1300 = vpack.c.b16 %v1140, %v1132
    %v1301 = vpack.c.b16 %v1141, %v1133
    %v1302 = vpack.c.b16 %v1142, %v1134
    %v1303 = vpack.c.b16 %v1143, %v1135
    %v1304 = vpack.c.b16 %v1144, %v1136
    %v1305 = vpack.c.b16 %v1153, %v1145
    %v1306 = vpack.c.b16 %v1154, %v1146
    %v1307 = vpack.c.b16 %v1155, %v1147
    %v1308 = vpack.c.b16 %v1156, %v1148
    %v1309 = vpack.c.b16 %v1157, %v1149
    %v1310 = vpack.c.b16 %v1158, %v1150
    %v1311 = vpack.c.b16 %v1159, %v1151
    %v1312 = vpack.c.b16 %v1160, %v1152
    %v1313 = vpack.c.b16 %v1169, %v1161
    %v1314 = vpack.c.b16 %v1170, %v1162
    %v1315 = vpack.c.b16 %v1171, %v1163
    %v1316 = vpack.c.b16 %v1172, %v1164
    %v1317 = vpack.c.b16 %v1173, %v1165
    %v1318 = vpack.c.b16 %v1174, %v1166
    %v1319 = vpack.c.b16 %v1175, %v1167
    %v1320 = vpack.c.b16 %v1176, %v1168
    %v1321 = vpack.c.b16 %v1185, %v1177
    %v1322 = vpack.c.b16 %v1186, %v1178
    %v1323 = vpack.c.b16 %v1187, %v1179
    %v1324 = vpack.c.b16 %v1188, %v1180
    %v1325 = vpack.c.b16 %v1189, %v1181
    %v1326 = vpack.c.b16 %v1190, %v1182
    %v1327 = vpack.c.b16 %v1191, %v1183
    %v1328 = vpack.c.b16 %v1192, %v1184
    %v1329 = vpack.c.b16 %v1201, %v1193
    %v1330 = vpack.c.b16 %v1202, %v1194
    %v1331 = vpack.c.b16 %v1203, %v1195
    %v1332 = vpack.c.b16 %v1204, %v1196
    %v1333 = vpack.c.b16 %v1205, %v1197
    %v1334 = vpack.c.b16 %v1206, %v1198
    %v1335 = vpack.c.b16 %v1207, %v1199
    %v1336 = vpack.c.b16 %v1208, %v1200
    %1465 = vmatprep.subr.bf16.mxu0 %v1210
    %1466 = vmatpush1.bf16.msra.mxu0 %v1209
    %1467 = vmatprep.subr.bf16.mxu0 %v1218
    %1468 = vmatpush1.bf16.msra.mxu0 %v1217
    %1469 = vmatprep.subr.bf16.mxu0 %v1226
    %1470 = vmatpush1.bf16.msra.mxu0 %v1225
    %1471 = vmatprep.subr.bf16.mxu0 %v1234
    %1472 = vmatpush1.bf16.msra.mxu0 %v1233
    %1473 = vmatprep.subr.bf16.mxu0 %v1242
    %1474 = vmatpush1.bf16.msra.mxu0 %v1241
    %1475 = vmatprep.subr.bf16.mxu0 %v1250
    %1476 = vmatpush1.bf16.msra.mxu0 %v1249
    %1477 = vmatprep.subr.bf16.mxu0 %v1258
    %1478 = vmatpush1.bf16.msra.mxu0 %v1257
    %1479 = vmatprep.subr.bf16.mxu0 %v1266
    %1480 = vmatpush1.bf16.msra.mxu0 %v1265
    %1481 = vmatprep.subr.bf16.mxu0 %v1274
    %1482 = vmatpush1.bf16.msra.mxu0 %v1273
    %1483 = vmatprep.subr.bf16.mxu0 %v1282
    %1484 = vmatpush1.bf16.msra.mxu0 %v1281
    %1485 = vmatprep.subr.bf16.mxu0 %v1290
    %1486 = vmatpush1.bf16.msra.mxu0 %v1289
    %1487 = vmatprep.subr.bf16.mxu0 %v1298
    %1488 = vmatpush1.bf16.msra.mxu0 %v1297
    %1489 = vmatprep.subr.bf16.mxu0 %v1306
    %1490 = vmatpush1.bf16.msra.mxu0 %v1305
    %1491 = vmatprep.subr.bf16.mxu0 %v1314
    %1492 = vmatpush1.bf16.msra.mxu0 %v1313
    %1493 = vmatprep.subr.bf16.mxu0 %v1322
    %1494 = vmatpush1.bf16.msra.mxu0 %v1321
    %1495 = vmatprep.subr.bf16.mxu0 %v1330
    %1496 = vmatpush1.bf16.msra.mxu0 %v1329
    %1497 = vmatprep.mubr.bf16.mxu0 %v654
    %1498 = vmatmul.mubr.bf16.gmra.mrb[0].mxu0 %v653
    %v1499 = vpop.f32.mrb[0].mxu0
    %v1500 = vadd.f32 %v788, %v1499
    %v1501 = vpop.f32.mrb[0].mxu0
    %v1502 = vadd.f32 %v792, %v1501
    %v1503 = vpop.f32.mrb[0].mxu0
    %v1504 = vadd.f32 %v788, %v1503
    %v1505 = vpop.f32.mrb[0].mxu0
    %v1506 = vadd.f32 %v792, %v1505
    %1507 = vdwg.mxu0
    %1508 = vmatprep.subr.bf16.mxu0 %v1212
    %1509 = vmatpush1.bf16.msra.mxu0 %v1211
    %1510 = vmatprep.subr.bf16.mxu0 %v1220
    %1511 = vmatpush1.bf16.msra.mxu0 %v1219
    %1512 = vmatprep.subr.bf16.mxu0 %v1228
    %1513 = vmatpush1.bf16.msra.mxu0 %v1227
    %1514 = vmatprep.subr.bf16.mxu0 %v1236
    %1515 = vmatpush1.bf16.msra.mxu0 %v1235
    %1516 = vmatprep.subr.bf16.mxu0 %v1244
    %1517 = vmatpush1.bf16.msra.mxu0 %v1243
    %1518 = vmatprep.subr.bf16.mxu0 %v1252
    %1519 = vmatpush1.bf16.msra.mxu0 %v1251
    %1520 = vmatprep.subr.bf16.mxu0 %v1260
    %1521 = vmatpush1.bf16.msra.mxu0 %v1259
    %1522 = vmatprep.subr.bf16.mxu0 %v1268
    %1523 = vmatpush1.bf16.msra.mxu0 %v1267
    %1524 = vmatprep.subr.bf16.mxu0 %v1276
    %1525 = vmatpush1.bf16.msra.mxu0 %v1275
    %1526 = vmatprep.subr.bf16.mxu0 %v1284
    %1527 = vmatpush1.bf16.msra.mxu0 %v1283
    %1528 = vmatprep.subr.bf16.mxu0 %v1292
    %1529 = vmatpush1.bf16.msra.mxu0 %v1291
    %1530 = vmatprep.subr.bf16.mxu0 %v1300
    %1531 = vmatpush1.bf16.msra.mxu0 %v1299
    %1532 = vmatprep.subr.bf16.mxu0 %v1308
    %1533 = vmatpush1.bf16.msra.mxu0 %v1307
    %1534 = vmatprep.subr.bf16.mxu0 %v1316
    %1535 = vmatpush1.bf16.msra.mxu0 %v1315
    %1536 = vmatprep.subr.bf16.mxu0 %v1324
    %1537 = vmatpush1.bf16.msra.mxu0 %v1323
    %1538 = vmatprep.subr.bf16.mxu0 %v1332
    %1539 = vmatpush1.bf16.msra.mxu0 %v1331
    %1540 = vmatprep.mubr.bf16.mxu0 %v654
    %1541 = vmatmul.mubr.bf16.gmra.mrb[0].mxu0 %v653
    %v1542 = vpop.f32.mrb[0].mxu0
    %v1543 = vadd.f32 %v796, %v1542
    %v1544 = vpop.f32.mrb[0].mxu0
    %v1545 = vadd.f32 %v800, %v1544
    %v1546 = vpop.f32.mrb[0].mxu0
    %v1547 = vadd.f32 %v796, %v1546
    %v1548 = vpop.f32.mrb[0].mxu0
    %v1549 = vadd.f32 %v800, %v1548
    %1550 = vdwg.mxu0
    %1551 = vmatprep.subr.bf16.mxu0 %v1214
    %1552 = vmatpush1.bf16.msra.mxu0 %v1213
    %1553 = vmatprep.subr.bf16.mxu0 %v1222
    %1554 = vmatpush1.bf16.msra.mxu0 %v1221
    %1555 = vmatprep.subr.bf16.mxu0 %v1230
    %1556 = vmatpush1.bf16.msra.mxu0 %v1229
    %1557 = vmatprep.subr.bf16.mxu0 %v1238
    %1558 = vmatpush1.bf16.msra.mxu0 %v1237
    %1559 = vmatprep.subr.bf16.mxu0 %v1246
    %1560 = vmatpush1.bf16.msra.mxu0 %v1245
    %1561 = vmatprep.subr.bf16.mxu0 %v1254
    %1562 = vmatpush1.bf16.msra.mxu0 %v1253
    %1563 = vmatprep.subr.bf16.mxu0 %v1262
    %1564 = vmatpush1.bf16.msra.mxu0 %v1261
    %1565 = vmatprep.subr.bf16.mxu0 %v1270
    %1566 = vmatpush1.bf16.msra.mxu0 %v1269
    %1567 = vmatprep.subr.bf16.mxu0 %v1278
    %1568 = vmatpush1.bf16.msra.mxu0 %v1277
    %1569 = vmatprep.subr.bf16.mxu0 %v1286
    %1570 = vmatpush1.bf16.msra.mxu0 %v1285
    %1571 = vmatprep.subr.bf16.mxu0 %v1294
    %1572 = vmatpush1.bf16.msra.mxu0 %v1293
    %1573 = vmatprep.subr.bf16.mxu0 %v1302
    %1574 = vmatpush1.bf16.msra.mxu0 %v1301
    %1575 = vmatprep.subr.bf16.mxu0 %v1310
    %1576 = vmatpush1.bf16.msra.mxu0 %v1309
    %1577 = vmatprep.subr.bf16.mxu0 %v1318
    %1578 = vmatpush1.bf16.msra.mxu0 %v1317
    %1579 = vmatprep.subr.bf16.mxu0 %v1326
    %1580 = vmatpush1.bf16.msra.mxu0 %v1325
    %1581 = vmatprep.subr.bf16.mxu0 %v1334
    %1582 = vmatpush1.bf16.msra.mxu0 %v1333
    %1583 = vmatprep.mubr.bf16.mxu0 %v654
    %1584 = vmatmul.mubr.bf16.gmra.mrb[0].mxu0 %v653
    %v1585 = vpop.f32.mrb[0].mxu0
    %v1586 = vadd.f32 %v804, %v1585
    %v1587 = vpop.f32.mrb[0].mxu0
    %v1588 = vadd.f32 %v808, %v1587
    %v1589 = vpop.f32.mrb[0].mxu0
    %v1590 = vadd.f32 %v804, %v1589
    %v1591 = vpop.f32.mrb[0].mxu0
    %v1592 = vadd.f32 %v808, %v1591
    %1593 = vdwg.mxu0
    %1594 = vmatprep.subr.bf16.mxu0 %v1216
    %1595 = vmatpush1.bf16.msra.mxu0 %v1215
    %1596 = vmatprep.subr.bf16.mxu0 %v1224
    %1597 = vmatpush1.bf16.msra.mxu0 %v1223
    %1598 = vmatprep.subr.bf16.mxu0 %v1232
    %1599 = vmatpush1.bf16.msra.mxu0 %v1231
    %1600 = vmatprep.subr.bf16.mxu0 %v1240
    %1601 = vmatpush1.bf16.msra.mxu0 %v1239
    %1602 = vmatprep.subr.bf16.mxu0 %v1248
    %1603 = vmatpush1.bf16.msra.mxu0 %v1247
    %1604 = vmatprep.subr.bf16.mxu0 %v1256
    %1605 = vmatpush1.bf16.msra.mxu0 %v1255
    %1606 = vmatprep.subr.bf16.mxu0 %v1264
    %1607 = vmatpush1.bf16.msra.mxu0 %v1263
    %1608 = vmatprep.subr.bf16.mxu0 %v1272
    %1609 = vmatpush1.bf16.msra.mxu0 %v1271
    %1610 = vmatprep.subr.bf16.mxu0 %v1280
    %1611 = vmatpush1.bf16.msra.mxu0 %v1279
    %1612 = vmatprep.subr.bf16.mxu0 %v1288
    %1613 = vmatpush1.bf16.msra.mxu0 %v1287
    %1614 = vmatprep.subr.bf16.mxu0 %v1296
    %1615 = vmatpush1.bf16.msra.mxu0 %v1295
    %1616 = vmatprep.subr.bf16.mxu0 %v1304
    %1617 = vmatpush1.bf16.msra.mxu0 %v1303
    %1618 = vmatprep.subr.bf16.mxu0 %v1312
    %1619 = vmatpush1.bf16.msra.mxu0 %v1311
    %1620 = vmatprep.subr.bf16.mxu0 %v1320
    %1621 = vmatpush1.bf16.msra.mxu0 %v1319
    %1622 = vmatprep.subr.bf16.mxu0 %v1328
    %1623 = vmatpush1.bf16.msra.mxu0 %v1327
    %1624 = vmatprep.subr.bf16.mxu0 %v1336
    %1625 = vmatpush1.bf16.msra.mxu0 %v1335
    %1626 = vmatprep.mubr.bf16.mxu0 %v654
    %1627 = vmatmul.mubr.bf16.gmra.mrb[0].mxu0 %v653
    %v1628 = vpop.f32.mrb[0].mxu0
    %v1629 = vadd.f32 %v812, %v1628
    %v1630 = vpop.f32.mrb[0].mxu0
    %v1631 = vadd.f32 %v816, %v1630
    %v1632 = vpop.f32.mrb[0].mxu0
    %v1633 = vadd.f32 %v812, %v1632
    %v1634 = vpop.f32.mrb[0].mxu0
    %v1635 = vadd.f32 %v816, %v1634
    %1636 = vdwg.mxu0
    %v1637 = vpack.c.bf16 %v1504, %v1500
    %v1638 = vpack.c.bf16 %v1506, %v1502
    %v1639 = vpack.c.bf16 %v1547, %v1543
    %v1640 = vpack.c.bf16 %v1549, %v1545
    %v1641 = vpack.c.bf16 %v1590, %v1586
    %v1642 = vpack.c.bf16 %v1592, %v1588
    %1643 = vmatprep.subr.bf16.mxu0 0
    %1644 = vmatpush1.bf16.xpose.msra.mxu0 %v1639
    %1645 = vmatprep.subr.bf16.mxu0 0
    %1646 = vmatpush1.bf16.xpose.msra.mxu0 0
    %1647 = vmatprep.subr.bf16.mxu0 0
    %1648 = vmatpush1.bf16.xpose.msra.mxu0 0
    %1649 = vmatprep.subr.bf16.mxu0 0
    %1650 = vmatpush1.bf16.xpose.msra.mxu0 0
    %1651 = vmatprep.subr.bf16.mxu0 0
    %1652 = vmatpush1.bf16.xpose.msra.mxu0 0
    %1653 = vmatprep.subr.bf16.mxu0 0
    %1654 = vmatpush1.bf16.xpose.msra.mxu0 0
    %1655 = vmatprep.subr.bf16.mxu0 0
    %1656 = vmatpush1.bf16.xpose.msra.mxu0 0
    %1657 = vmatprep.subr.bf16.mxu0 0
    %1658 = vmatpush1.bf16.xpose.msra.mxu0 0
    %1659 = vmatprep.subr.bf16.mxu0 0
    %1660 = vmatpush1.bf16.xpose.msra.mxu0 0
    %1661 = vmatprep.subr.bf16.mxu0 0
    %1662 = vmatpush1.bf16.xpose.msra.mxu0 0
    %1663 = vmatprep.subr.bf16.mxu0 0
    %1664 = vmatpush1.bf16.xpose.msra.mxu0 0
    %1665 = vmatprep.subr.bf16.mxu0 0
    %1666 = vmatpush1.bf16.xpose.msra.mxu0 0
    %1667 = vmatprep.subr.bf16.mxu0 0
    %1668 = vmatpush1.bf16.xpose.msra.mxu0 0
    %1669 = vmatprep.subr.bf16.mxu0 0
    %1670 = vmatpush1.bf16.xpose.msra.mxu0 0
    %1671 = vmatprep.subr.bf16.mxu0 0
    %1672 = vmatpush1.bf16.xpose.msra.mxu0 0
    %1673 = vmatprep.subr.bf16.mxu0 0
    %1674 = vmatpush1.bf16.xpose.msra.mxu0 0
    %1675 = vmatprep.mubr.bf16.mxu0 0
    %1676 = vmatmul.mubr.bf16.gmra.mrb[0].mxu0 %v1637
    %v1677 = vpop.f32.mrb[0].mxu0
    %v1678 = vadd.f32 %v366, %v1677
    %v1679 = vpop.f32.mrb[0].mxu0
    %v1680 = vpop.f32.mrb[0].mxu0
    %v1681 = vadd.f32 %v367, %v1680
    %v1682 = vpop.f32.mrb[0].mxu0
    %1683 = vdwg.mxu0
    %v1684 = vsel %vm368, %v1678, -inf
    %1685 = vmax.xlane.f32.xlu0 %v1684
    %v1686 = vpop.xlane.xlu0 %1685
    %v1687 = vsel %vm368, %v1681, -inf
    %1688 = vmax.xlane.f32.xlu0 %v1687
    %v1689 = vpop.xlane.xlu0 %1688
    %v1690 = vsub.f32 %v1678, %v1686
    %v1691 = vsub.f32 %v1681, %v1689
    %v1692 = vmul.f32 %v1690, 1.442695
    %v1693 = vpow.pop %v1692
    %v1694 = vmul.f32 %v1691, 1.442695
    %v1695 = vpow.pop %v1694
    %v1696 = vsel %vm368, %v1693, 0.0
    %1697 = vadd.xlane.f32.xlu0 %v1696
    %v1698 = vpop.xlane.xlu0 %1697
    %v1699 = vsel %vm368, %v1695, 0.0
    %1700 = vadd.xlane.f32.xlu0 %v1699
    %v1701 = vpop.xlane.xlu0 %1700
    %v1702 = vmax.f32 %v1698, 1e-20
    %v1703 = vmax.f32 %v1701, 1e-20
    %v1704 = vrcp.pop %v1702
    %v1705 = vrcp.pop %v1703
    %v1706 = vmul.f32 %v1704, %v403
    %v1707 = vmul.f32 %v1705, %v404
    %v1708 = vmul.f32 %v1693, %v1706
    %v1709 = vmul.f32 %v1695, %v1707
    %v1710 = vpack.c.bf16 %v1709, %v1708
    %v1712 = vsel %vm368, %v1710, 0
    %1714 = vmatprep.subr.bf16.mxu0 0
    %1715 = vmatpush1.bf16.msra.mxu0 %v1641
    %1716 = vmatprep.subr.bf16.mxu0 0
    %1717 = vmatpush1.bf16.msra.mxu0 0
    %1718 = vmatprep.subr.bf16.mxu0 0
    %1719 = vmatpush1.bf16.msra.mxu0 0
    %1720 = vmatprep.subr.bf16.mxu0 0
    %1721 = vmatpush1.bf16.msra.mxu0 0
    %1722 = vmatprep.subr.bf16.mxu0 0
    %1723 = vmatpush1.bf16.msra.mxu0 0
    %1724 = vmatprep.subr.bf16.mxu0 0
    %1725 = vmatpush1.bf16.msra.mxu0 0
    %1726 = vmatprep.subr.bf16.mxu0 0
    %1727 = vmatpush1.bf16.msra.mxu0 0
    %1728 = vmatprep.subr.bf16.mxu0 0
    %1729 = vmatpush1.bf16.msra.mxu0 0
    %1730 = vmatprep.subr.bf16.mxu0 0
    %1731 = vmatpush1.bf16.msra.mxu0 0
    %1732 = vmatprep.subr.bf16.mxu0 0
    %1733 = vmatpush1.bf16.msra.mxu0 0
    %1734 = vmatprep.subr.bf16.mxu0 0
    %1735 = vmatpush1.bf16.msra.mxu0 0
    %1736 = vmatprep.subr.bf16.mxu0 0
    %1737 = vmatpush1.bf16.msra.mxu0 0
    %1738 = vmatprep.subr.bf16.mxu0 0
    %1739 = vmatpush1.bf16.msra.mxu0 0
    %1740 = vmatprep.subr.bf16.mxu0 0
    %1741 = vmatpush1.bf16.msra.mxu0 0
    %1742 = vmatprep.subr.bf16.mxu0 0
    %1743 = vmatpush1.bf16.msra.mxu0 0
    %1744 = vmatprep.subr.bf16.mxu0 0
    %1745 = vmatpush1.bf16.msra.mxu0 0
    %1746 = vmatprep.mubr.bf16.mxu0 0
    %1747 = vmatmul.mubr.bf16.gmra.mrb[0].mxu0 %v1712
    %v1748 = vpop.f32.mrb[0].mxu0
    %v1749 = vadd.f32 0.0, %v1748
    %v1750 = vpop.f32.mrb[0].mxu0
    %v1751 = vpop.f32.mrb[0].mxu0
    %v1752 = vadd.f32 0.0, %v1751
    %v1753 = vpop.f32.mrb[0].mxu0
    %1754 = vdwg.mxu0
    %1755 = vmatprep.subr.bf16.mxu0 0
    %1756 = vmatpush1.bf16.xpose.msra.mxu0 %v1640
    %1757 = vmatprep.subr.bf16.mxu0 0
    %1758 = vmatpush1.bf16.xpose.msra.mxu0 0
    %1759 = vmatprep.subr.bf16.mxu0 0
    %1760 = vmatpush1.bf16.xpose.msra.mxu0 0
    %1761 = vmatprep.subr.bf16.mxu0 0
    %1762 = vmatpush1.bf16.xpose.msra.mxu0 0
    %1763 = vmatprep.subr.bf16.mxu0 0
    %1764 = vmatpush1.bf16.xpose.msra.mxu0 0
    %1765 = vmatprep.subr.bf16.mxu0 0
    %1766 = vmatpush1.bf16.xpose.msra.mxu0 0
    %1767 = vmatprep.subr.bf16.mxu0 0
    %1768 = vmatpush1.bf16.xpose.msra.mxu0 0
    %1769 = vmatprep.subr.bf16.mxu0 0
    %1770 = vmatpush1.bf16.xpose.msra.mxu0 0
    %1771 = vmatprep.subr.bf16.mxu0 0
    %1772 = vmatpush1.bf16.xpose.msra.mxu0 0
    %1773 = vmatprep.subr.bf16.mxu0 0
    %1774 = vmatpush1.bf16.xpose.msra.mxu0 0
    %1775 = vmatprep.subr.bf16.mxu0 0
    %1776 = vmatpush1.bf16.xpose.msra.mxu0 0
    %1777 = vmatprep.subr.bf16.mxu0 0
    %1778 = vmatpush1.bf16.xpose.msra.mxu0 0
    %1779 = vmatprep.subr.bf16.mxu0 0
    %1780 = vmatpush1.bf16.xpose.msra.mxu0 0
    %1781 = vmatprep.subr.bf16.mxu0 0
    %1782 = vmatpush1.bf16.xpose.msra.mxu0 0
    %1783 = vmatprep.subr.bf16.mxu0 0
    %1784 = vmatpush1.bf16.xpose.msra.mxu0 0
    %1785 = vmatprep.subr.bf16.mxu0 0
    %1786 = vmatpush1.bf16.xpose.msra.mxu0 0
    %1787 = vmatprep.mubr.bf16.mxu0 0
    %1788 = vmatmul.mubr.bf16.gmra.mrb[0].mxu0 %v1638
    %v1789 = vpop.f32.mrb[0].mxu0
    %v1790 = vadd.f32 %v366, %v1789
    %v1791 = vpop.f32.mrb[0].mxu0
    %v1792 = vpop.f32.mrb[0].mxu0
    %v1793 = vadd.f32 %v367, %v1792
    %v1794 = vpop.f32.mrb[0].mxu0
    %1795 = vdwg.mxu0
    %v1796 = vsel %vm368, %v1790, -inf
    %1797 = vmax.xlane.f32.xlu0 %v1796
    %v1798 = vpop.xlane.xlu0 %1797
    %v1799 = vsel %vm368, %v1793, -inf
    %1800 = vmax.xlane.f32.xlu0 %v1799
    %v1801 = vpop.xlane.xlu0 %1800
    %v1802 = vsub.f32 %v1790, %v1798
    %v1803 = vsub.f32 %v1793, %v1801
    %v1804 = vmul.f32 %v1802, 1.442695
    %v1805 = vpow.pop %v1804
    %v1806 = vmul.f32 %v1803, 1.442695
    %v1807 = vpow.pop %v1806
    %v1808 = vsel %vm368, %v1805, 0.0
    %1809 = vadd.xlane.f32.xlu0 %v1808
    %v1810 = vpop.xlane.xlu0 %1809
    %v1811 = vsel %vm368, %v1807, 0.0
    %1812 = vadd.xlane.f32.xlu0 %v1811
    %v1813 = vpop.xlane.xlu0 %1812
    %v1814 = vmax.f32 %v1810, 1e-20
    %v1815 = vmax.f32 %v1813, 1e-20
    %v1816 = vrcp.pop %v1814
    %v1817 = vrcp.pop %v1815
    %v1818 = vmul.f32 %v1816, %v403
    %v1819 = vmul.f32 %v1817, %v404
    %v1820 = vmul.f32 %v1805, %v1818
    %v1821 = vmul.f32 %v1807, %v1819
    %v1822 = vpack.c.bf16 %v1821, %v1820
    %v1824 = vsel %vm368, %v1822, 0
    %1826 = vmatprep.subr.bf16.mxu0 0
    %1827 = vmatpush1.bf16.msra.mxu0 %v1642
    %1828 = vmatprep.subr.bf16.mxu0 0
    %1829 = vmatpush1.bf16.msra.mxu0 0
    %1830 = vmatprep.subr.bf16.mxu0 0
    %1831 = vmatpush1.bf16.msra.mxu0 0
    %1832 = vmatprep.subr.bf16.mxu0 0
    %1833 = vmatpush1.bf16.msra.mxu0 0
    %1834 = vmatprep.subr.bf16.mxu0 0
    %1835 = vmatpush1.bf16.msra.mxu0 0
    %1836 = vmatprep.subr.bf16.mxu0 0
    %1837 = vmatpush1.bf16.msra.mxu0 0
    %1838 = vmatprep.subr.bf16.mxu0 0
    %1839 = vmatpush1.bf16.msra.mxu0 0
    %1840 = vmatprep.subr.bf16.mxu0 0
    %1841 = vmatpush1.bf16.msra.mxu0 0
    %1842 = vmatprep.subr.bf16.mxu0 0
    %1843 = vmatpush1.bf16.msra.mxu0 0
    %1844 = vmatprep.subr.bf16.mxu0 0
    %1845 = vmatpush1.bf16.msra.mxu0 0
    %1846 = vmatprep.subr.bf16.mxu0 0
    %1847 = vmatpush1.bf16.msra.mxu0 0
    %1848 = vmatprep.subr.bf16.mxu0 0
    %1849 = vmatpush1.bf16.msra.mxu0 0
    %1850 = vmatprep.subr.bf16.mxu0 0
    %1851 = vmatpush1.bf16.msra.mxu0 0
    %1852 = vmatprep.subr.bf16.mxu0 0
    %1853 = vmatpush1.bf16.msra.mxu0 0
    %1854 = vmatprep.subr.bf16.mxu0 0
    %1855 = vmatpush1.bf16.msra.mxu0 0
    %1856 = vmatprep.subr.bf16.mxu0 0
    %1857 = vmatpush1.bf16.msra.mxu0 0
    %1858 = vmatprep.mubr.bf16.mxu0 0
    %1859 = vmatmul.mubr.bf16.gmra.mrb[0].mxu0 %v1824
    %v1860 = vpop.f32.mrb[0].mxu0
    %v1861 = vadd.f32 0.0, %v1860
    %v1862 = vpop.f32.mrb[0].mxu0
    %v1863 = vpop.f32.mrb[0].mxu0
    %v1864 = vadd.f32 0.0, %v1863
    %v1865 = vpop.f32.mrb[0].mxu0
    %1866 = vdwg.mxu0
    %v1867 = vadd.f32 %v1749, %v1629
    %v1868 = vadd.f32 %v1861, %v1631
    %v1869 = vadd.f32 %v1752, %v1633
    %v1870 = vadd.f32 %v1864, %v1635
    %vm1871 = vcmp.gt.f32.partialorder %v1867, 0.0
    %vm1872 = vcmp.gt.f32.partialorder %v1868, 0.0
    %vm1873 = vcmp.gt.f32.partialorder %v1869, 0.0
    %vm1874 = vcmp.gt.f32.partialorder %v1870, 0.0
    %v1875 = vmul.f32 %v1867, 1.442695
    %v1876 = vpow.pop %v1875
    %v1877 = vmul.f32 %v1868, 1.442695
    %v1878 = vpow.pop %v1877
    %v1879 = vmul.f32 %v1869, 1.442695
    %v1880 = vpow.pop %v1879
    %v1881 = vmul.f32 %v1870, 1.442695
    %v1882 = vpow.pop %v1881
    %v1883 = vsub.f32 %v1876, 1.0
    %v1884 = vsub.f32 %v1878, 1.0
    %v1885 = vsub.f32 %v1880, 1.0
    %v1886 = vsub.f32 %v1882, 1.0
    %v1887 = vsel %vm1871, %v1867, %v1883
    %v1888 = vsel %vm1872, %v1868, %v1884
    %v1889 = vsel %vm1873, %v1869, %v1885
    %v1890 = vsel %vm1874, %v1870, %v1886
    %v1891 = vpack.c.bf16 %v1889, %v1887
    %v1892 = vpack.c.bf16 %v1890, %v1888
    %v1893 = vld [vmem:[#allocation8] sm:$0xff]
    %v1894 = vld [vmem:[#allocation8 + $0x8] sm:$0xff]
    %v1895 = vld [vmem:[#allocation8 + $0x10] sm:$0xff]
    %v1896 = vld [vmem:[#allocation8 + $0x18] sm:$0xf]
    %v1897 = vld [vmem:[#allocation8 + $0x1c] sm:$0xff]
    %v1898 = vld [vmem:[#allocation8 + $0x24] sm:$0xff]
    %v1899 = vld [vmem:[#allocation8 + $0x2c] sm:$0xff]
    %v1900 = vld [vmem:[#allocation8 + $0x34] sm:$0xf]
    %v1901 = vld [vmem:[#allocation8 + $0x38] sm:$0xff]
    %v1902 = vld [vmem:[#allocation8 + $0x40] sm:$0xff]
    %v1903 = vld [vmem:[#allocation8 + $0x48] sm:$0xff]
    %v1904 = vld [vmem:[#allocation8 + $0x50] sm:$0xf]
    %v1905 = vld [vmem:[#allocation8 + $0x54] sm:$0xff]
    %v1906 = vld [vmem:[#allocation8 + $0x5c] sm:$0xff]
    %v1907 = vld [vmem:[#allocation8 + $0x64] sm:$0xff]
    %v1908 = vld [vmem:[#allocation8 + $0x6c] sm:$0xf]
    %v1909 = vld [vmem:[#allocation8 + $0x70] sm:$0xff]
    %v1910 = vld [vmem:[#allocation8 + $0x78] sm:$0xff]
    %v1911 = vld [vmem:[#allocation8 + $0x80] sm:$0xff]
    %v1912 = vld [vmem:[#allocation8 + $0x88] sm:$0xf]
    %v1913 = vld [vmem:[#allocation8 + $0x8c] sm:$0xff]
    %v1914 = vld [vmem:[#allocation8 + $0x94] sm:$0xff]
    %v1915 = vld [vmem:[#allocation8 + $0x9c] sm:$0xff]
    %v1916 = vld [vmem:[#allocation8 + $0xa4] sm:$0xf]
    %v1917 = vld [vmem:[#allocation8 + $0xa8] sm:$0xff]
    %v1918 = vld [vmem:[#allocation8 + $0xb0] sm:$0xff]
    %v1919 = vld [vmem:[#allocation8 + $0xb8] sm:$0xff]
    %v1920 = vld [vmem:[#allocation8 + $0xc0] sm:$0xf]
    %v1921 = vld [vmem:[#allocation8 + $0xc4] sm:$0xff]
    %v1922 = vld [vmem:[#allocation8 + $0xcc] sm:$0xff]
    %v1923 = vld [vmem:[#allocation8 + $0xd4] sm:$0xff]
    %v1924 = vld [vmem:[#allocation8 + $0xdc] sm:$0xf]
    %v1925 = vld [vmem:[#allocation8 + $0xe0] sm:$0xff]
    %v1926 = vld [vmem:[#allocation8 + $0xe8] sm:$0xff]
    %v1927 = vld [vmem:[#allocation8 + $0xf0] sm:$0xff]
    %v1928 = vld [vmem:[#allocation8 + $0xf8] sm:$0xf]
    %v1929 = vld [vmem:[#allocation8 + $0xfc] sm:$0xff]
    %v1930 = vld [vmem:[#allocation8 + $0x104] sm:$0xff]
    %v1931 = vld [vmem:[#allocation8 + $0x10c] sm:$0xff]
    %v1932 = vld [vmem:[#allocation8 + $0x114] sm:$0xf]
    %v1933 = vld [vmem:[#allocation8 + $0x118] sm:$0xff]
    %v1934 = vld [vmem:[#allocation8 + $0x120] sm:$0xff]
    %v1935 = vld [vmem:[#allocation8 + $0x128] sm:$0xff]
    %v1936 = vld [vmem:[#allocation8 + $0x130] sm:$0xf]
    %v1937 = vld [vmem:[#allocation8 + $0x134] sm:$0xff]
    %v1938 = vld [vmem:[#allocation8 + $0x13c] sm:$0xff]
    %v1939 = vld [vmem:[#allocation8 + $0x144] sm:$0xff]
    %v1940 = vld [vmem:[#allocation8 + $0x14c] sm:$0xf]
    %v1941 = vld [vmem:[#allocation8 + $0x150] sm:$0xff]
    %v1942 = vld [vmem:[#allocation8 + $0x158] sm:$0xff]
    %v1943 = vld [vmem:[#allocation8 + $0x160] sm:$0xff]
    %v1944 = vld [vmem:[#allocation8 + $0x168] sm:$0xf]
    %v1945 = vld [vmem:[#allocation8 + $0x16c] sm:$0xff]
    %v1946 = vld [vmem:[#allocation8 + $0x174] sm:$0xff]
    %v1947 = vld [vmem:[#allocation8 + $0x17c] sm:$0xff]
    %v1948 = vld [vmem:[#allocation8 + $0x184] sm:$0xf]
    %v1949 = vld [vmem:[#allocation8 + $0x188] sm:$0xff]
    %v1950 = vld [vmem:[#allocation8 + $0x190] sm:$0xff]
    %v1951 = vld [vmem:[#allocation8 + $0x198] sm:$0xff]
    %v1952 = vld [vmem:[#allocation8 + $0x1a0] sm:$0xf]
    %v1953 = vld [vmem:[#allocation8 + $0x1a4] sm:$0xff]
    %v1954 = vld [vmem:[#allocation8 + $0x1ac] sm:$0xff]
    %v1955 = vld [vmem:[#allocation8 + $0x1b4] sm:$0xff]
    %v1956 = vld [vmem:[#allocation8 + $0x1bc] sm:$0xf]
    %v1957 = vld [vmem:[#allocation8 + $0x1c0] sm:$0xff]
    %v1958 = vld [vmem:[#allocation8 + $0x1c8] sm:$0xff]
    %v1959 = vld [vmem:[#allocation8 + $0x1d0] sm:$0xff]
    %v1960 = vld [vmem:[#allocation8 + $0x1d8] sm:$0xf]
    %v1961 = vld [vmem:[#allocation8 + $0x1dc] sm:$0xff]
    %v1962 = vld [vmem:[#allocation8 + $0x1e4] sm:$0xff]
    %v1963 = vld [vmem:[#allocation8 + $0x1ec] sm:$0xff]
    %v1964 = vld [vmem:[#allocation8 + $0x1f4] sm:$0xf]
    %v1965 = vld [vmem:[#allocation8 + $0x1f8] sm:$0xff]
    %v1966 = vld [vmem:[#allocation8 + $0x200] sm:$0xff]
    %v1967 = vld [vmem:[#allocation8 + $0x208] sm:$0xff]
    %v1968 = vld [vmem:[#allocation8 + $0x210] sm:$0xf]
    %v1969 = vld [vmem:[#allocation8 + $0x214] sm:$0xff]
    %v1970 = vld [vmem:[#allocation8 + $0x21c] sm:$0xff]
    %v1971 = vld [vmem:[#allocation8 + $0x224] sm:$0xff]
    %v1972 = vld [vmem:[#allocation8 + $0x22c] sm:$0xf]
    %v1973 = vld [vmem:[#allocation8 + $0x230] sm:$0xff]
    %v1974 = vld [vmem:[#allocation8 + $0x238] sm:$0xff]
    %v1975 = vld [vmem:[#allocation8 + $0x240] sm:$0xff]
    %v1976 = vld [vmem:[#allocation8 + $0x248] sm:$0xf]
    %v1977 = vld [vmem:[#allocation8 + $0x24c] sm:$0xff]
    %v1978 = vld [vmem:[#allocation8 + $0x254] sm:$0xff]
    %v1979 = vld [vmem:[#allocation8 + $0x25c] sm:$0xff]
    %v1980 = vld [vmem:[#allocation8 + $0x264] sm:$0xf]
    %v1981 = vld [vmem:[#allocation8 + $0x268] sm:$0xff]
    %v1982 = vld [vmem:[#allocation8 + $0x270] sm:$0xff]
    %v1983 = vld [vmem:[#allocation8 + $0x278] sm:$0xff]
    %v1984 = vld [vmem:[#allocation8 + $0x280] sm:$0xf]
    %v1985 = vld [vmem:[#allocation8 + $0x284] sm:$0xff]
    %v1986 = vld [vmem:[#allocation8 + $0x28c] sm:$0xff]
    %v1987 = vld [vmem:[#allocation8 + $0x294] sm:$0xff]
    %v1988 = vld [vmem:[#allocation8 + $0x29c] sm:$0xf]
    %v1989 = vld [vmem:[#allocation8 + $0x2a0] sm:$0xff]
    %v1990 = vld [vmem:[#allocation8 + $0x2a8] sm:$0xff]
    %v1991 = vld [vmem:[#allocation8 + $0x2b0] sm:$0xff]
    %v1992 = vld [vmem:[#allocation8 + $0x2b8] sm:$0xf]
    %v1993 = vld [vmem:[#allocation8 + $0x2bc] sm:$0xff]
    %v1994 = vld [vmem:[#allocation8 + $0x2c4] sm:$0xff]
    %v1995 = vld [vmem:[#allocation8 + $0x2cc] sm:$0xff]
    %v1996 = vld [vmem:[#allocation8 + $0x2d4] sm:$0xf]
    %v1997 = vld [vmem:[#allocation8 + $0x2d8] sm:$0xff]
    %v1998 = vld [vmem:[#allocation8 + $0x2e0] sm:$0xff]
    %v1999 = vld [vmem:[#allocation8 + $0x2e8] sm:$0xff]
    %v2000 = vld [vmem:[#allocation8 + $0x2f0] sm:$0xf]
    %v2001 = vld [vmem:[#allocation8 + $0x2f4] sm:$0xff]
    %v2002 = vld [vmem:[#allocation8 + $0x2fc] sm:$0xff]
    %v2003 = vld [vmem:[#allocation8 + $0x304] sm:$0xff]
    %v2004 = vld [vmem:[#allocation8 + $0x30c] sm:$0xf]
    %v2005 = vld [vmem:[#allocation8 + $0x310] sm:$0xff]
    %v2006 = vld [vmem:[#allocation8 + $0x318] sm:$0xff]
    %v2007 = vld [vmem:[#allocation8 + $0x320] sm:$0xff]
    %v2008 = vld [vmem:[#allocation8 + $0x328] sm:$0xf]
    %v2009 = vld [vmem:[#allocation8 + $0x32c] sm:$0xff]
    %v2010 = vld [vmem:[#allocation8 + $0x334] sm:$0xff]
    %v2011 = vld [vmem:[#allocation8 + $0x33c] sm:$0xff]
    %v2012 = vld [vmem:[#allocation8 + $0x344] sm:$0xf]
    %v2013 = vld [vmem:[#allocation8 + $0x348] sm:$0xff]
    %v2014 = vld [vmem:[#allocation8 + $0x350] sm:$0xff]
    %v2015 = vld [vmem:[#allocation8 + $0x358] sm:$0xff]
    %v2016 = vld [vmem:[#allocation8 + $0x360] sm:$0xf]
    %v2017 = vld [vmem:[#allocation8 + $0x364] sm:$0xff]
    %v2018 = vld [vmem:[#allocation8 + $0x36c] sm:$0xff]
    %v2019 = vld [vmem:[#allocation8 + $0x374] sm:$0xff]
    %v2020 = vld [vmem:[#allocation8 + $0x37c] sm:$0xf]
    %v2021 = vld [vmem:[%s7] sm:$0xff]
    %v2023 = vlaneseq
    %v2024 = vshrl.u32 %v2023, 7
    %v2025 = vsub.s32 0, %v2024
    %v2026 = vrot.slane %v2021, %v2025
    %v2027 = vlaneseq
    %v2028 = vshrl.u32 %v2027, 7
    %v2029 = vsub.s32 1, %v2028
    %v2030 = vrot.slane %v2021, %v2029
    %v2031 = vlaneseq
    %v2032 = vshrl.u32 %v2031, 7
    %v2033 = vsub.s32 2, %v2032
    %v2034 = vrot.slane %v2021, %v2033
    %v2035 = vlaneseq
    %v2036 = vshrl.u32 %v2035, 7
    %v2037 = vsub.s32 3, %v2036
    %v2038 = vrot.slane %v2021, %v2037
    %v2039 = vlaneseq
    %v2040 = vshrl.u32 %v2039, 7
    %v2041 = vsub.s32 4, %v2040
    %v2042 = vrot.slane %v2021, %v2041
    %v2043 = vlaneseq
    %v2044 = vshrl.u32 %v2043, 7
    %v2045 = vsub.s32 5, %v2044
    %v2046 = vrot.slane %v2021, %v2045
    %v2047 = vlaneseq
    %v2048 = vshrl.u32 %v2047, 7
    %v2049 = vsub.s32 6, %v2048
    %v2050 = vrot.slane %v2021, %v2049
    %v2186 = vunpack.c.l.b16 %v1893
    %v2187 = vunpack.c.h.b16 %v1893
    %v2188 = vunpack.c.l.b16 %v1894
    %v2189 = vunpack.c.h.b16 %v1894
    %v2190 = vunpack.c.l.b16 %v1895
    %v2191 = vunpack.c.h.b16 %v1895
    %v2192 = vunpack.c.l.b16 %v1896
    %v2193 = vunpack.c.l.b16 %v1897
    %v2194 = vunpack.c.h.b16 %v1897
    %v2195 = vunpack.c.l.b16 %v1898
    %v2196 = vunpack.c.h.b16 %v1898
    %v2197 = vunpack.c.l.b16 %v1899
    %v2198 = vunpack.c.h.b16 %v1899
    %v2199 = vunpack.c.l.b16 %v1900
    %v2200 = vunpack.c.l.b16 %v1901
    %v2201 = vunpack.c.h.b16 %v1901
    %v2202 = vunpack.c.l.b16 %v1902
    %v2203 = vunpack.c.h.b16 %v1902
    %v2204 = vunpack.c.l.b16 %v1903
    %v2205 = vunpack.c.h.b16 %v1903
    %v2206 = vunpack.c.l.b16 %v1904
    %v2207 = vunpack.c.l.b16 %v1905
    %v2208 = vunpack.c.h.b16 %v1905
    %v2209 = vunpack.c.l.b16 %v1906
    %v2210 = vunpack.c.h.b16 %v1906
    %v2211 = vunpack.c.l.b16 %v1907
    %v2212 = vunpack.c.h.b16 %v1907
    %v2213 = vunpack.c.l.b16 %v1908
    %v2214 = vunpack.c.l.b16 %v1909
    %v2215 = vunpack.c.h.b16 %v1909
    %v2216 = vunpack.c.l.b16 %v1910
    %v2217 = vunpack.c.h.b16 %v1910
    %v2218 = vunpack.c.l.b16 %v1911
    %v2219 = vunpack.c.h.b16 %v1911
    %v2220 = vunpack.c.l.b16 %v1912
    %v2221 = vunpack.c.l.b16 %v1913
    %v2222 = vunpack.c.h.b16 %v1913
    %v2223 = vunpack.c.l.b16 %v1914
    %v2224 = vunpack.c.h.b16 %v1914
    %v2225 = vunpack.c.l.b16 %v1915
    %v2226 = vunpack.c.h.b16 %v1915
    %v2227 = vunpack.c.l.b16 %v1916
    %v2228 = vunpack.c.l.b16 %v1917
    %v2229 = vunpack.c.h.b16 %v1917
    %v2230 = vunpack.c.l.b16 %v1918
    %v2231 = vunpack.c.h.b16 %v1918
    %v2232 = vunpack.c.l.b16 %v1919
    %v2233 = vunpack.c.h.b16 %v1919
    %v2234 = vunpack.c.l.b16 %v1920
    %v2235 = vunpack.c.l.b16 %v1921
    %v2236 = vunpack.c.h.b16 %v1921
    %v2237 = vunpack.c.l.b16 %v1922
    %v2238 = vunpack.c.h.b16 %v1922
    %v2239 = vunpack.c.l.b16 %v1923
    %v2240 = vunpack.c.h.b16 %v1923
    %v2241 = vunpack.c.l.b16 %v1924
    %v2242 = vunpack.c.l.b16 %v1925
    %v2243 = vunpack.c.h.b16 %v1925
    %v2244 = vunpack.c.l.b16 %v1926
    %v2245 = vunpack.c.h.b16 %v1926
    %v2246 = vunpack.c.l.b16 %v1927
    %v2247 = vunpack.c.h.b16 %v1927
    %v2248 = vunpack.c.l.b16 %v1928
    %v2249 = vunpack.c.l.b16 %v1929
    %v2250 = vunpack.c.h.b16 %v1929
    %v2251 = vunpack.c.l.b16 %v1930
    %v2252 = vunpack.c.h.b16 %v1930
    %v2253 = vunpack.c.l.b16 %v1931
    %v2254 = vunpack.c.h.b16 %v1931
    %v2255 = vunpack.c.l.b16 %v1932
    %v2256 = vunpack.c.l.b16 %v1933
    %v2257 = vunpack.c.h.b16 %v1933
    %v2258 = vunpack.c.l.b16 %v1934
    %v2259 = vunpack.c.h.b16 %v1934
    %v2260 = vunpack.c.l.b16 %v1935
    %v2261 = vunpack.c.h.b16 %v1935
    %v2262 = vunpack.c.l.b16 %v1936
    %v2263 = vunpack.c.l.b16 %v1937
    %v2264 = vunpack.c.h.b16 %v1937
    %v2265 = vunpack.c.l.b16 %v1938
    %v2266 = vunpack.c.h.b16 %v1938
    %v2267 = vunpack.c.l.b16 %v1939
    %v2268 = vunpack.c.h.b16 %v1939
    %v2269 = vunpack.c.l.b16 %v1940
    %v2270 = vunpack.c.l.b16 %v1941
    %v2271 = vunpack.c.h.b16 %v1941
    %v2272 = vunpack.c.l.b16 %v1942
    %v2273 = vunpack.c.h.b16 %v1942
    %v2274 = vunpack.c.l.b16 %v1943
    %v2275 = vunpack.c.h.b16 %v1943
    %v2276 = vunpack.c.l.b16 %v1944
    %v2277 = vunpack.c.l.b16 %v1945
    %v2278 = vunpack.c.h.b16 %v1945
    %v2279 = vunpack.c.l.b16 %v1946
    %v2280 = vunpack.c.h.b16 %v1946
    %v2281 = vunpack.c.l.b16 %v1947
    %v2282 = vunpack.c.h.b16 %v1947
    %v2283 = vunpack.c.l.b16 %v1948
    %v2284 = vunpack.c.l.b16 %v1949
    %v2285 = vunpack.c.h.b16 %v1949
    %v2286 = vunpack.c.l.b16 %v1950
    %v2287 = vunpack.c.h.b16 %v1950
    %v2288 = vunpack.c.l.b16 %v1951
    %v2289 = vunpack.c.h.b16 %v1951
    %v2290 = vunpack.c.l.b16 %v1952
    %v2291 = vunpack.c.l.b16 %v1953
    %v2292 = vunpack.c.h.b16 %v1953
    %v2293 = vunpack.c.l.b16 %v1954
    %v2294 = vunpack.c.h.b16 %v1954
    %v2295 = vunpack.c.l.b16 %v1955
    %v2296 = vunpack.c.h.b16 %v1955
    %v2297 = vunpack.c.l.b16 %v1956
    %v2298 = vunpack.c.l.b16 %v1957
    %v2299 = vunpack.c.h.b16 %v1957
    %v2300 = vunpack.c.l.b16 %v1958
    %v2301 = vunpack.c.h.b16 %v1958
    %v2302 = vunpack.c.l.b16 %v1959
    %v2303 = vunpack.c.h.b16 %v1959
    %v2304 = vunpack.c.l.b16 %v1960
    %v2305 = vunpack.c.l.b16 %v1961
    %v2306 = vunpack.c.h.b16 %v1961
    %v2307 = vunpack.c.l.b16 %v1962
    %v2308 = vunpack.c.h.b16 %v1962
    %v2309 = vunpack.c.l.b16 %v1963
    %v2310 = vunpack.c.h.b16 %v1963
    %v2311 = vunpack.c.l.b16 %v1964
    %v2312 = vunpack.c.l.b16 %v1965
    %v2313 = vunpack.c.h.b16 %v1965
    %v2314 = vunpack.c.l.b16 %v1966
    %v2315 = vunpack.c.h.b16 %v1966
    %v2316 = vunpack.c.l.b16 %v1967
    %v2317 = vunpack.c.h.b16 %v1967
    %v2318 = vunpack.c.l.b16 %v1968
    %v2319 = vunpack.c.l.b16 %v1969
    %v2320 = vunpack.c.h.b16 %v1969
    %v2321 = vunpack.c.l.b16 %v1970
    %v2322 = vunpack.c.h.b16 %v1970
    %v2323 = vunpack.c.l.b16 %v1971
    %v2324 = vunpack.c.h.b16 %v1971
    %v2325 = vunpack.c.l.b16 %v1972
    %v2326 = vunpack.c.l.b16 %v1973
    %v2327 = vunpack.c.h.b16 %v1973
    %v2328 = vunpack.c.l.b16 %v1974
    %v2329 = vunpack.c.h.b16 %v1974
    %v2330 = vunpack.c.l.b16 %v1975
    %v2331 = vunpack.c.h.b16 %v1975
    %v2332 = vunpack.c.l.b16 %v1976
    %v2333 = vunpack.c.l.b16 %v1977
    %v2334 = vunpack.c.h.b16 %v1977
    %v2335 = vunpack.c.l.b16 %v1978
    %v2336 = vunpack.c.h.b16 %v1978
    %v2337 = vunpack.c.l.b16 %v1979
    %v2338 = vunpack.c.h.b16 %v1979
    %v2339 = vunpack.c.l.b16 %v1980
    %v2340 = vunpack.c.l.b16 %v1981
    %v2341 = vunpack.c.h.b16 %v1981
    %v2342 = vunpack.c.l.b16 %v1982
    %v2343 = vunpack.c.h.b16 %v1982
    %v2344 = vunpack.c.l.b16 %v1983
    %v2345 = vunpack.c.h.b16 %v1983
    %v2346 = vunpack.c.l.b16 %v1984
    %v2347 = vunpack.c.l.b16 %v1985
    %v2348 = vunpack.c.h.b16 %v1985
    %v2349 = vunpack.c.l.b16 %v1986
    %v2350 = vunpack.c.h.b16 %v1986
    %v2351 = vunpack.c.l.b16 %v1987
    %v2352 = vunpack.c.h.b16 %v1987
    %v2353 = vunpack.c.l.b16 %v1988
    %v2354 = vunpack.c.l.b16 %v1989
    %v2355 = vunpack.c.h.b16 %v1989
    %v2356 = vunpack.c.l.b16 %v1990
    %v2357 = vunpack.c.h.b16 %v1990
    %v2358 = vunpack.c.l.b16 %v1991
    %v2359 = vunpack.c.h.b16 %v1991
    %v2360 = vunpack.c.l.b16 %v1992
    %v2361 = vunpack.c.l.b16 %v1993
    %v2362 = vunpack.c.h.b16 %v1993
    %v2363 = vunpack.c.l.b16 %v1994
    %v2364 = vunpack.c.h.b16 %v1994
    %v2365 = vunpack.c.l.b16 %v1995
    %v2366 = vunpack.c.h.b16 %v1995
    %v2367 = vunpack.c.l.b16 %v1996
    %v2368 = vunpack.c.l.b16 %v1997
    %v2369 = vunpack.c.h.b16 %v1997
    %v2370 = vunpack.c.l.b16 %v1998
    %v2371 = vunpack.c.h.b16 %v1998
    %v2372 = vunpack.c.l.b16 %v1999
    %v2373 = vunpack.c.h.b16 %v1999
    %v2374 = vunpack.c.l.b16 %v2000
    %v2375 = vunpack.c.l.b16 %v2001
    %v2376 = vunpack.c.h.b16 %v2001
    %v2377 = vunpack.c.l.b16 %v2002
    %v2378 = vunpack.c.h.b16 %v2002
    %v2379 = vunpack.c.l.b16 %v2003
    %v2380 = vunpack.c.h.b16 %v2003
    %v2381 = vunpack.c.l.b16 %v2004
    %v2382 = vunpack.c.l.b16 %v2005
    %v2383 = vunpack.c.h.b16 %v2005
    %v2384 = vunpack.c.l.b16 %v2006
    %v2385 = vunpack.c.h.b16 %v2006
    %v2386 = vunpack.c.l.b16 %v2007
    %v2387 = vunpack.c.h.b16 %v2007
    %v2388 = vunpack.c.l.b16 %v2008
    %v2389 = vunpack.c.l.b16 %v2009
    %v2390 = vunpack.c.h.b16 %v2009
    %v2391 = vunpack.c.l.b16 %v2010
    %v2392 = vunpack.c.h.b16 %v2010
    %v2393 = vunpack.c.l.b16 %v2011
    %v2394 = vunpack.c.h.b16 %v2011
    %v2395 = vunpack.c.l.b16 %v2012
    %v2396 = vunpack.c.l.b16 %v2013
    %v2397 = vunpack.c.h.b16 %v2013
    %v2398 = vunpack.c.l.b16 %v2014
    %v2399 = vunpack.c.h.b16 %v2014
    %v2400 = vunpack.c.l.b16 %v2015
    %v2401 = vunpack.c.h.b16 %v2015
    %v2402 = vunpack.c.l.b16 %v2016
    %v2403 = vunpack.c.l.b16 %v2017
    %v2404 = vunpack.c.h.b16 %v2017
    %v2405 = vunpack.c.l.b16 %v2018
    %v2406 = vunpack.c.h.b16 %v2018
    %v2407 = vunpack.c.l.b16 %v2019
    %v2408 = vunpack.c.h.b16 %v2019
    %v2409 = vunpack.c.l.b16 %v2020
    %v2410 = vpack.c.b16 %v2193, %v2186
    %v2411 = vpack.c.b16 %v2194, %v2187
    %v2412 = vpack.c.b16 %v2195, %v2188
    %v2413 = vpack.c.b16 %v2196, %v2189
    %v2414 = vpack.c.b16 %v2197, %v2190
    %v2415 = vpack.c.b16 %v2198, %v2191
    %v2416 = vpack.c.b16 %v2199, %v2192
    %v2417 = vpack.c.b16 %v2207, %v2200
    %v2418 = vpack.c.b16 %v2208, %v2201
    %v2419 = vpack.c.b16 %v2209, %v2202
    %v2420 = vpack.c.b16 %v2210, %v2203
    %v2421 = vpack.c.b16 %v2211, %v2204
    %v2422 = vpack.c.b16 %v2212, %v2205
    %v2423 = vpack.c.b16 %v2213, %v2206
    %v2424 = vpack.c.b16 %v2221, %v2214
    %v2425 = vpack.c.b16 %v2222, %v2215
    %v2426 = vpack.c.b16 %v2223, %v2216
    %v2427 = vpack.c.b16 %v2224, %v2217
    %v2428 = vpack.c.b16 %v2225, %v2218
    %v2429 = vpack.c.b16 %v2226, %v2219
    %v2430 = vpack.c.b16 %v2227, %v2220
    %v2431 = vpack.c.b16 %v2235, %v2228
    %v2432 = vpack.c.b16 %v2236, %v2229
    %v2433 = vpack.c.b16 %v2237, %v2230
    %v2434 = vpack.c.b16 %v2238, %v2231
    %v2435 = vpack.c.b16 %v2239, %v2232
    %v2436 = vpack.c.b16 %v2240, %v2233
    %v2437 = vpack.c.b16 %v2241, %v2234
    %v2438 = vpack.c.b16 %v2249, %v2242
    %v2439 = vpack.c.b16 %v2250, %v2243
    %v2440 = vpack.c.b16 %v2251, %v2244
    %v2441 = vpack.c.b16 %v2252, %v2245
    %v2442 = vpack.c.b16 %v2253, %v2246
    %v2443 = vpack.c.b16 %v2254, %v2247
    %v2444 = vpack.c.b16 %v2255, %v2248
    %v2445 = vpack.c.b16 %v2263, %v2256
    %v2446 = vpack.c.b16 %v2264, %v2257
    %v2447 = vpack.c.b16 %v2265, %v2258
    %v2448 = vpack.c.b16 %v2266, %v2259
    %v2449 = vpack.c.b16 %v2267, %v2260
    %v2450 = vpack.c.b16 %v2268, %v2261
    %v2451 = vpack.c.b16 %v2269, %v2262
    %v2452 = vpack.c.b16 %v2277, %v2270
    %v2453 = vpack.c.b16 %v2278, %v2271
    %v2454 = vpack.c.b16 %v2279, %v2272
    %v2455 = vpack.c.b16 %v2280, %v2273
    %v2456 = vpack.c.b16 %v2281, %v2274
    %v2457 = vpack.c.b16 %v2282, %v2275
    %v2458 = vpack.c.b16 %v2283, %v2276
    %v2459 = vpack.c.b16 %v2291, %v2284
    %v2460 = vpack.c.b16 %v2292, %v2285
    %v2461 = vpack.c.b16 %v2293, %v2286
    %v2462 = vpack.c.b16 %v2294, %v2287
    %v2463 = vpack.c.b16 %v2295, %v2288
    %v2464 = vpack.c.b16 %v2296, %v2289
    %v2465 = vpack.c.b16 %v2297, %v2290
    %v2466 = vpack.c.b16 %v2305, %v2298
    %v2467 = vpack.c.b16 %v2306, %v2299
    %v2468 = vpack.c.b16 %v2307, %v2300
    %v2469 = vpack.c.b16 %v2308, %v2301
    %v2470 = vpack.c.b16 %v2309, %v2302
    %v2471 = vpack.c.b16 %v2310, %v2303
    %v2472 = vpack.c.b16 %v2311, %v2304
    %v2473 = vpack.c.b16 %v2319, %v2312
    %v2474 = vpack.c.b16 %v2320, %v2313
    %v2475 = vpack.c.b16 %v2321, %v2314
    %v2476 = vpack.c.b16 %v2322, %v2315
    %v2477 = vpack.c.b16 %v2323, %v2316
    %v2478 = vpack.c.b16 %v2324, %v2317
    %v2479 = vpack.c.b16 %v2325, %v2318
    %v2480 = vpack.c.b16 %v2333, %v2326
    %v2481 = vpack.c.b16 %v2334, %v2327
    %v2482 = vpack.c.b16 %v2335, %v2328
    %v2483 = vpack.c.b16 %v2336, %v2329
    %v2484 = vpack.c.b16 %v2337, %v2330
    %v2485 = vpack.c.b16 %v2338, %v2331
    %v2486 = vpack.c.b16 %v2339, %v2332
    %v2487 = vpack.c.b16 %v2347, %v2340
    %v2488 = vpack.c.b16 %v2348, %v2341
    %v2489 = vpack.c.b16 %v2349, %v2342
    %v2490 = vpack.c.b16 %v2350, %v2343
    %v2491 = vpack.c.b16 %v2351, %v2344
    %v2492 = vpack.c.b16 %v2352, %v2345
    %v2493 = vpack.c.b16 %v2353, %v2346
    %v2494 = vpack.c.b16 %v2361, %v2354
    %v2495 = vpack.c.b16 %v2362, %v2355
    %v2496 = vpack.c.b16 %v2363, %v2356
    %v2497 = vpack.c.b16 %v2364, %v2357
    %v2498 = vpack.c.b16 %v2365, %v2358
    %v2499 = vpack.c.b16 %v2366, %v2359
    %v2500 = vpack.c.b16 %v2367, %v2360
    %v2501 = vpack.c.b16 %v2375, %v2368
    %v2502 = vpack.c.b16 %v2376, %v2369
    %v2503 = vpack.c.b16 %v2377, %v2370
    %v2504 = vpack.c.b16 %v2378, %v2371
    %v2505 = vpack.c.b16 %v2379, %v2372
    %v2506 = vpack.c.b16 %v2380, %v2373
    %v2507 = vpack.c.b16 %v2381, %v2374
    %v2508 = vpack.c.b16 %v2389, %v2382
    %v2509 = vpack.c.b16 %v2390, %v2383
    %v2510 = vpack.c.b16 %v2391, %v2384
    %v2511 = vpack.c.b16 %v2392, %v2385
    %v2512 = vpack.c.b16 %v2393, %v2386
    %v2513 = vpack.c.b16 %v2394, %v2387
    %v2514 = vpack.c.b16 %v2395, %v2388
    %v2515 = vpack.c.b16 %v2403, %v2396
    %v2516 = vpack.c.b16 %v2404, %v2397
    %v2517 = vpack.c.b16 %v2405, %v2398
    %v2518 = vpack.c.b16 %v2406, %v2399
    %v2519 = vpack.c.b16 %v2407, %v2400
    %v2520 = vpack.c.b16 %v2408, %v2401
    %v2521 = vpack.c.b16 %v2409, %v2402
    %2634 = vmatprep.subr.bf16.mxu0 %v2411
    %2635 = vmatpush1.bf16.msra.mxu0 %v2410
    %2636 = vmatprep.subr.bf16.mxu0 %v2418
    %2637 = vmatpush1.bf16.msra.mxu0 %v2417
    %2638 = vmatprep.subr.bf16.mxu0 %v2425
    %2639 = vmatpush1.bf16.msra.mxu0 %v2424
    %2640 = vmatprep.subr.bf16.mxu0 %v2432
    %2641 = vmatpush1.bf16.msra.mxu0 %v2431
    %2642 = vmatprep.subr.bf16.mxu0 %v2439
    %2643 = vmatpush1.bf16.msra.mxu0 %v2438
    %2644 = vmatprep.subr.bf16.mxu0 %v2446
    %2645 = vmatpush1.bf16.msra.mxu0 %v2445
    %2646 = vmatprep.subr.bf16.mxu0 %v2453
    %2647 = vmatpush1.bf16.msra.mxu0 %v2452
    %2648 = vmatprep.subr.bf16.mxu0 %v2460
    %2649 = vmatpush1.bf16.msra.mxu0 %v2459
    %2650 = vmatprep.subr.bf16.mxu0 %v2467
    %2651 = vmatpush1.bf16.msra.mxu0 %v2466
    %2652 = vmatprep.subr.bf16.mxu0 %v2474
    %2653 = vmatpush1.bf16.msra.mxu0 %v2473
    %2654 = vmatprep.subr.bf16.mxu0 %v2481
    %2655 = vmatpush1.bf16.msra.mxu0 %v2480
    %2656 = vmatprep.subr.bf16.mxu0 %v2488
    %2657 = vmatpush1.bf16.msra.mxu0 %v2487
    %2658 = vmatprep.subr.bf16.mxu0 %v2495
    %2659 = vmatpush1.bf16.msra.mxu0 %v2494
    %2660 = vmatprep.subr.bf16.mxu0 %v2502
    %2661 = vmatpush1.bf16.msra.mxu0 %v2501
    %2662 = vmatprep.subr.bf16.mxu0 %v2509
    %2663 = vmatpush1.bf16.msra.mxu0 %v2508
    %2664 = vmatprep.subr.bf16.mxu0 %v2516
    %2665 = vmatpush1.bf16.msra.mxu0 %v2515
    %2666 = vmatprep.mubr.bf16.mxu0 %v1892
    %2667 = vmatmul.mubr.bf16.gmra.mrb[0].mxu0 %v1891
    %v2668 = vpop.f32.mrb[0].mxu0
    %v2669 = vadd.f32 %v2026, %v2668
    %v2670 = vpop.f32.mrb[0].mxu0
    %v2671 = vadd.f32 %v2030, %v2670
    %v2672 = vpop.f32.mrb[0].mxu0
    %v2673 = vadd.f32 %v2026, %v2672
    %v2674 = vpop.f32.mrb[0].mxu0
    %v2675 = vadd.f32 %v2030, %v2674
    %2676 = vdwg.mxu0
    %2677 = vmatprep.subr.bf16.mxu0 %v2413
    %2678 = vmatpush1.bf16.msra.mxu0 %v2412
    %2679 = vmatprep.subr.bf16.mxu0 %v2420
    %2680 = vmatpush1.bf16.msra.mxu0 %v2419
    %2681 = vmatprep.subr.bf16.mxu0 %v2427
    %2682 = vmatpush1.bf16.msra.mxu0 %v2426
    %2683 = vmatprep.subr.bf16.mxu0 %v2434
    %2684 = vmatpush1.bf16.msra.mxu0 %v2433
    %2685 = vmatprep.subr.bf16.mxu0 %v2441
    %2686 = vmatpush1.bf16.msra.mxu0 %v2440
    %2687 = vmatprep.subr.bf16.mxu0 %v2448
    %2688 = vmatpush1.bf16.msra.mxu0 %v2447
    %2689 = vmatprep.subr.bf16.mxu0 %v2455
    %2690 = vmatpush1.bf16.msra.mxu0 %v2454
    %2691 = vmatprep.subr.bf16.mxu0 %v2462
    %2692 = vmatpush1.bf16.msra.mxu0 %v2461
    %2693 = vmatprep.subr.bf16.mxu0 %v2469
    %2694 = vmatpush1.bf16.msra.mxu0 %v2468
    %2695 = vmatprep.subr.bf16.mxu0 %v2476
    %2696 = vmatpush1.bf16.msra.mxu0 %v2475
    %2697 = vmatprep.subr.bf16.mxu0 %v2483
    %2698 = vmatpush1.bf16.msra.mxu0 %v2482
    %2699 = vmatprep.subr.bf16.mxu0 %v2490
    %2700 = vmatpush1.bf16.msra.mxu0 %v2489
    %2701 = vmatprep.subr.bf16.mxu0 %v2497
    %2702 = vmatpush1.bf16.msra.mxu0 %v2496
    %2703 = vmatprep.subr.bf16.mxu0 %v2504
    %2704 = vmatpush1.bf16.msra.mxu0 %v2503
    %2705 = vmatprep.subr.bf16.mxu0 %v2511
    %2706 = vmatpush1.bf16.msra.mxu0 %v2510
    %2707 = vmatprep.subr.bf16.mxu0 %v2518
    %2708 = vmatpush1.bf16.msra.mxu0 %v2517
    %2709 = vmatprep.mubr.bf16.mxu0 %v1892
    %2710 = vmatmul.mubr.bf16.gmra.mrb[0].mxu0 %v1891
    %v2711 = vpop.f32.mrb[0].mxu0
    %v2712 = vadd.f32 %v2034, %v2711
    %v2713 = vpop.f32.mrb[0].mxu0
    %v2714 = vadd.f32 %v2038, %v2713
    %v2715 = vpop.f32.mrb[0].mxu0
    %v2716 = vadd.f32 %v2034, %v2715
    %v2717 = vpop.f32.mrb[0].mxu0
    %v2718 = vadd.f32 %v2038, %v2717
    %2719 = vdwg.mxu0
    %2720 = vmatprep.subr.bf16.mxu0 %v2415
    %2721 = vmatpush1.bf16.msra.mxu0 %v2414
    %2722 = vmatprep.subr.bf16.mxu0 %v2422
    %2723 = vmatpush1.bf16.msra.mxu0 %v2421
    %2724 = vmatprep.subr.bf16.mxu0 %v2429
    %2725 = vmatpush1.bf16.msra.mxu0 %v2428
    %2726 = vmatprep.subr.bf16.mxu0 %v2436
    %2727 = vmatpush1.bf16.msra.mxu0 %v2435
    %2728 = vmatprep.subr.bf16.mxu0 %v2443
    %2729 = vmatpush1.bf16.msra.mxu0 %v2442
    %2730 = vmatprep.subr.bf16.mxu0 %v2450
    %2731 = vmatpush1.bf16.msra.mxu0 %v2449
    %2732 = vmatprep.subr.bf16.mxu0 %v2457
    %2733 = vmatpush1.bf16.msra.mxu0 %v2456
    %2734 = vmatprep.subr.bf16.mxu0 %v2464
    %2735 = vmatpush1.bf16.msra.mxu0 %v2463
    %2736 = vmatprep.subr.bf16.mxu0 %v2471
    %2737 = vmatpush1.bf16.msra.mxu0 %v2470
    %2738 = vmatprep.subr.bf16.mxu0 %v2478
    %2739 = vmatpush1.bf16.msra.mxu0 %v2477
    %2740 = vmatprep.subr.bf16.mxu0 %v2485
    %2741 = vmatpush1.bf16.msra.mxu0 %v2484
    %2742 = vmatprep.subr.bf16.mxu0 %v2492
    %2743 = vmatpush1.bf16.msra.mxu0 %v2491
    %2744 = vmatprep.subr.bf16.mxu0 %v2499
    %2745 = vmatpush1.bf16.msra.mxu0 %v2498
    %2746 = vmatprep.subr.bf16.mxu0 %v2506
    %2747 = vmatpush1.bf16.msra.mxu0 %v2505
    %2748 = vmatprep.subr.bf16.mxu0 %v2513
    %2749 = vmatpush1.bf16.msra.mxu0 %v2512
    %2750 = vmatprep.subr.bf16.mxu0 %v2520
    %2751 = vmatpush1.bf16.msra.mxu0 %v2519
    %2752 = vmatprep.mubr.bf16.mxu0 %v1892
    %2753 = vmatmul.mubr.bf16.gmra.mrb[0].mxu0 %v1891
    %v2754 = vpop.f32.mrb[0].mxu0
    %v2755 = vadd.f32 %v2042, %v2754
    %v2756 = vpop.f32.mrb[0].mxu0
    %v2757 = vadd.f32 %v2046, %v2756
    %v2758 = vpop.f32.mrb[0].mxu0
    %v2759 = vadd.f32 %v2042, %v2758
    %v2760 = vpop.f32.mrb[0].mxu0
    %v2761 = vadd.f32 %v2046, %v2760
    %2762 = vdwg.mxu0
    %2763 = vmatprep.subr.bf16.mxu0 0
    %2764 = vmatpush1.bf16.msra.mxu0 %v2416
    %2765 = vmatprep.subr.bf16.mxu0 0
    %2766 = vmatpush1.bf16.msra.mxu0 %v2423
    %2767 = vmatprep.subr.bf16.mxu0 0
    %2768 = vmatpush1.bf16.msra.mxu0 %v2430
    %2769 = vmatprep.subr.bf16.mxu0 0
    %2770 = vmatpush1.bf16.msra.mxu0 %v2437
    %2771 = vmatprep.subr.bf16.mxu0 0
    %2772 = vmatpush1.bf16.msra.mxu0 %v2444
    %2773 = vmatprep.subr.bf16.mxu0 0
    %2774 = vmatpush1.bf16.msra.mxu0 %v2451
    %2775 = vmatprep.subr.bf16.mxu0 0
    %2776 = vmatpush1.bf16.msra.mxu0 %v2458
    %2777 = vmatprep.subr.bf16.mxu0 0
    %2778 = vmatpush1.bf16.msra.mxu0 %v2465
    %2779 = vmatprep.subr.bf16.mxu0 0
    %2780 = vmatpush1.bf16.msra.mxu0 %v2472
    %2781 = vmatprep.subr.bf16.mxu0 0
    %2782 = vmatpush1.bf16.msra.mxu0 %v2479
    %2783 = vmatprep.subr.bf16.mxu0 0
    %2784 = vmatpush1.bf16.msra.mxu0 %v2486
    %2785 = vmatprep.subr.bf16.mxu0 0
    %2786 = vmatpush1.bf16.msra.mxu0 %v2493
    %2787 = vmatprep.subr.bf16.mxu0 0
    %2788 = vmatpush1.bf16.msra.mxu0 %v2500
    %2789 = vmatprep.subr.bf16.mxu0 0
    %2790 = vmatpush1.bf16.msra.mxu0 %v2507
    %2791 = vmatprep.subr.bf16.mxu0 0
    %2792 = vmatpush1.bf16.msra.mxu0 %v2514
    %2793 = vmatprep.subr.bf16.mxu0 0
    %2794 = vmatpush1.bf16.msra.mxu0 %v2521
    %2795 = vmatprep.mubr.bf16.mxu0 %v1892
    %2796 = vmatmul.mubr.bf16.gmra.mrb[0].mxu0 %v1891
    %v2797 = vpop.f32.mrb[0].mxu0
    %v2798 = vadd.f32 %v2050, %v2797
    %v2799 = vpop.f32.mrb[0].mxu0
    %v2800 = vpop.f32.mrb[0].mxu0
    %v2801 = vadd.f32 %v2050, %v2800
    %v2802 = vpop.f32.mrb[0].mxu0
    %2803 = vdwg.mxu0
    %v2804 = vpack.c.bf16 %v2673, %v2669
    %v2805 = vpack.c.bf16 %v2675, %v2671
    %v2806 = vpack.c.bf16 %v2716, %v2712
    %v2807 = vpack.c.bf16 %v2718, %v2714
    %v2808 = vpack.c.bf16 %v2759, %v2755
    %v2809 = vpack.c.bf16 %v2761, %v2757
    %2810 = vmatprep.subr.bf16.mxu0 0
    %2811 = vmatpush1.bf16.xpose.msra.mxu0 %v2806
    %2812 = vmatprep.subr.bf16.mxu0 0
    %2813 = vmatpush1.bf16.xpose.msra.mxu0 0
    %2814 = vmatprep.subr.bf16.mxu0 0
    %2815 = vmatpush1.bf16.xpose.msra.mxu0 0
    %2816 = vmatprep.subr.bf16.mxu0 0
    %2817 = vmatpush1.bf16.xpose.msra.mxu0 0
    %2818 = vmatprep.subr.bf16.mxu0 0
    %2819 = vmatpush1.bf16.xpose.msra.mxu0 0
    %2820 = vmatprep.subr.bf16.mxu0 0
    %2821 = vmatpush1.bf16.xpose.msra.mxu0 0
    %2822 = vmatprep.subr.bf16.mxu0 0
    %2823 = vmatpush1.bf16.xpose.msra.mxu0 0
    %2824 = vmatprep.subr.bf16.mxu0 0
    %2825 = vmatpush1.bf16.xpose.msra.mxu0 0
    %2826 = vmatprep.subr.bf16.mxu0 0
    %2827 = vmatpush1.bf16.xpose.msra.mxu0 0
    %2828 = vmatprep.subr.bf16.mxu0 0
    %2829 = vmatpush1.bf16.xpose.msra.mxu0 0
    %2830 = vmatprep.subr.bf16.mxu0 0
    %2831 = vmatpush1.bf16.xpose.msra.mxu0 0
    %2832 = vmatprep.subr.bf16.mxu0 0
    %2833 = vmatpush1.bf16.xpose.msra.mxu0 0
    %2834 = vmatprep.subr.bf16.mxu0 0
    %2835 = vmatpush1.bf16.xpose.msra.mxu0 0
    %2836 = vmatprep.subr.bf16.mxu0 0
    %2837 = vmatpush1.bf16.xpose.msra.mxu0 0
    %2838 = vmatprep.subr.bf16.mxu0 0
    %2839 = vmatpush1.bf16.xpose.msra.mxu0 0
    %2840 = vmatprep.subr.bf16.mxu0 0
    %2841 = vmatpush1.bf16.xpose.msra.mxu0 0
    %2842 = vmatprep.mubr.bf16.mxu0 0
    %2843 = vmatmul.mubr.bf16.gmra.mrb[0].mxu0 %v2804
    %v2844 = vpop.f32.mrb[0].mxu0
    %v2845 = vadd.f32 %v366, %v2844
    %v2846 = vpop.f32.mrb[0].mxu0
    %v2847 = vpop.f32.mrb[0].mxu0
    %v2848 = vadd.f32 %v367, %v2847
    %v2849 = vpop.f32.mrb[0].mxu0
    %2850 = vdwg.mxu0
    %v2851 = vsel %vm368, %v2845, -inf
    %2852 = vmax.xlane.f32.xlu0 %v2851
    %v2853 = vpop.xlane.xlu0 %2852
    %v2854 = vsel %vm368, %v2848, -inf
    %2855 = vmax.xlane.f32.xlu0 %v2854
    %v2856 = vpop.xlane.xlu0 %2855
    %v2857 = vsub.f32 %v2845, %v2853
    %v2858 = vsub.f32 %v2848, %v2856
    %v2859 = vmul.f32 %v2857, 1.442695
    %v2860 = vpow.pop %v2859
    %v2861 = vmul.f32 %v2858, 1.442695
    %v2862 = vpow.pop %v2861
    %v2863 = vsel %vm368, %v2860, 0.0
    %2864 = vadd.xlane.f32.xlu0 %v2863
    %v2865 = vpop.xlane.xlu0 %2864
    %v2866 = vsel %vm368, %v2862, 0.0
    %2867 = vadd.xlane.f32.xlu0 %v2866
    %v2868 = vpop.xlane.xlu0 %2867
    %v2869 = vmax.f32 %v2865, 1e-20
    %v2870 = vmax.f32 %v2868, 1e-20
    %v2871 = vrcp.pop %v2869
    %v2872 = vrcp.pop %v2870
    %v2873 = vmul.f32 %v2871, %v403
    %v2874 = vmul.f32 %v2872, %v404
    %v2875 = vmul.f32 %v2860, %v2873
    %v2876 = vmul.f32 %v2862, %v2874
    %v2877 = vpack.c.bf16 %v2876, %v2875
    %2878 = vmatprep.subr.bf16.mxu0 0
    %2879 = vmatpush1.bf16.xpose.msra.mxu0 %v2807
    %2880 = vmatprep.subr.bf16.mxu0 0
    %2881 = vmatpush1.bf16.xpose.msra.mxu0 0
    %2882 = vmatprep.subr.bf16.mxu0 0
    %2883 = vmatpush1.bf16.xpose.msra.mxu0 0
    %2884 = vmatprep.subr.bf16.mxu0 0
    %2885 = vmatpush1.bf16.xpose.msra.mxu0 0
    %2886 = vmatprep.subr.bf16.mxu0 0
    %2887 = vmatpush1.bf16.xpose.msra.mxu0 0
    %2888 = vmatprep.subr.bf16.mxu0 0
    %2889 = vmatpush1.bf16.xpose.msra.mxu0 0
    %2890 = vmatprep.subr.bf16.mxu0 0
    %2891 = vmatpush1.bf16.xpose.msra.mxu0 0
    %2892 = vmatprep.subr.bf16.mxu0 0
    %2893 = vmatpush1.bf16.xpose.msra.mxu0 0
    %2894 = vmatprep.subr.bf16.mxu0 0
    %2895 = vmatpush1.bf16.xpose.msra.mxu0 0
    %2896 = vmatprep.subr.bf16.mxu0 0
    %2897 = vmatpush1.bf16.xpose.msra.mxu0 0
    %2898 = vmatprep.subr.bf16.mxu0 0
    %2899 = vmatpush1.bf16.xpose.msra.mxu0 0
    %2900 = vmatprep.subr.bf16.mxu0 0
    %2901 = vmatpush1.bf16.xpose.msra.mxu0 0
    %2902 = vmatprep.subr.bf16.mxu0 0
    %2903 = vmatpush1.bf16.xpose.msra.mxu0 0
    %2904 = vmatprep.subr.bf16.mxu0 0
    %2905 = vmatpush1.bf16.xpose.msra.mxu0 0
    %2906 = vmatprep.subr.bf16.mxu0 0
    %2907 = vmatpush1.bf16.xpose.msra.mxu0 0
    %2908 = vmatprep.subr.bf16.mxu0 0
    %2909 = vmatpush1.bf16.xpose.msra.mxu0 0
    %2910 = vmatprep.mubr.bf16.mxu0 0
    %2911 = vmatmul.mubr.bf16.gmra.mrb[0].mxu0 %v2805
    %v2912 = vpop.f32.mrb[0].mxu0
    %v2913 = vadd.f32 %v366, %v2912
    %v2914 = vpop.f32.mrb[0].mxu0
    %v2915 = vpop.f32.mrb[0].mxu0
    %v2916 = vadd.f32 %v367, %v2915
    %v2917 = vpop.f32.mrb[0].mxu0
    %2918 = vdwg.mxu0
    %v2919 = vsel %vm368, %v2913, -inf
    %2920 = vmax.xlane.f32.xlu0 %v2919
    %v2921 = vpop.xlane.xlu0 %2920
    %v2922 = vsel %vm368, %v2916, -inf
    %2923 = vmax.xlane.f32.xlu0 %v2922
    %v2924 = vpop.xlane.xlu0 %2923
    %v2925 = vsub.f32 %v2913, %v2921
    %v2926 = vsub.f32 %v2916, %v2924
    %v2927 = vmul.f32 %v2925, 1.442695
    %v2928 = vpow.pop %v2927
    %v2929 = vmul.f32 %v2926, 1.442695
    %v2930 = vpow.pop %v2929
    %v2931 = vsel %vm368, %v2928, 0.0
    %2932 = vadd.xlane.f32.xlu0 %v2931
    %v2933 = vpop.xlane.xlu0 %2932
    %v2934 = vsel %vm368, %v2930, 0.0
    %2935 = vadd.xlane.f32.xlu0 %v2934
    %v2936 = vpop.xlane.xlu0 %2935
    %v2937 = vmax.f32 %v2933, 1e-20
    %v2938 = vmax.f32 %v2936, 1e-20
    %v2939 = vrcp.pop %v2937
    %v2940 = vrcp.pop %v2938
    %v2941 = vmul.f32 %v2939, %v403
    %v2942 = vmul.f32 %v2940, %v404
    %v2943 = vmul.f32 %v2928, %v2941
    %v2944 = vmul.f32 %v2930, %v2942
    %v2945 = vpack.c.bf16 %v2944, %v2943
    %v2947 = vsel %vm368, %v2945, 0
    %2949 = vmatprep.subr.bf16.mxu0 0
    %2950 = vmatpush1.bf16.msra.mxu0 %v2809
    %2951 = vmatprep.subr.bf16.mxu0 0
    %2952 = vmatpush1.bf16.msra.mxu0 0
    %2953 = vmatprep.subr.bf16.mxu0 0
    %2954 = vmatpush1.bf16.msra.mxu0 0
    %2955 = vmatprep.subr.bf16.mxu0 0
    %2956 = vmatpush1.bf16.msra.mxu0 0
    %2957 = vmatprep.subr.bf16.mxu0 0
    %2958 = vmatpush1.bf16.msra.mxu0 0
    %2959 = vmatprep.subr.bf16.mxu0 0
    %2960 = vmatpush1.bf16.msra.mxu0 0
    %2961 = vmatprep.subr.bf16.mxu0 0
    %2962 = vmatpush1.bf16.msra.mxu0 0
    %2963 = vmatprep.subr.bf16.mxu0 0
    %2964 = vmatpush1.bf16.msra.mxu0 0
    %2965 = vmatprep.subr.bf16.mxu0 0
    %2966 = vmatpush1.bf16.msra.mxu0 0
    %2967 = vmatprep.subr.bf16.mxu0 0
    %2968 = vmatpush1.bf16.msra.mxu0 0
    %2969 = vmatprep.subr.bf16.mxu0 0
    %2970 = vmatpush1.bf16.msra.mxu0 0
    %2971 = vmatprep.subr.bf16.mxu0 0
    %2972 = vmatpush1.bf16.msra.mxu0 0
    %2973 = vmatprep.subr.bf16.mxu0 0
    %2974 = vmatpush1.bf16.msra.mxu0 0
    %2975 = vmatprep.subr.bf16.mxu0 0
    %2976 = vmatpush1.bf16.msra.mxu0 0
    %2977 = vmatprep.subr.bf16.mxu0 0
    %2978 = vmatpush1.bf16.msra.mxu0 0
    %2979 = vmatprep.subr.bf16.mxu0 0
    %2980 = vmatpush1.bf16.msra.mxu0 0
    %2981 = vmatprep.mubr.bf16.mxu0 0
    %2982 = vmatmul.mubr.bf16.gmra.mrb[0].mxu0 %v2947
    %v2983 = vpop.f32.mrb[0].mxu0
    %v2984 = vadd.f32 0.0, %v2983
    %v2985 = vpop.f32.mrb[0].mxu0
    %v2986 = vpop.f32.mrb[0].mxu0
    %v2987 = vadd.f32 0.0, %v2986
    %v2988 = vpop.f32.mrb[0].mxu0
    %2989 = vdwg.mxu0
    %v2991 = vsel %vm368, %v2877, 0
    %2993 = vmatprep.subr.bf16.mxu0 0
    %2994 = vmatpush1.bf16.msra.mxu0 %v2808
    %2995 = vmatprep.subr.bf16.mxu0 0
    %2996 = vmatpush1.bf16.msra.mxu0 0
    %2997 = vmatprep.subr.bf16.mxu0 0
    %2998 = vmatpush1.bf16.msra.mxu0 0
    %2999 = vmatprep.subr.bf16.mxu0 0
    %3000 = vmatpush1.bf16.msra.mxu0 0
    %3001 = vmatprep.subr.bf16.mxu0 0
    %3002 = vmatpush1.bf16.msra.mxu0 0
    %3003 = vmatprep.subr.bf16.mxu0 0
    %3004 = vmatpush1.bf16.msra.mxu0 0
    %3005 = vmatprep.subr.bf16.mxu0 0
    %3006 = vmatpush1.bf16.msra.mxu0 0
    %3007 = vmatprep.subr.bf16.mxu0 0
    %3008 = vmatpush1.bf16.msra.mxu0 0
    %3009 = vmatprep.subr.bf16.mxu0 0
    %3010 = vmatpush1.bf16.msra.mxu0 0
    %3011 = vmatprep.subr.bf16.mxu0 0
    %3012 = vmatpush1.bf16.msra.mxu0 0
    %3013 = vmatprep.subr.bf16.mxu0 0
    %3014 = vmatpush1.bf16.msra.mxu0 0
    %3015 = vmatprep.subr.bf16.mxu0 0
    %3016 = vmatpush1.bf16.msra.mxu0 0
    %3017 = vmatprep.subr.bf16.mxu0 0
    %3018 = vmatpush1.bf16.msra.mxu0 0
    %3019 = vmatprep.subr.bf16.mxu0 0
    %3020 = vmatpush1.bf16.msra.mxu0 0
    %3021 = vmatprep.subr.bf16.mxu0 0
    %3022 = vmatpush1.bf16.msra.mxu0 0
    %3023 = vmatprep.subr.bf16.mxu0 0
    %3024 = vmatpush1.bf16.msra.mxu0 0
    %3025 = vmatprep.mubr.bf16.mxu0 0
    %3026 = vmatmul.mubr.bf16.gmra.mrb[0].mxu0 %v2991
    %v3027 = vpop.f32.mrb[0].mxu0
    %v3028 = vadd.f32 %v2984, %v3027
    %v3029 = vpop.f32.mrb[0].mxu0
    %v3030 = vpop.f32.mrb[0].mxu0
    %v3031 = vadd.f32 %v2987, %v3030
    %v3032 = vpop.f32.mrb[0].mxu0
    %3033 = vdwg.mxu0
    %v3034 = vmul.f32 %v3028, 0.5
    %v3035 = vmul.f32 %v3031, 0.5
    %v3036 = vadd.f32 %v3034, %v2798
    %v3037 = vadd.f32 %v3035, %v2801
    %3038 = vst [vmem:[#allocation10] sm:$0xff] %v3036
    %3039 = vst [vmem:[#allocation10 + $0x8] sm:$0xff] %v3037
    // Predicated region
    $region50: #{tpu_custom_call.1} parent=1 // pred_check
      _
    $region51: #{tpu_custom_call.1} parent=1 // pred_check_branch
      %3041 = sbr.rel (0) target = $region53
    $region52: #{tpu_custom_call.1} parent=1 // pred_region
      %s3043 = ssub.s32 256, 256
      %3044 = vsyncadd [#allocation4], %s3043
      %s3045 = sshll.u32 [#allocation10], 4
      %s3046 = int_to_ptr.vmem [resolvable:$true] %s3045
      %3051 = dma.vmem_to_hbm [thread:$0]  %s3046, 256, %s8, [#allocation4], 128, 128, 8
    $region53: #{tpu_custom_call.1} parent=1 // pred_fallthru
      _
    // Predicated region
    $region54: #{tpu_custom_call.1} parent=1 // pred_check
      _
    $region55: #{tpu_custom_call.1} parent=1 // pred_check_branch
      %3053 = sbr.rel (0) target = $region57
    $region56: #{tpu_custom_call.1} parent=1 // pred_region
      %3054 = dma.done [#allocation4], 256
    $region57: #{tpu_custom_call.1} parent=1 // pred_fallthru
      _
    %3055 = vsyncpa [#allocation3], 1
    %3056 = vsyncpa [#allocation6], 1
    %3057 = vsyncpa [#allocation9], 1
    %3058 = vsyncpa [#allocation4], 1

</llo_original>
